<compile_context>
chip_gen: v7x
topology: tpu7x:2x2x1
jax: 0.10.0
libtpu: 0.0.40
codegen_flags: <defaults>
</compile_context>

<pallas_src>
import jax
import jax.numpy as jnp
from jax import lax
from jax.experimental import pallas as pl
from jax.experimental.pallas import tpu as pltpu


def _round_up(x, m):
    return (x + m - 1) // m * m


def _norm_act_conv_kernel(x_ref, scale_ref, shift_ref, w_ref, o_ref, slab_ref):
    """One batch element per grid step.

    x_ref     : (1, H+2, W+2, Cp)  spatially zero-padded input (NHWC, channel-padded)
    scale_ref : (1, Cp)            folded BatchRenorm scale  (gamma / running_std)
    shift_ref : (1, Cp)            folded BatchRenorm shift  (beta - gamma*mean/std)
    w_ref     : (9*Cp, Co) bf16    im2col weights, 1x1 conv folded into center tap
    o_ref     : (1, H, W, Co)
    slab_ref  : VMEM scratch (H*W, 9*Cp) bf16 im2col patch matrix
    """
    _, H, W, Co = o_ref.shape
    Cp = x_ref.shape[-1]

    x = x_ref[0]                                   # (H+2, W+2, Cp)
    scale = scale_ref[0]                           # (Cp,)
    shift = shift_ref[0]

    # BatchRenorm2d (eval): per-channel affine.
    a = x * scale + shift

    # The wrapper zero-pads the *input*, but the conv's zero padding applies to the
    # post-activation tensor -> zero the normalized value on the 1-pixel halo
    # (mish(0) == 0 then keeps the border exactly zero).
    rows = lax.broadcasted_iota(jnp.int32, a.shape, 0)
    cols = lax.broadcasted_iota(jnp.int32, a.shape, 1)
    interior = (rows >= 1) & (rows <= H) & (cols >= 1) & (cols <= W)
    a = jnp.where(interior, a, 0.0)

    # Mish with a single EUP transcendental:
    #   u = e^a (e^a + 2)  =>  tanh(softplus(a)) = u / (u + 2)
    t = jnp.exp(jnp.minimum(a, 20.0))
    u = t * (t + 2.0)
    mish = a * u * pl.reciprocal(u + 2.0, approx=True)
    act = jnp.where(a > 20.0, a, mish)             # softplus threshold=20 passthrough

    # im2col: slot (3*ky + kx) of the slab holds the (ky, kx)-shifted window, so one
    # K = 9*Cp matmul replaces nine K = Cp matmuls (9x fewer MXU fill/drains). Slot
    # offsets are multiples of 128 lanes -> aligned, unmasked bf16 stores.
    for ky in range(3):
        for kx in range(3):
            tap = 3 * ky + kx
            win = act[ky:ky + H, kx:kx + W, :].reshape(H * W, Cp)
            slab_ref[:, tap * Cp:(tap + 1) * Cp] = win.astype(jnp.bfloat16)

    acc = jnp.dot(slab_ref[...], w_ref[...], preferred_element_type=jnp.float32)
    o_ref[0] = acc.reshape(H, W, Co).astype(o_ref.dtype)


def norm_act_conv(x_nchw, running_mean, running_std, gamma, beta, w3_oihw, w1_oihw):
    """NormActConv forward (use_se=False), eval-mode BatchRenorm2d. Input/output NCHW."""
    N, Cin, H, W = x_nchw.shape
    Cout = w3_oihw.shape[0]
    Cp = _round_up(Cin, 128)      # lane-dense input channels
    Co = _round_up(Cout, 128)     # lane-dense output channels
    f32 = jnp.float32

    # ---- parameter folding (plain JAX glue) ----
    scale_c = (gamma / running_std).astype(f32)                         # (Cin,)
    shift_c = (beta - gamma * running_mean / running_std).astype(f32)   # (Cin,)
    scale = jnp.zeros((1, Cp), f32).at[0, :Cin].set(scale_c)
    shift = jnp.zeros((1, Cp), f32).at[0, :Cin].set(shift_c)

    w3_hwio = jnp.transpose(w3_oihw, (2, 3, 1, 0)).astype(f32)          # (3,3,Cin,Cout)
    w1_io = jnp.transpose(w1_oihw[:, :, 0, 0], (1, 0)).astype(f32)      # (Cin,Cout)
    w3_hwio = w3_hwio.at[1, 1].add(w1_io)            # fold 1x1 conv into the center tap
    w_full = jnp.zeros((3, 3, Cp, Co), f32).at[:, :, :Cin, :Cout].set(w3_hwio)
    w_k = w_full.reshape(9 * Cp, Co).astype(jnp.bfloat16)               # (9*Cp, Co)

    # NCHW -> NHWC, zero-pad the 1-pixel spatial halo and the channel axis to Cp.
    x_nhwc = jnp.transpose(x_nchw, (0, 2, 3, 1)).astype(f32)
    x_pad = jnp.pad(x_nhwc, ((0, 0), (1, 1), (1, 1), (0, Cp - Cin)))

    out_nhwc = pl.pallas_call(
        _norm_act_conv_kernel,
        out_shape=jax.ShapeDtypeStruct((N, H, W, Co), f32),
        grid=(N,),
        in_specs=[
            pl.BlockSpec((1, H + 2, W + 2, Cp), lambda n: (n, 0, 0, 0)),
            pl.BlockSpec((1, Cp), lambda n: (0, 0)),
            pl.BlockSpec((1, Cp), lambda n: (0, 0)),
            pl.BlockSpec((9 * Cp, Co), lambda n: (0, 0)),
        ],
        out_specs=pl.BlockSpec((1, H, W, Co), lambda n: (n, 0, 0, 0)),
        scratch_shapes=[pltpu.VMEM((H * W, 9 * Cp), jnp.bfloat16)],
        compiler_params=pltpu.CompilerParams(
            dimension_semantics=("parallel",),
            vmem_limit_bytes=32 * 1024 * 1024,
        ),
    )(x_pad, scale, shift, w_k)

    # Drop channel padding and go back to NCHW (XLA fuses the slice into the transpose).
    return jnp.transpose(out_nhwc[..., :Cout], (0, 3, 1, 2))


def _reference(x, running_mean, running_std, gamma, beta, w3, w1):
    # pure-JAX f32 NCHW reference for validation
    xn = (x - running_mean[None, :, None, None]) / running_std[None, :, None, None]
    xn = gamma[None, :, None, None] * xn + beta[None, :, None, None]
    sp = jnp.where(xn > 20.0, xn, jnp.log1p(jnp.exp(jnp.minimum(xn, 20.0))))
    act = xn * jnp.tanh(sp)
    dn = ("NCHW", "OIHW", "NCHW")
    y3 = jax.lax.conv_general_dilated(act, w3, (1, 1), [(1, 1), (1, 1)],
                                      dimension_numbers=dn)
    y1 = jax.lax.conv_general_dilated(act, w1, (1, 1), [(0, 0), (0, 0)],
                                      dimension_numbers=dn)
    return y3 + y1


if __name__ == "__main__":
    N, Cin, Cout, H, W = 2, 4, 8, 16, 16

    key = jax.random.PRNGKey(0)
    k = jax.random.split(key, 7)
    x = jax.random.normal(k[0], (N, Cin, H, W), dtype=jnp.float32)
    running_mean = 0.1 * jax.random.normal(k[1], (Cin,), dtype=jnp.float32)
    running_std = 1.0 + 0.1 * jax.random.uniform(k[2], (Cin,), dtype=jnp.float32)
    gamma = 1.0 + 0.1 * jax.random.normal(k[3], (Cin,), dtype=jnp.float32)
    beta = 0.1 * jax.random.normal(k[4], (Cin,), dtype=jnp.float32)
    w3 = jax.random.normal(k[5], (Cout, Cin, 3, 3), dtype=jnp.float32) / (3.0 * jnp.sqrt(Cin))
    w1 = jax.random.normal(k[6], (Cout, Cin, 1, 1), dtype=jnp.float32) / jnp.sqrt(Cin)

    out = norm_act_conv(x, running_mean, running_std, gamma, beta, w3, w1)
    out = jax.block_until_ready(out)

    ref = _reference(x, running_mean, running_std, gamma, beta, w3, w1)
    assert out.shape == (N, Cout, H, W), out.shape
    # bf16 matmul + approx-reciprocal Mish tolerance vs. the pure-f32 reference.
    assert jnp.allclose(out, ref, atol=2e-2, rtol=2e-2), float(jnp.max(jnp.abs(out - ref)))

    print("KERNEL_OK")
</pallas_src>

<mosaic_0001>
module attributes {stable_mosaic.version = 11 : i64} {
  func.func @_norm_act_conv_kernel(%arg0: i32, %arg1: memref<1x18x18x128xf32, #tpu.memory_space<vmem>>, %arg2: memref<1x128xf32, #tpu.memory_space<vmem>>, %arg3: memref<1x128xf32, #tpu.memory_space<vmem>>, %arg4: memref<1152x128xbf16, #tpu.memory_space<vmem>>, %arg5: memref<1x16x16x128xf32, #tpu.memory_space<vmem>>, %arg6: memref<256x1152xbf16, #tpu.memory_space<vmem>>) attributes {dimension_semantics = [#tpu.dimension_semantics<parallel>], iteration_bounds = array<i64: 2>, scalar_prefetch = 0 : i64, scratch_operands = 1 : i64, tpu.core_type = #tpu.core_type<tc>, window_params = [{transform_indices = @transform_0, window_bounds = array<i64: 1, 18, 18, 128>}, {pipeline_mode = #tpu.pipeline_mode<synchronous>, transform_indices = @transform_1, window_bounds = array<i64: 1, 128>}, {pipeline_mode = #tpu.pipeline_mode<synchronous>, transform_indices = @transform_2, window_bounds = array<i64: 1, 128>}, {pipeline_mode = #tpu.pipeline_mode<synchronous>, transform_indices = @transform_3, window_bounds = array<i64: 1152, 128>}, {transform_indices = @transform_4, window_bounds = array<i64: 1, 16, 16, 128>}]} {
    %c0 = arith.constant 0 : index
    %c0_0 = arith.constant 0 : index
    %c0_1 = arith.constant 0 : index
    %c0_2 = arith.constant 0 : index
    %0 = vector.load %arg1[%c0, %c0_0, %c0_1, %c0_2] : memref<1x18x18x128xf32, #tpu.memory_space<vmem>>, vector<1x18x18x128xf32>
    %1 = vector.shape_cast %0 : vector<1x18x18x128xf32> to vector<18x18x128xf32>
    %c0_3 = arith.constant 0 : index
    %c0_4 = arith.constant 0 : index
    %2 = vector.load %arg2[%c0_3, %c0_4] : memref<1x128xf32, #tpu.memory_space<vmem>>, vector<1x128xf32>
    %3 = vector.shape_cast %2 : vector<1x128xf32> to vector<128xf32>
    %c0_5 = arith.constant 0 : index
    %c0_6 = arith.constant 0 : index
    %4 = vector.load %arg3[%c0_5, %c0_6] : memref<1x128xf32, #tpu.memory_space<vmem>>, vector<1x128xf32>
    %5 = vector.shape_cast %4 : vector<1x128xf32> to vector<128xf32>
    %6 = vector.shape_cast %3 : vector<128xf32> to vector<1x1x128xf32>
    %7 = vector.broadcast %6 : vector<1x1x128xf32> to vector<18x18x128xf32>
    %8 = arith.mulf %1, %7 : vector<18x18x128xf32>
    %9 = vector.shape_cast %5 : vector<128xf32> to vector<1x1x128xf32>
    %10 = vector.broadcast %9 : vector<1x1x128xf32> to vector<18x18x128xf32>
    %11 = arith.addf %8, %10 : vector<18x18x128xf32>
    %12 = tpu.iota {dimensions = array<i32: 0>} : vector<18x18x128xi32>
    %13 = tpu.iota {dimensions = array<i32: 1>} : vector<18x18x128xi32>
    %c1_i32 = arith.constant 1 : i32
    %14 = vector.broadcast %c1_i32 : i32 to vector<18x18x128xi32>
    %15 = arith.cmpi sge, %12, %14 : vector<18x18x128xi32>
    %c16_i32 = arith.constant 16 : i32
    %16 = vector.broadcast %c16_i32 : i32 to vector<18x18x128xi32>
    %17 = arith.cmpi sle, %12, %16 : vector<18x18x128xi32>
    %18 = arith.andi %15, %17 : vector<18x18x128xi1>
    %c1_i32_7 = arith.constant 1 : i32
    %19 = vector.broadcast %c1_i32_7 : i32 to vector<18x18x128xi32>
    %20 = arith.cmpi sge, %13, %19 : vector<18x18x128xi32>
    %21 = arith.andi %18, %20 : vector<18x18x128xi1>
    %c16_i32_8 = arith.constant 16 : i32
    %22 = vector.broadcast %c16_i32_8 : i32 to vector<18x18x128xi32>
    %23 = arith.cmpi sle, %13, %22 : vector<18x18x128xi32>
    %24 = arith.andi %21, %23 : vector<18x18x128xi1>
    %cst = arith.constant 0.000000e+00 : f32
    %25 = vector.broadcast %cst : f32 to vector<18x18x128xf32>
    %26 = arith.select %24, %11, %25 : vector<18x18x128xi1>, vector<18x18x128xf32>
    %cst_9 = arith.constant 2.000000e+01 : f32
    %27 = vector.broadcast %cst_9 : f32 to vector<18x18x128xf32>
    %28 = arith.minimumf %26, %27 : vector<18x18x128xf32>
    %29 = math.exp %28 : vector<18x18x128xf32>
    %cst_10 = arith.constant 2.000000e+00 : f32
    %30 = vector.broadcast %cst_10 : f32 to vector<18x18x128xf32>
    %31 = arith.addf %29, %30 : vector<18x18x128xf32>
    %32 = arith.mulf %29, %31 : vector<18x18x128xf32>
    %33 = arith.mulf %26, %32 : vector<18x18x128xf32>
    %cst_11 = arith.constant 2.000000e+00 : f32
    %34 = vector.broadcast %cst_11 : f32 to vector<18x18x128xf32>
    %35 = arith.addf %32, %34 : vector<18x18x128xf32>
    %36 = tpu.reciprocal %35 {approx = true} : vector<18x18x128xf32> -> vector<18x18x128xf32>
    %37 = arith.mulf %33, %36 : vector<18x18x128xf32>
    %cst_12 = arith.constant 2.000000e+01 : f32
    %38 = vector.broadcast %cst_12 : f32 to vector<18x18x128xf32>
    %39 = arith.cmpf ogt, %26, %38 : vector<18x18x128xf32>
    %40 = arith.select %39, %26, %37 : vector<18x18x128xi1>, vector<18x18x128xf32>
    %41 = vector.extract_strided_slice %40 {offsets = [0, 0, 0], sizes = [16, 16, 128], strides = [1, 1, 1]} : vector<18x18x128xf32> to vector<16x16x128xf32>
    %42 = vector.shape_cast %41 : vector<16x16x128xf32> to vector<256x128xf32>
    %43 = arith.truncf %42 : vector<256x128xf32> to vector<256x128xbf16>
    %c0_13 = arith.constant 0 : index
    %c0_14 = arith.constant 0 : index
    %44 = vector.load %arg6[%c0_13, %c0_14] : memref<256x1152xbf16, #tpu.memory_space<vmem>>, vector<256x128xbf16>
    tpu.vector_store %arg6[%c0_13, %c0_14], %43 {strides = array<i32>} : memref<256x1152xbf16, #tpu.memory_space<vmem>>, vector<256x128xbf16>,
    %45 = vector.extract_strided_slice %40 {offsets = [0, 1, 0], sizes = [16, 16, 128], strides = [1, 1, 1]} : vector<18x18x128xf32> to vector<16x16x128xf32>
    %46 = vector.shape_cast %45 : vector<16x16x128xf32> to vector<256x128xf32>
    %47 = arith.truncf %46 : vector<256x128xf32> to vector<256x128xbf16>
    %c0_15 = arith.constant 0 : index
    %c128 = arith.constant 128 : index
    %48 = vector.load %arg6[%c0_15, %c128] : memref<256x1152xbf16, #tpu.memory_space<vmem>>, vector<256x128xbf16>
    tpu.vector_store %arg6[%c0_15, %c128], %47 {strides = array<i32>} : memref<256x1152xbf16, #tpu.memory_space<vmem>>, vector<256x128xbf16>,
    %49 = vector.extract_strided_slice %40 {offsets = [0, 2, 0], sizes = [16, 16, 128], strides = [1, 1, 1]} : vector<18x18x128xf32> to vector<16x16x128xf32>
    %50 = vector.shape_cast %49 : vector<16x16x128xf32> to vector<256x128xf32>
    %51 = arith.truncf %50 : vector<256x128xf32> to vector<256x128xbf16>
    %c0_16 = arith.constant 0 : index
    %c256 = arith.constant 256 : index
    %52 = vector.load %arg6[%c0_16, %c256] : memref<256x1152xbf16, #tpu.memory_space<vmem>>, vector<256x128xbf16>
    tpu.vector_store %arg6[%c0_16, %c256], %51 {strides = array<i32>} : memref<256x1152xbf16, #tpu.memory_space<vmem>>, vector<256x128xbf16>,
    %53 = vector.extract_strided_slice %40 {offsets = [1, 0, 0], sizes = [16, 16, 128], strides = [1, 1, 1]} : vector<18x18x128xf32> to vector<16x16x128xf32>
    %54 = vector.shape_cast %53 : vector<16x16x128xf32> to vector<256x128xf32>
    %55 = arith.truncf %54 : vector<256x128xf32> to vector<256x128xbf16>
    %c0_17 = arith.constant 0 : index
    %c384 = arith.constant 384 : index
    %56 = vector.load %arg6[%c0_17, %c384] : memref<256x1152xbf16, #tpu.memory_space<vmem>>, vector<256x128xbf16>
    tpu.vector_store %arg6[%c0_17, %c384], %55 {strides = array<i32>} : memref<256x1152xbf16, #tpu.memory_space<vmem>>, vector<256x128xbf16>,
    %57 = vector.extract_strided_slice %40 {offsets = [1, 1, 0], sizes = [16, 16, 128], strides = [1, 1, 1]} : vector<18x18x128xf32> to vector<16x16x128xf32>
    %58 = vector.shape_cast %57 : vector<16x16x128xf32> to vector<256x128xf32>
    %59 = arith.truncf %58 : vector<256x128xf32> to vector<256x128xbf16>
    %c0_18 = arith.constant 0 : index
    %c512 = arith.constant 512 : index
    %60 = vector.load %arg6[%c0_18, %c512] : memref<256x1152xbf16, #tpu.memory_space<vmem>>, vector<256x128xbf16>
    tpu.vector_store %arg6[%c0_18, %c512], %59 {strides = array<i32>} : memref<256x1152xbf16, #tpu.memory_space<vmem>>, vector<256x128xbf16>,
    %61 = vector.extract_strided_slice %40 {offsets = [1, 2, 0], sizes = [16, 16, 128], strides = [1, 1, 1]} : vector<18x18x128xf32> to vector<16x16x128xf32>
    %62 = vector.shape_cast %61 : vector<16x16x128xf32> to vector<256x128xf32>
    %63 = arith.truncf %62 : vector<256x128xf32> to vector<256x128xbf16>
    %c0_19 = arith.constant 0 : index
    %c640 = arith.constant 640 : index
    %64 = vector.load %arg6[%c0_19, %c640] : memref<256x1152xbf16, #tpu.memory_space<vmem>>, vector<256x128xbf16>
    tpu.vector_store %arg6[%c0_19, %c640], %63 {strides = array<i32>} : memref<256x1152xbf16, #tpu.memory_space<vmem>>, vector<256x128xbf16>,
    %65 = vector.extract_strided_slice %40 {offsets = [2, 0, 0], sizes = [16, 16, 128], strides = [1, 1, 1]} : vector<18x18x128xf32> to vector<16x16x128xf32>
    %66 = vector.shape_cast %65 : vector<16x16x128xf32> to vector<256x128xf32>
    %67 = arith.truncf %66 : vector<256x128xf32> to vector<256x128xbf16>
    %c0_20 = arith.constant 0 : index
    %c768 = arith.constant 768 : index
    %68 = vector.load %arg6[%c0_20, %c768] : memref<256x1152xbf16, #tpu.memory_space<vmem>>, vector<256x128xbf16>
    tpu.vector_store %arg6[%c0_20, %c768], %67 {strides = array<i32>} : memref<256x1152xbf16, #tpu.memory_space<vmem>>, vector<256x128xbf16>,
    %69 = vector.extract_strided_slice %40 {offsets = [2, 1, 0], sizes = [16, 16, 128], strides = [1, 1, 1]} : vector<18x18x128xf32> to vector<16x16x128xf32>
    %70 = vector.shape_cast %69 : vector<16x16x128xf32> to vector<256x128xf32>
    %71 = arith.truncf %70 : vector<256x128xf32> to vector<256x128xbf16>
    %c0_21 = arith.constant 0 : index
    %c896 = arith.constant 896 : index
    %72 = vector.load %arg6[%c0_21, %c896] : memref<256x1152xbf16, #tpu.memory_space<vmem>>, vector<256x128xbf16>
    tpu.vector_store %arg6[%c0_21, %c896], %71 {strides = array<i32>} : memref<256x1152xbf16, #tpu.memory_space<vmem>>, vector<256x128xbf16>,
    %73 = vector.extract_strided_slice %40 {offsets = [2, 2, 0], sizes = [16, 16, 128], strides = [1, 1, 1]} : vector<18x18x128xf32> to vector<16x16x128xf32>
    %74 = vector.shape_cast %73 : vector<16x16x128xf32> to vector<256x128xf32>
    %75 = arith.truncf %74 : vector<256x128xf32> to vector<256x128xbf16>
    %c0_22 = arith.constant 0 : index
    %c1024 = arith.constant 1024 : index
    %76 = vector.load %arg6[%c0_22, %c1024] : memref<256x1152xbf16, #tpu.memory_space<vmem>>, vector<256x128xbf16>
    tpu.vector_store %arg6[%c0_22, %c1024], %75 {strides = array<i32>} : memref<256x1152xbf16, #tpu.memory_space<vmem>>, vector<256x128xbf16>,
    %c0_23 = arith.constant 0 : index
    %c0_24 = arith.constant 0 : index
    %77 = vector.load %arg6[%c0_23, %c0_24] : memref<256x1152xbf16, #tpu.memory_space<vmem>>, vector<256x1152xbf16>
    %c0_25 = arith.constant 0 : index
    %c0_26 = arith.constant 0 : index
    %78 = vector.load %arg4[%c0_25, %c0_26] : memref<1152x128xbf16, #tpu.memory_space<vmem>>, vector<1152x128xbf16>
    %cst_27 = arith.constant dense<0.000000e+00> : vector<256x128xf32>
    %79 = tpu.matmul %77, %78, %cst_27 {dimension_numbers = #tpu.dot_dimension_numbers<[1], [0], [0], [1], [0, 0, 1, 1], [], []>} : vector<256x1152xbf16>, vector<1152x128xbf16>, vector<256x128xf32> -> vector<256x128xf32>
    %80 = vector.shape_cast %79 : vector<256x128xf32> to vector<16x16x128xf32>
    %c0_28 = arith.constant 0 : index
    %c0_29 = arith.constant 0 : index
    %c0_30 = arith.constant 0 : index
    %c0_31 = arith.constant 0 : index
    %81 = vector.load %arg5[%c0_28, %c0_29, %c0_30, %c0_31] : memref<1x16x16x128xf32, #tpu.memory_space<vmem>>, vector<1x16x16x128xf32>
    %82 = vector.shape_cast %81 : vector<1x16x16x128xf32> to vector<16x16x128xf32>
    %83 = vector.shape_cast %80 : vector<16x16x128xf32> to vector<1x16x16x128xf32>
    tpu.vector_store %arg5[%c0_28, %c0_29, %c0_30, %c0_31], %83 {strides = array<i32>} : memref<1x16x16x128xf32, #tpu.memory_space<vmem>>, vector<1x16x16x128xf32>,
    return
  }
  func.func @transform_0(%arg0: i32) -> (i32, i32, i32, i32) {
    %c0_i32 = arith.constant 0 : i32
    %c0_i32_0 = arith.constant 0 : i32
    %c0_i32_1 = arith.constant 0 : i32
    %c0_i32_2 = arith.constant 0 : i32
    return %arg0, %c0_i32, %c0_i32_0, %c0_i32_1 : i32, i32, i32, i32
  }
  func.func @transform_1(%arg0: i32) -> (i32, i32) {
    %c0_i32 = arith.constant 0 : i32
    %c0_i32_0 = arith.constant 0 : i32
    %c0_i32_1 = arith.constant 0 : i32
    return %c0_i32, %c0_i32_0 : i32, i32
  }
  func.func @transform_2(%arg0: i32) -> (i32, i32) {
    %c0_i32 = arith.constant 0 : i32
    %c0_i32_0 = arith.constant 0 : i32
    %c0_i32_1 = arith.constant 0 : i32
    return %c0_i32, %c0_i32_0 : i32, i32
  }
  func.func @transform_3(%arg0: i32) -> (i32, i32) {
    %c0_i32 = arith.constant 0 : i32
    %c0_i32_0 = arith.constant 0 : i32
    %c0_i32_1 = arith.constant 0 : i32
    return %c0_i32, %c0_i32_0 : i32, i32
  }
  func.func @transform_4(%arg0: i32) -> (i32, i32, i32, i32) {
    %c0_i32 = arith.constant 0 : i32
    %c0_i32_0 = arith.constant 0 : i32
    %c0_i32_1 = arith.constant 0 : i32
    %c0_i32_2 = arith.constant 0 : i32
    return %arg0, %c0_i32, %c0_i32_0, %c0_i32_1 : i32, i32, i32, i32
  }
}

</mosaic_0001>

<llo_original>
// kernel: tpu_custom_call.1
$region0: #{tpu_custom_call.1}
  #allocation0 [shape = 'u32[]', space=smem, size = 0x4, offset = 0x4, fixed_abs, tag = 'smem constant byte address 0x4 - core index']
  #allocation1 [shape = 'u32[144,128]{1,0:T(1,128)}', space=vmem, size = 0x12000, scoped, tag = 'internal scratch']
  #allocation2 [shape = 'bf16[256,1152]{1,0:T(16,128)(2,1)}', space=vmem, size = 0x90000, scoped, tag = 'scratch operand']
  %s0 = inlined_call_operand.vmem [shape: f32[2,18,18,128], index: 0, kind: input, shape index: {}]
  %s1 = inlined_call_operand.vmem [shape: f32[1,128], index: 1, kind: input, shape index: {}]
  %s2 = inlined_call_operand.vmem [shape: f32[1,128], index: 2, kind: input, shape index: {}]
  %s3 = inlined_call_operand.vmem [shape: bf16[1152,128], index: 3, kind: input, shape index: {}]
  %s4 = inlined_call_operand.hbm [shape: f32[2,16,16,128], index: 4, kind: output, shape index: {}]
  %s5 = sld [smem:[#allocation0]]
  $region49: #{tpu_custom_call.1} parent=0
    _
  %s7 = ssub.s32 1, %s5
  %s8 = scalar_select 0, %s7, %s5
  $region1: #{tpu_custom_call.1} parent=0
    #allocation3 [shape = 'u8[262144]{0}', space=vmem, size = 0x40000, scoped, tag = 'output window, operand 0']
    #allocation4 [shape = 's32[2]{0}', space=sflag, size = 0x8, scoped, tag = 'scoped memory for tpu_custom_call.1']
    %9 = vsyncpa [#allocation4], 0
    %s10 = scalar_lea.sflag [#allocation4], 1
    %11 = vsyncpa %s10, 0
    loop: start=0, step=1, limit=4
    $region2: #{tpu_custom_call.1} parent=1 // loop_pre_header
      _
    $region3: #{tpu_custom_call.1} parent=1 // loop_header
      %s13 = sphi 0, %s17
      %p14 = scmp.ge.s32.totalorder %s13, 4
      %s23 = sphi 0, %s25
      %s26 = sphi 0, %s23
      %s27 = sphi 0, %s26
      %s43 = sphi 0, %s27
      %s47 = sphi 0, %s47
      %s49 = sphi 0, %s47
      %s50 = sphi 0, %s49
      %s64 = sphi 0, %s50
      %s68 = sphi 0, %s68
      %s70 = sphi 0, %s68
      %s71 = sphi 0, %s70
      %s85 = sphi 0, %s71
      %s89 = sphi 0, %s89
      %s91 = sphi 0, %s89
      %s92 = sphi 0, %s91
      %s106 = sphi 0, %s92
      %s112 = sphi 0, %s114
      %s115 = sphi 0, %s112
      %s116 = sphi 0, %s115
      %s132 = sphi 0, %s116
    $region4: #{tpu_custom_call.1} parent=1 // loop_header_branch
      %16 = sbr.rel (%p14) target = $region8
    $region5: #{tpu_custom_call.1} parent=1 // loop_body
      %s18 = ssub.s32 %s13, 1
      %s19 = ssub.s32 %s13, 2
      %s20 = sadd.s32 %s13, 1
      %s21 = ssub.s32 %s13, %s20
      %p22 = scmp.eq.s32.totalorder %s21, 0
      %s24 = sadd.s32 %s23, 1
      %s25 = scalar_select %p22, %s23, %s24
      %p28 = pneg %p22
      %p29 = scmp.eq.s32.totalorder %s13, 1
      %p30 = por %p28, %p29
      %p31 = scmp.ne.s32.totalorder %s23, %s26
      %p32 = scmp.eq.s32.totalorder %s13, 0
      %p33 = por %p31, %p32
      %p34 = scmp.ne.s32.totalorder %s23, %s26
      %p35 = scmp.eq.s32.totalorder %s18, 1
      %p36 = por %p34, %p35
      %p37 = scmp.ne.s32.totalorder %s26, %s27
      %p38 = scmp.eq.s32.totalorder %s18, 0
      %p39 = por %p37, %p38
      %p40 = scmp.ne.s32.totalorder %s26, %s27
      %p41 = scmp.eq.s32.totalorder %s19, 1
      %p42 = por %p40, %p41
      %p44 = scmp.ne.s32.totalorder %s27, %s43
      %p45 = scmp.eq.s32.totalorder %s19, 0
      %p46 = por %p44, %p45
      %s48 = sadd.s32 %s47, 1
      %p51 = scmp.eq.s32.totalorder %s13, 1
      %p52 = scmp.ne.s32.totalorder %s47, %s49
      %p53 = scmp.eq.s32.totalorder %s13, 0
      %p54 = por %p52, %p53
      %p55 = scmp.ne.s32.totalorder %s47, %s49
      %p56 = scmp.eq.s32.totalorder %s18, 1
      %p57 = por %p55, %p56
      %p58 = scmp.ne.s32.totalorder %s49, %s50
      %p59 = scmp.eq.s32.totalorder %s18, 0
      %p60 = por %p58, %p59
      %p61 = scmp.ne.s32.totalorder %s49, %s50
      %p62 = scmp.eq.s32.totalorder %s19, 1
      %p63 = por %p61, %p62
      %p65 = scmp.ne.s32.totalorder %s50, %s64
      %p66 = scmp.eq.s32.totalorder %s19, 0
      %p67 = por %p65, %p66
      %s69 = sadd.s32 %s68, 1
      %p72 = scmp.eq.s32.totalorder %s13, 1
      %p73 = scmp.ne.s32.totalorder %s68, %s70
      %p74 = scmp.eq.s32.totalorder %s13, 0
      %p75 = por %p73, %p74
      %p76 = scmp.ne.s32.totalorder %s68, %s70
      %p77 = scmp.eq.s32.totalorder %s18, 1
      %p78 = por %p76, %p77
      %p79 = scmp.ne.s32.totalorder %s70, %s71
      %p80 = scmp.eq.s32.totalorder %s18, 0
      %p81 = por %p79, %p80
      %p82 = scmp.ne.s32.totalorder %s70, %s71
      %p83 = scmp.eq.s32.totalorder %s19, 1
      %p84 = por %p82, %p83
      %p86 = scmp.ne.s32.totalorder %s71, %s85
      %p87 = scmp.eq.s32.totalorder %s19, 0
      %p88 = por %p86, %p87
      %s90 = sadd.s32 %s89, 1
      %p93 = scmp.eq.s32.totalorder %s13, 1
      %p94 = scmp.ne.s32.totalorder %s89, %s91
      %p95 = scmp.eq.s32.totalorder %s13, 0
      %p96 = por %p94, %p95
      %p97 = scmp.ne.s32.totalorder %s89, %s91
      %p98 = scmp.eq.s32.totalorder %s18, 1
      %p99 = por %p97, %p98
      %p100 = scmp.ne.s32.totalorder %s91, %s92
      %p101 = scmp.eq.s32.totalorder %s18, 0
      %p102 = por %p100, %p101
      %p103 = scmp.ne.s32.totalorder %s91, %s92
      %p104 = scmp.eq.s32.totalorder %s19, 1
      %p105 = por %p103, %p104
      %p107 = scmp.ne.s32.totalorder %s92, %s106
      %p108 = scmp.eq.s32.totalorder %s19, 0
      %p109 = por %p107, %p108
      %s110 = ssub.s32 %s13, %s20
      %p111 = scmp.eq.s32.totalorder %s110, 0
      %s113 = sadd.s32 %s112, 1
      %s114 = scalar_select %p111, %s112, %s113
      %p117 = pneg %p111
      %p118 = scmp.eq.s32.totalorder %s13, 1
      %p119 = por %p117, %p118
      %p120 = scmp.ne.s32.totalorder %s112, %s115
      %p121 = scmp.eq.s32.totalorder %s13, 0
      %p122 = por %p120, %p121
      %p123 = scmp.ne.s32.totalorder %s112, %s115
      %p124 = scmp.eq.s32.totalorder %s18, 1
      %p125 = por %p123, %p124
      %p126 = scmp.ne.s32.totalorder %s115, %s116
      %p127 = scmp.eq.s32.totalorder %s18, 0
      %p128 = por %p126, %p127
      %p129 = scmp.ne.s32.totalorder %s115, %s116
      %p130 = scmp.eq.s32.totalorder %s19, 1
      %p131 = por %p129, %p130
      %p133 = scmp.ne.s32.totalorder %s116, %s132
      %p134 = scmp.eq.s32.totalorder %s19, 0
      %p135 = por %p133, %p134
      %p136 = scmp.le.s32.totalorder 1, %s13
      %p137 = scmp.lt.s32.totalorder %s13, 3
      %p138 = pnand %p136, %p137
      %p139 = pneg %p138
      // Predicated region
      $region9: #{tpu_custom_call.1} parent=5 // pred_check
        _
      $region10: #{tpu_custom_call.1} parent=5 // pred_check_branch
        %141 = sbr.rel (%p138) target = $region12
      $region11: #{tpu_custom_call.1} parent=5 // pred_region
        %s142 = ssub.s32 %s13, 1
        // Predicated region
        $region13: #{tpu_custom_call.1} parent=11 // pred_check
          %p143 = pneg %p60
        $region14: #{tpu_custom_call.1} parent=11 // pred_check_branch
          %145 = sbr.rel (%p143) target = $region16
        $region15: #{tpu_custom_call.1} parent=11 // pred_region
          _
        $region16: #{tpu_custom_call.1} parent=11 // pred_fallthru
          _
        // Predicated region
        $region17: #{tpu_custom_call.1} parent=11 // pred_check
          %p146 = pneg %p81
        $region18: #{tpu_custom_call.1} parent=11 // pred_check_branch
          %148 = sbr.rel (%p146) target = $region20
        $region19: #{tpu_custom_call.1} parent=11 // pred_region
          _
        $region20: #{tpu_custom_call.1} parent=11 // pred_fallthru
          _
        // Predicated region
        $region21: #{tpu_custom_call.1} parent=11 // pred_check
          %p149 = pneg %p102
        $region22: #{tpu_custom_call.1} parent=11 // pred_check_branch
          %151 = sbr.rel (%p149) target = $region24
        $region23: #{tpu_custom_call.1} parent=11 // pred_region
          _
        $region24: #{tpu_custom_call.1} parent=11 // pred_fallthru
          _
      $region12: #{tpu_custom_call.1} parent=5 // pred_fallthru
        _
      %p152 = scmp.lt.s32.totalorder %s13, 2
      // Predicated region
      $region25: #{tpu_custom_call.1} parent=5 // pred_check
        %p153 = pneg %p152
      $region26: #{tpu_custom_call.1} parent=5 // pred_check_branch
        %155 = sbr.rel (%p153) target = $region28
      $region27: #{tpu_custom_call.1} parent=5 // pred_region
        // Predicated region
        $region29: #{tpu_custom_call.1} parent=27 // pred_check
          %p156 = pneg %p33
        $region30: #{tpu_custom_call.1} parent=27 // pred_check_branch
          %158 = sbr.rel (%p156) target = $region32
        $region31: #{tpu_custom_call.1} parent=27 // pred_region
          %p159 = scmp.lt.s32.totalorder %s13, 1
          %s160 = scalar_select %p159, %s13, 1
          %s161 = smul.addr %s160, 54
          %s162 = smul.addr %s161, 8
          %s163 = scalar_lea.vmem %s0, %s162
        $region32: #{tpu_custom_call.1} parent=27 // pred_fallthru
          _
      $region28: #{tpu_custom_call.1} parent=5 // pred_fallthru
        _
      %p164 = scmp.le.s32.totalorder 1, %s13
      %p165 = scmp.lt.s32.totalorder %s13, 3
      %p166 = pnand %p164, %p165
      %p167 = pneg %p166
      // Predicated region
      $region33: #{tpu_custom_call.1} parent=5 // pred_check
        _
      $region34: #{tpu_custom_call.1} parent=5 // pred_check_branch
        %169 = sbr.rel (%p166) target = $region36
      $region35: #{tpu_custom_call.1} parent=5 // pred_region
        %s170 = ssub.s32 %s13, 1
        %p171 = scmp.lt.s32.totalorder %s18, 1
        %s172 = scalar_select %p171, %s18, 1
        %s173 = smul.addr %s172, 54
        %s174 = smul.addr %s173, 8
        %s175 = scalar_lea.vmem %s0, %s174
        %p176 = pneg %p39
        %p177 = pneg %p36
        %p178 = pneg %p60
        %p179 = pneg %p57
        %p180 = pneg %p81
        %p181 = pneg %p78
        %p182 = pneg %p102
        %p183 = pneg %p99
        %p184 = pneg %p128
        %p185 = pneg %p125
        %s186 = sand.u32 %s115, 1
        %s187 = scalar_lea.sflag [#allocation4], %s186
        %s188 = sand.u32 %s115, 1
        %s189 = smul.addr %s188, 256
        %s190 = scalar_lea.vmem [#allocation3], %s189
        %p191 = scmp.lt.s32.totalorder %s18, 1
        %s192 = scalar_select %p191, %s18, 1
        %s193 = smul.addr %s192, 54
        %s194 = smul.addr %s193, 8
        %s195 = scalar_lea.vmem %s0, %s194
        %v197 = vld [vmem:[%s195] sm:$0xff]
        %v198 = vld [vmem:[%s195 + $0x8] sm:$0xff]
        %v199 = vld [vmem:[%s195 + $0x10] sm:$0x3]
        %v200 = vld [vmem:[%s195 + $0x18] sm:$0xff]
        %v201 = vld [vmem:[%s195 + $0x20] sm:$0xff]
        %v202 = vld [vmem:[%s195 + $0x28] sm:$0x3]
        %v203 = vld [vmem:[%s195 + $0x30] sm:$0xff]
        %v204 = vld [vmem:[%s195 + $0x38] sm:$0xff]
        %v205 = vld [vmem:[%s195 + $0x40] sm:$0x3]
        %v206 = vld [vmem:[%s195 + $0x48] sm:$0xff]
        %v207 = vld [vmem:[%s195 + $0x50] sm:$0xff]
        %v208 = vld [vmem:[%s195 + $0x58] sm:$0x3]
        %v209 = vld [vmem:[%s195 + $0x60] sm:$0xff]
        %v210 = vld [vmem:[%s195 + $0x68] sm:$0xff]
        %v211 = vld [vmem:[%s195 + $0x70] sm:$0x3]
        %v212 = vld [vmem:[%s195 + $0x78] sm:$0xff]
        %v213 = vld [vmem:[%s195 + $0x80] sm:$0xff]
        %v214 = vld [vmem:[%s195 + $0x88] sm:$0x3]
        %v215 = vld [vmem:[%s195 + $0x90] sm:$0xff]
        %v216 = vld [vmem:[%s195 + $0x98] sm:$0xff]
        %v217 = vld [vmem:[%s195 + $0xa0] sm:$0x3]
        %v218 = vld [vmem:[%s195 + $0xa8] sm:$0xff]
        %v219 = vld [vmem:[%s195 + $0xb0] sm:$0xff]
        %v220 = vld [vmem:[%s195 + $0xb8] sm:$0x3]
        %v221 = vld [vmem:[%s195 + $0xc0] sm:$0xff]
        %v222 = vld [vmem:[%s195 + $0xc8] sm:$0xff]
        %v223 = vld [vmem:[%s195 + $0xd0] sm:$0x3]
        %v224 = vld [vmem:[%s195 + $0xd8] sm:$0xff]
        %v225 = vld [vmem:[%s195 + $0xe0] sm:$0xff]
        %v226 = vld [vmem:[%s195 + $0xe8] sm:$0x3]
        %v227 = vld [vmem:[%s195 + $0xf0] sm:$0xff]
        %v228 = vld [vmem:[%s195 + $0xf8] sm:$0xff]
        %v229 = vld [vmem:[%s195 + $0x100] sm:$0x3]
        %v230 = vld [vmem:[%s195 + $0x108] sm:$0xff]
        %v231 = vld [vmem:[%s195 + $0x110] sm:$0xff]
        %v232 = vld [vmem:[%s195 + $0x118] sm:$0x3]
        %v233 = vld [vmem:[%s195 + $0x120] sm:$0xff]
        %v234 = vld [vmem:[%s195 + $0x128] sm:$0xff]
        %v235 = vld [vmem:[%s195 + $0x130] sm:$0x3]
        %v236 = vld [vmem:[%s195 + $0x138] sm:$0xff]
        %v237 = vld [vmem:[%s195 + $0x140] sm:$0xff]
        %v238 = vld [vmem:[%s195 + $0x148] sm:$0x3]
        %v239 = vld [vmem:[%s195 + $0x150] sm:$0xff]
        %v240 = vld [vmem:[%s195 + $0x158] sm:$0xff]
        %v241 = vld [vmem:[%s195 + $0x160] sm:$0x3]
        %v242 = vld [vmem:[%s195 + $0x168] sm:$0xff]
        %v243 = vld [vmem:[%s195 + $0x170] sm:$0xff]
        %v244 = vld [vmem:[%s195 + $0x178] sm:$0x3]
        %v245 = vld [vmem:[%s195 + $0x180] sm:$0xff]
        %v246 = vld [vmem:[%s195 + $0x188] sm:$0xff]
        %v247 = vld [vmem:[%s195 + $0x190] sm:$0x3]
        %v248 = vld [vmem:[%s195 + $0x198] sm:$0xff]
        %v249 = vld [vmem:[%s195 + $0x1a0] sm:$0xff]
        %v250 = vld [vmem:[%s195 + $0x1a8] sm:$0x3]
        %v251 = vld [vmem:[%s1] sm:$0x1]
        %v252 = vld [vmem:[%s2] sm:$0x1]
        %v254 = vlaneseq
        %v255 = vshrl.u32 %v254, 7
        %v256 = vsub.s32 0, %v255
        %v257 = vrot.slane %v251, %v256
        %v259 = vmul.f32 %v197, %v257
        %v260 = vmul.f32 %v198, %v257
        %v261 = vmul.f32 %v199, %v257
        %v262 = vmul.f32 %v200, %v257
        %v263 = vmul.f32 %v201, %v257
        %v264 = vmul.f32 %v202, %v257
        %v265 = vmul.f32 %v203, %v257
        %v266 = vmul.f32 %v204, %v257
        %v267 = vmul.f32 %v205, %v257
        %v268 = vmul.f32 %v206, %v257
        %v269 = vmul.f32 %v207, %v257
        %v270 = vmul.f32 %v208, %v257
        %v271 = vmul.f32 %v209, %v257
        %v272 = vmul.f32 %v210, %v257
        %v273 = vmul.f32 %v211, %v257
        %v274 = vmul.f32 %v212, %v257
        %v275 = vmul.f32 %v213, %v257
        %v276 = vmul.f32 %v214, %v257
        %v277 = vmul.f32 %v215, %v257
        %v278 = vmul.f32 %v216, %v257
        %v279 = vmul.f32 %v217, %v257
        %v280 = vmul.f32 %v218, %v257
        %v281 = vmul.f32 %v219, %v257
        %v282 = vmul.f32 %v220, %v257
        %v283 = vmul.f32 %v221, %v257
        %v284 = vmul.f32 %v222, %v257
        %v285 = vmul.f32 %v223, %v257
        %v286 = vmul.f32 %v224, %v257
        %v287 = vmul.f32 %v225, %v257
        %v288 = vmul.f32 %v226, %v257
        %v289 = vmul.f32 %v227, %v257
        %v290 = vmul.f32 %v228, %v257
        %v291 = vmul.f32 %v229, %v257
        %v292 = vmul.f32 %v230, %v257
        %v293 = vmul.f32 %v231, %v257
        %v294 = vmul.f32 %v232, %v257
        %v295 = vmul.f32 %v233, %v257
        %v296 = vmul.f32 %v234, %v257
        %v297 = vmul.f32 %v235, %v257
        %v298 = vmul.f32 %v236, %v257
        %v299 = vmul.f32 %v237, %v257
        %v300 = vmul.f32 %v238, %v257
        %v301 = vmul.f32 %v239, %v257
        %v302 = vmul.f32 %v240, %v257
        %v303 = vmul.f32 %v241, %v257
        %v304 = vmul.f32 %v242, %v257
        %v305 = vmul.f32 %v243, %v257
        %v306 = vmul.f32 %v244, %v257
        %v307 = vmul.f32 %v245, %v257
        %v308 = vmul.f32 %v246, %v257
        %v309 = vmul.f32 %v247, %v257
        %v310 = vmul.f32 %v248, %v257
        %v311 = vmul.f32 %v249, %v257
        %v312 = vmul.f32 %v250, %v257
        %v314 = vlaneseq
        %v315 = vshrl.u32 %v314, 7
        %v316 = vsub.s32 0, %v315
        %v317 = vrot.slane %v252, %v316
        %v319 = vadd.f32 %v259, %v317
        %v320 = vadd.f32 %v260, %v317
        %v321 = vadd.f32 %v261, %v317
        %v322 = vadd.f32 %v262, %v317
        %v323 = vadd.f32 %v263, %v317
        %v324 = vadd.f32 %v264, %v317
        %v325 = vadd.f32 %v265, %v317
        %v326 = vadd.f32 %v266, %v317
        %v327 = vadd.f32 %v267, %v317
        %v328 = vadd.f32 %v268, %v317
        %v329 = vadd.f32 %v269, %v317
        %v330 = vadd.f32 %v270, %v317
        %v331 = vadd.f32 %v271, %v317
        %v332 = vadd.f32 %v272, %v317
        %v333 = vadd.f32 %v273, %v317
        %v334 = vadd.f32 %v274, %v317
        %v335 = vadd.f32 %v275, %v317
        %v336 = vadd.f32 %v276, %v317
        %v337 = vadd.f32 %v277, %v317
        %v338 = vadd.f32 %v278, %v317
        %v339 = vadd.f32 %v279, %v317
        %v340 = vadd.f32 %v280, %v317
        %v341 = vadd.f32 %v281, %v317
        %v342 = vadd.f32 %v282, %v317
        %v343 = vadd.f32 %v283, %v317
        %v344 = vadd.f32 %v284, %v317
        %v345 = vadd.f32 %v285, %v317
        %v346 = vadd.f32 %v286, %v317
        %v347 = vadd.f32 %v287, %v317
        %v348 = vadd.f32 %v288, %v317
        %v349 = vadd.f32 %v289, %v317
        %v350 = vadd.f32 %v290, %v317
        %v351 = vadd.f32 %v291, %v317
        %v352 = vadd.f32 %v292, %v317
        %v353 = vadd.f32 %v293, %v317
        %v354 = vadd.f32 %v294, %v317
        %v355 = vadd.f32 %v295, %v317
        %v356 = vadd.f32 %v296, %v317
        %v357 = vadd.f32 %v297, %v317
        %v358 = vadd.f32 %v298, %v317
        %v359 = vadd.f32 %v299, %v317
        %v360 = vadd.f32 %v300, %v317
        %v361 = vadd.f32 %v301, %v317
        %v362 = vadd.f32 %v302, %v317
        %v363 = vadd.f32 %v303, %v317
        %v364 = vadd.f32 %v304, %v317
        %v365 = vadd.f32 %v305, %v317
        %v366 = vadd.f32 %v306, %v317
        %v367 = vadd.f32 %v307, %v317
        %v368 = vadd.f32 %v308, %v317
        %v369 = vadd.f32 %v309, %v317
        %v370 = vadd.f32 %v310, %v317
        %v371 = vadd.f32 %v311, %v317
        %v372 = vadd.f32 %v312, %v317
        %v373 = vlaneseq
        %v374 = vshrl.u32 %v373, 7
        %v375 = vadd.s32 %v374, 8
        %v376 = vadd.s32 %v374, 16
        %vm377 = vcmp.ge.s32.totalorder %v374, 1
        %vm378 = vcmp.ge.s32.totalorder %v375, 1
        %vm379 = vcmp.ge.s32.totalorder %v376, 1
        %vm380 = vmand 0, %vm377
        %vm381 = vmand 0, %vm378
        %vm382 = vmand 0, %vm379
        %vm383 = vmand 1, %vm377
        %vm384 = vmand 1, %vm378
        %vm385 = vmand 1, %vm379
        %vm386 = vcmp.le.s32.totalorder %v374, 16
        %vm387 = vcmp.le.s32.totalorder %v375, 16
        %vm388 = vcmp.le.s32.totalorder %v376, 16
        %vm389 = vmand %vm380, %vm386
        %vm390 = vmand %vm381, %vm387
        %vm391 = vmand %vm382, %vm388
        %vm392 = vmand %vm383, %vm386
        %vm393 = vmand %vm384, %vm387
        %vm394 = vmand %vm385, %vm388
        %v395 = vsel %vm389, %v319, 0.0
        %v396 = vsel %vm390, %v320, 0.0
        %v397 = vsel %vm391, %v321, 0.0
        %v398 = vsel %vm392, %v322, 0.0
        %v399 = vsel %vm393, %v323, 0.0
        %v400 = vsel %vm394, %v324, 0.0
        %v401 = vsel %vm392, %v325, 0.0
        %v402 = vsel %vm393, %v326, 0.0
        %v403 = vsel %vm394, %v327, 0.0
        %v404 = vsel %vm392, %v328, 0.0
        %v405 = vsel %vm393, %v329, 0.0
        %v406 = vsel %vm394, %v330, 0.0
        %v407 = vsel %vm392, %v331, 0.0
        %v408 = vsel %vm393, %v332, 0.0
        %v409 = vsel %vm394, %v333, 0.0
        %v410 = vsel %vm392, %v334, 0.0
        %v411 = vsel %vm393, %v335, 0.0
        %v412 = vsel %vm394, %v336, 0.0
        %v413 = vsel %vm392, %v337, 0.0
        %v414 = vsel %vm393, %v338, 0.0
        %v415 = vsel %vm394, %v339, 0.0
        %v416 = vsel %vm392, %v340, 0.0
        %v417 = vsel %vm393, %v341, 0.0
        %v418 = vsel %vm394, %v342, 0.0
        %v419 = vsel %vm392, %v343, 0.0
        %v420 = vsel %vm393, %v344, 0.0
        %v421 = vsel %vm394, %v345, 0.0
        %v422 = vsel %vm392, %v346, 0.0
        %v423 = vsel %vm393, %v347, 0.0
        %v424 = vsel %vm394, %v348, 0.0
        %v425 = vsel %vm392, %v349, 0.0
        %v426 = vsel %vm393, %v350, 0.0
        %v427 = vsel %vm394, %v351, 0.0
        %v428 = vsel %vm392, %v352, 0.0
        %v429 = vsel %vm393, %v353, 0.0
        %v430 = vsel %vm394, %v354, 0.0
        %v431 = vsel %vm392, %v355, 0.0
        %v432 = vsel %vm393, %v356, 0.0
        %v433 = vsel %vm394, %v357, 0.0
        %v434 = vsel %vm392, %v358, 0.0
        %v435 = vsel %vm393, %v359, 0.0
        %v436 = vsel %vm394, %v360, 0.0
        %v437 = vsel %vm392, %v361, 0.0
        %v438 = vsel %vm393, %v362, 0.0
        %v439 = vsel %vm394, %v363, 0.0
        %v440 = vsel %vm392, %v364, 0.0
        %v441 = vsel %vm393, %v365, 0.0
        %v442 = vsel %vm394, %v366, 0.0
        %v443 = vsel %vm392, %v367, 0.0
        %v444 = vsel %vm393, %v368, 0.0
        %v445 = vsel %vm394, %v369, 0.0
        %v446 = vsel %vm389, %v370, 0.0
        %v447 = vsel %vm390, %v371, 0.0
        %v448 = vsel %vm391, %v372, 0.0
        %v449 = vmin.f32 %v395, 20.0
        %v450 = vmin.f32 %v396, 20.0
        %v451 = vmin.f32 %v397, 20.0
        %v452 = vmin.f32 %v398, 20.0
        %v453 = vmin.f32 %v399, 20.0
        %v454 = vmin.f32 %v400, 20.0
        %v455 = vmin.f32 %v401, 20.0
        %v456 = vmin.f32 %v402, 20.0
        %v457 = vmin.f32 %v403, 20.0
        %v458 = vmin.f32 %v404, 20.0
        %v459 = vmin.f32 %v405, 20.0
        %v460 = vmin.f32 %v406, 20.0
        %v461 = vmin.f32 %v407, 20.0
        %v462 = vmin.f32 %v408, 20.0
        %v463 = vmin.f32 %v409, 20.0
        %v464 = vmin.f32 %v410, 20.0
        %v465 = vmin.f32 %v411, 20.0
        %v466 = vmin.f32 %v412, 20.0
        %v467 = vmin.f32 %v413, 20.0
        %v468 = vmin.f32 %v414, 20.0
        %v469 = vmin.f32 %v415, 20.0
        %v470 = vmin.f32 %v416, 20.0
        %v471 = vmin.f32 %v417, 20.0
        %v472 = vmin.f32 %v418, 20.0
        %v473 = vmin.f32 %v419, 20.0
        %v474 = vmin.f32 %v420, 20.0
        %v475 = vmin.f32 %v421, 20.0
        %v476 = vmin.f32 %v422, 20.0
        %v477 = vmin.f32 %v423, 20.0
        %v478 = vmin.f32 %v424, 20.0
        %v479 = vmin.f32 %v425, 20.0
        %v480 = vmin.f32 %v426, 20.0
        %v481 = vmin.f32 %v427, 20.0
        %v482 = vmin.f32 %v428, 20.0
        %v483 = vmin.f32 %v429, 20.0
        %v484 = vmin.f32 %v430, 20.0
        %v485 = vmin.f32 %v431, 20.0
        %v486 = vmin.f32 %v432, 20.0
        %v487 = vmin.f32 %v433, 20.0
        %v488 = vmin.f32 %v434, 20.0
        %v489 = vmin.f32 %v435, 20.0
        %v490 = vmin.f32 %v436, 20.0
        %v491 = vmin.f32 %v437, 20.0
        %v492 = vmin.f32 %v438, 20.0
        %v493 = vmin.f32 %v439, 20.0
        %v494 = vmin.f32 %v440, 20.0
        %v495 = vmin.f32 %v441, 20.0
        %v496 = vmin.f32 %v442, 20.0
        %v497 = vmin.f32 %v443, 20.0
        %v498 = vmin.f32 %v444, 20.0
        %v499 = vmin.f32 %v445, 20.0
        %v500 = vmin.f32 %v446, 20.0
        %v501 = vmin.f32 %v447, 20.0
        %v502 = vmin.f32 %v448, 20.0
        %v503 = vmul.f32 %v449, 1.442695
        %v504 = vpow.pop %v503
        %v505 = vmul.f32 %v450, 1.442695
        %v506 = vpow.pop %v505
        %v507 = vmul.f32 %v451, 1.442695
        %v508 = vpow.pop %v507
        %v509 = vmul.f32 %v452, 1.442695
        %v510 = vpow.pop %v509
        %v511 = vmul.f32 %v453, 1.442695
        %v512 = vpow.pop %v511
        %v513 = vmul.f32 %v454, 1.442695
        %v514 = vpow.pop %v513
        %v515 = vmul.f32 %v455, 1.442695
        %v516 = vpow.pop %v515
        %v517 = vmul.f32 %v456, 1.442695
        %v518 = vpow.pop %v517
        %v519 = vmul.f32 %v457, 1.442695
        %v520 = vpow.pop %v519
        %v521 = vmul.f32 %v458, 1.442695
        %v522 = vpow.pop %v521
        %v523 = vmul.f32 %v459, 1.442695
        %v524 = vpow.pop %v523
        %v525 = vmul.f32 %v460, 1.442695
        %v526 = vpow.pop %v525
        %v527 = vmul.f32 %v461, 1.442695
        %v528 = vpow.pop %v527
        %v529 = vmul.f32 %v462, 1.442695
        %v530 = vpow.pop %v529
        %v531 = vmul.f32 %v463, 1.442695
        %v532 = vpow.pop %v531
        %v533 = vmul.f32 %v464, 1.442695
        %v534 = vpow.pop %v533
        %v535 = vmul.f32 %v465, 1.442695
        %v536 = vpow.pop %v535
        %v537 = vmul.f32 %v466, 1.442695
        %v538 = vpow.pop %v537
        %v539 = vmul.f32 %v467, 1.442695
        %v540 = vpow.pop %v539
        %v541 = vmul.f32 %v468, 1.442695
        %v542 = vpow.pop %v541
        %v543 = vmul.f32 %v469, 1.442695
        %v544 = vpow.pop %v543
        %v545 = vmul.f32 %v470, 1.442695
        %v546 = vpow.pop %v545
        %v547 = vmul.f32 %v471, 1.442695
        %v548 = vpow.pop %v547
        %v549 = vmul.f32 %v472, 1.442695
        %v550 = vpow.pop %v549
        %v551 = vmul.f32 %v473, 1.442695
        %v552 = vpow.pop %v551
        %v553 = vmul.f32 %v474, 1.442695
        %v554 = vpow.pop %v553
        %v555 = vmul.f32 %v475, 1.442695
        %v556 = vpow.pop %v555
        %v557 = vmul.f32 %v476, 1.442695
        %v558 = vpow.pop %v557
        %v559 = vmul.f32 %v477, 1.442695
        %v560 = vpow.pop %v559
        %v561 = vmul.f32 %v478, 1.442695
        %v562 = vpow.pop %v561
        %v563 = vmul.f32 %v479, 1.442695
        %v564 = vpow.pop %v563
        %v565 = vmul.f32 %v480, 1.442695
        %v566 = vpow.pop %v565
        %v567 = vmul.f32 %v481, 1.442695
        %v568 = vpow.pop %v567
        %v569 = vmul.f32 %v482, 1.442695
        %v570 = vpow.pop %v569
        %v571 = vmul.f32 %v483, 1.442695
        %v572 = vpow.pop %v571
        %v573 = vmul.f32 %v484, 1.442695
        %v574 = vpow.pop %v573
        %v575 = vmul.f32 %v485, 1.442695
        %v576 = vpow.pop %v575
        %v577 = vmul.f32 %v486, 1.442695
        %v578 = vpow.pop %v577
        %v579 = vmul.f32 %v487, 1.442695
        %v580 = vpow.pop %v579
        %v581 = vmul.f32 %v488, 1.442695
        %v582 = vpow.pop %v581
        %v583 = vmul.f32 %v489, 1.442695
        %v584 = vpow.pop %v583
        %v585 = vmul.f32 %v490, 1.442695
        %v586 = vpow.pop %v585
        %v587 = vmul.f32 %v491, 1.442695
        %v588 = vpow.pop %v587
        %v589 = vmul.f32 %v492, 1.442695
        %v590 = vpow.pop %v589
        %v591 = vmul.f32 %v493, 1.442695
        %v592 = vpow.pop %v591
        %v593 = vmul.f32 %v494, 1.442695
        %v594 = vpow.pop %v593
        %v595 = vmul.f32 %v495, 1.442695
        %v596 = vpow.pop %v595
        %v597 = vmul.f32 %v496, 1.442695
        %v598 = vpow.pop %v597
        %v599 = vmul.f32 %v497, 1.442695
        %v600 = vpow.pop %v599
        %v601 = vmul.f32 %v498, 1.442695
        %v602 = vpow.pop %v601
        %v603 = vmul.f32 %v499, 1.442695
        %v604 = vpow.pop %v603
        %v605 = vmul.f32 %v500, 1.442695
        %v606 = vpow.pop %v605
        %v607 = vmul.f32 %v501, 1.442695
        %v608 = vpow.pop %v607
        %v609 = vmul.f32 %v502, 1.442695
        %v610 = vpow.pop %v609
        %v611 = vadd.f32 %v504, 2.0
        %v612 = vadd.f32 %v506, 2.0
        %v613 = vadd.f32 %v508, 2.0
        %v614 = vadd.f32 %v510, 2.0
        %v615 = vadd.f32 %v512, 2.0
        %v616 = vadd.f32 %v514, 2.0
        %v617 = vadd.f32 %v516, 2.0
        %v618 = vadd.f32 %v518, 2.0
        %v619 = vadd.f32 %v520, 2.0
        %v620 = vadd.f32 %v522, 2.0
        %v621 = vadd.f32 %v524, 2.0
        %v622 = vadd.f32 %v526, 2.0
        %v623 = vadd.f32 %v528, 2.0
        %v624 = vadd.f32 %v530, 2.0
        %v625 = vadd.f32 %v532, 2.0
        %v626 = vadd.f32 %v534, 2.0
        %v627 = vadd.f32 %v536, 2.0
        %v628 = vadd.f32 %v538, 2.0
        %v629 = vadd.f32 %v540, 2.0
        %v630 = vadd.f32 %v542, 2.0
        %v631 = vadd.f32 %v544, 2.0
        %v632 = vadd.f32 %v546, 2.0
        %v633 = vadd.f32 %v548, 2.0
        %v634 = vadd.f32 %v550, 2.0
        %v635 = vadd.f32 %v552, 2.0
        %v636 = vadd.f32 %v554, 2.0
        %v637 = vadd.f32 %v556, 2.0
        %v638 = vadd.f32 %v558, 2.0
        %v639 = vadd.f32 %v560, 2.0
        %v640 = vadd.f32 %v562, 2.0
        %v641 = vadd.f32 %v564, 2.0
        %v642 = vadd.f32 %v566, 2.0
        %v643 = vadd.f32 %v568, 2.0
        %v644 = vadd.f32 %v570, 2.0
        %v645 = vadd.f32 %v572, 2.0
        %v646 = vadd.f32 %v574, 2.0
        %v647 = vadd.f32 %v576, 2.0
        %v648 = vadd.f32 %v578, 2.0
        %v649 = vadd.f32 %v580, 2.0
        %v650 = vadd.f32 %v582, 2.0
        %v651 = vadd.f32 %v584, 2.0
        %v652 = vadd.f32 %v586, 2.0
        %v653 = vadd.f32 %v588, 2.0
        %v654 = vadd.f32 %v590, 2.0
        %v655 = vadd.f32 %v592, 2.0
        %v656 = vadd.f32 %v594, 2.0
        %v657 = vadd.f32 %v596, 2.0
        %v658 = vadd.f32 %v598, 2.0
        %v659 = vadd.f32 %v600, 2.0
        %v660 = vadd.f32 %v602, 2.0
        %v661 = vadd.f32 %v604, 2.0
        %v662 = vadd.f32 %v606, 2.0
        %v663 = vadd.f32 %v608, 2.0
        %v664 = vadd.f32 %v610, 2.0
        %v665 = vmul.f32 %v504, %v611
        %v666 = vmul.f32 %v506, %v612
        %v667 = vmul.f32 %v508, %v613
        %v668 = vmul.f32 %v510, %v614
        %v669 = vmul.f32 %v512, %v615
        %v670 = vmul.f32 %v514, %v616
        %v671 = vmul.f32 %v516, %v617
        %v672 = vmul.f32 %v518, %v618
        %v673 = vmul.f32 %v520, %v619
        %v674 = vmul.f32 %v522, %v620
        %v675 = vmul.f32 %v524, %v621
        %v676 = vmul.f32 %v526, %v622
        %v677 = vmul.f32 %v528, %v623
        %v678 = vmul.f32 %v530, %v624
        %v679 = vmul.f32 %v532, %v625
        %v680 = vmul.f32 %v534, %v626
        %v681 = vmul.f32 %v536, %v627
        %v682 = vmul.f32 %v538, %v628
        %v683 = vmul.f32 %v540, %v629
        %v684 = vmul.f32 %v542, %v630
        %v685 = vmul.f32 %v544, %v631
        %v686 = vmul.f32 %v546, %v632
        %v687 = vmul.f32 %v548, %v633
        %v688 = vmul.f32 %v550, %v634
        %v689 = vmul.f32 %v552, %v635
        %v690 = vmul.f32 %v554, %v636
        %v691 = vmul.f32 %v556, %v637
        %v692 = vmul.f32 %v558, %v638
        %v693 = vmul.f32 %v560, %v639
        %v694 = vmul.f32 %v562, %v640
        %v695 = vmul.f32 %v564, %v641
        %v696 = vmul.f32 %v566, %v642
        %v697 = vmul.f32 %v568, %v643
        %v698 = vmul.f32 %v570, %v644
        %v699 = vmul.f32 %v572, %v645
        %v700 = vmul.f32 %v574, %v646
        %v701 = vmul.f32 %v576, %v647
        %v702 = vmul.f32 %v578, %v648
        %v703 = vmul.f32 %v580, %v649
        %v704 = vmul.f32 %v582, %v650
        %v705 = vmul.f32 %v584, %v651
        %v706 = vmul.f32 %v586, %v652
        %v707 = vmul.f32 %v588, %v653
        %v708 = vmul.f32 %v590, %v654
        %v709 = vmul.f32 %v592, %v655
        %v710 = vmul.f32 %v594, %v656
        %v711 = vmul.f32 %v596, %v657
        %v712 = vmul.f32 %v598, %v658
        %v713 = vmul.f32 %v600, %v659
        %v714 = vmul.f32 %v602, %v660
        %v715 = vmul.f32 %v604, %v661
        %v716 = vmul.f32 %v606, %v662
        %v717 = vmul.f32 %v608, %v663
        %v718 = vmul.f32 %v610, %v664
        %v719 = vmul.f32 %v395, %v665
        %v720 = vmul.f32 %v396, %v666
        %v721 = vmul.f32 %v397, %v667
        %v722 = vmul.f32 %v398, %v668
        %v723 = vmul.f32 %v399, %v669
        %v724 = vmul.f32 %v400, %v670
        %v725 = vmul.f32 %v401, %v671
        %v726 = vmul.f32 %v402, %v672
        %v727 = vmul.f32 %v403, %v673
        %v728 = vmul.f32 %v404, %v674
        %v729 = vmul.f32 %v405, %v675
        %v730 = vmul.f32 %v406, %v676
        %v731 = vmul.f32 %v407, %v677
        %v732 = vmul.f32 %v408, %v678
        %v733 = vmul.f32 %v409, %v679
        %v734 = vmul.f32 %v410, %v680
        %v735 = vmul.f32 %v411, %v681
        %v736 = vmul.f32 %v412, %v682
        %v737 = vmul.f32 %v413, %v683
        %v738 = vmul.f32 %v414, %v684
        %v739 = vmul.f32 %v415, %v685
        %v740 = vmul.f32 %v416, %v686
        %v741 = vmul.f32 %v417, %v687
        %v742 = vmul.f32 %v418, %v688
        %v743 = vmul.f32 %v419, %v689
        %v744 = vmul.f32 %v420, %v690
        %v745 = vmul.f32 %v421, %v691
        %v746 = vmul.f32 %v422, %v692
        %v747 = vmul.f32 %v423, %v693
        %v748 = vmul.f32 %v424, %v694
        %v749 = vmul.f32 %v425, %v695
        %v750 = vmul.f32 %v426, %v696
        %v751 = vmul.f32 %v427, %v697
        %v752 = vmul.f32 %v428, %v698
        %v753 = vmul.f32 %v429, %v699
        %v754 = vmul.f32 %v430, %v700
        %v755 = vmul.f32 %v431, %v701
        %v756 = vmul.f32 %v432, %v702
        %v757 = vmul.f32 %v433, %v703
        %v758 = vmul.f32 %v434, %v704
        %v759 = vmul.f32 %v435, %v705
        %v760 = vmul.f32 %v436, %v706
        %v761 = vmul.f32 %v437, %v707
        %v762 = vmul.f32 %v438, %v708
        %v763 = vmul.f32 %v439, %v709
        %v764 = vmul.f32 %v440, %v710
        %v765 = vmul.f32 %v441, %v711
        %v766 = vmul.f32 %v442, %v712
        %v767 = vmul.f32 %v443, %v713
        %v768 = vmul.f32 %v444, %v714
        %v769 = vmul.f32 %v445, %v715
        %v770 = vmul.f32 %v446, %v716
        %v771 = vmul.f32 %v447, %v717
        %v772 = vmul.f32 %v448, %v718
        %v773 = vadd.f32 %v665, 2.0
        %v774 = vadd.f32 %v666, 2.0
        %v775 = vadd.f32 %v667, 2.0
        %v776 = vadd.f32 %v668, 2.0
        %v777 = vadd.f32 %v669, 2.0
        %v778 = vadd.f32 %v670, 2.0
        %v779 = vadd.f32 %v671, 2.0
        %v780 = vadd.f32 %v672, 2.0
        %v781 = vadd.f32 %v673, 2.0
        %v782 = vadd.f32 %v674, 2.0
        %v783 = vadd.f32 %v675, 2.0
        %v784 = vadd.f32 %v676, 2.0
        %v785 = vadd.f32 %v677, 2.0
        %v786 = vadd.f32 %v678, 2.0
        %v787 = vadd.f32 %v679, 2.0
        %v788 = vadd.f32 %v680, 2.0
        %v789 = vadd.f32 %v681, 2.0
        %v790 = vadd.f32 %v682, 2.0
        %v791 = vadd.f32 %v683, 2.0
        %v792 = vadd.f32 %v684, 2.0
        %v793 = vadd.f32 %v685, 2.0
        %v794 = vadd.f32 %v686, 2.0
        %v795 = vadd.f32 %v687, 2.0
        %v796 = vadd.f32 %v688, 2.0
        %v797 = vadd.f32 %v689, 2.0
        %v798 = vadd.f32 %v690, 2.0
        %v799 = vadd.f32 %v691, 2.0
        %v800 = vadd.f32 %v692, 2.0
        %v801 = vadd.f32 %v693, 2.0
        %v802 = vadd.f32 %v694, 2.0
        %v803 = vadd.f32 %v695, 2.0
        %v804 = vadd.f32 %v696, 2.0
        %v805 = vadd.f32 %v697, 2.0
        %v806 = vadd.f32 %v698, 2.0
        %v807 = vadd.f32 %v699, 2.0
        %v808 = vadd.f32 %v700, 2.0
        %v809 = vadd.f32 %v701, 2.0
        %v810 = vadd.f32 %v702, 2.0
        %v811 = vadd.f32 %v703, 2.0
        %v812 = vadd.f32 %v704, 2.0
        %v813 = vadd.f32 %v705, 2.0
        %v814 = vadd.f32 %v706, 2.0
        %v815 = vadd.f32 %v707, 2.0
        %v816 = vadd.f32 %v708, 2.0
        %v817 = vadd.f32 %v709, 2.0
        %v818 = vadd.f32 %v710, 2.0
        %v819 = vadd.f32 %v711, 2.0
        %v820 = vadd.f32 %v712, 2.0
        %v821 = vadd.f32 %v713, 2.0
        %v822 = vadd.f32 %v714, 2.0
        %v823 = vadd.f32 %v715, 2.0
        %v824 = vadd.f32 %v716, 2.0
        %v825 = vadd.f32 %v717, 2.0
        %v826 = vadd.f32 %v718, 2.0
        %v827 = vrcp.pop %v773
        %v828 = vrcp.pop %v774
        %v829 = vrcp.pop %v775
        %v830 = vrcp.pop %v776
        %v831 = vrcp.pop %v777
        %v832 = vrcp.pop %v778
        %v833 = vrcp.pop %v779
        %v834 = vrcp.pop %v780
        %v835 = vrcp.pop %v781
        %v836 = vrcp.pop %v782
        %v837 = vrcp.pop %v783
        %v838 = vrcp.pop %v784
        %v839 = vrcp.pop %v785
        %v840 = vrcp.pop %v786
        %v841 = vrcp.pop %v787
        %v842 = vrcp.pop %v788
        %v843 = vrcp.pop %v789
        %v844 = vrcp.pop %v790
        %v845 = vrcp.pop %v791
        %v846 = vrcp.pop %v792
        %v847 = vrcp.pop %v793
        %v848 = vrcp.pop %v794
        %v849 = vrcp.pop %v795
        %v850 = vrcp.pop %v796
        %v851 = vrcp.pop %v797
        %v852 = vrcp.pop %v798
        %v853 = vrcp.pop %v799
        %v854 = vrcp.pop %v800
        %v855 = vrcp.pop %v801
        %v856 = vrcp.pop %v802
        %v857 = vrcp.pop %v803
        %v858 = vrcp.pop %v804
        %v859 = vrcp.pop %v805
        %v860 = vrcp.pop %v806
        %v861 = vrcp.pop %v807
        %v862 = vrcp.pop %v808
        %v863 = vrcp.pop %v809
        %v864 = vrcp.pop %v810
        %v865 = vrcp.pop %v811
        %v866 = vrcp.pop %v812
        %v867 = vrcp.pop %v813
        %v868 = vrcp.pop %v814
        %v869 = vrcp.pop %v815
        %v870 = vrcp.pop %v816
        %v871 = vrcp.pop %v817
        %v872 = vrcp.pop %v818
        %v873 = vrcp.pop %v819
        %v874 = vrcp.pop %v820
        %v875 = vrcp.pop %v821
        %v876 = vrcp.pop %v822
        %v877 = vrcp.pop %v823
        %v878 = vrcp.pop %v824
        %v879 = vrcp.pop %v825
        %v880 = vrcp.pop %v826
        %v881 = vmul.f32 %v719, %v827
        %v882 = vmul.f32 %v720, %v828
        %v883 = vmul.f32 %v721, %v829
        %v884 = vmul.f32 %v722, %v830
        %v885 = vmul.f32 %v723, %v831
        %v886 = vmul.f32 %v724, %v832
        %v887 = vmul.f32 %v725, %v833
        %v888 = vmul.f32 %v726, %v834
        %v889 = vmul.f32 %v727, %v835
        %v890 = vmul.f32 %v728, %v836
        %v891 = vmul.f32 %v729, %v837
        %v892 = vmul.f32 %v730, %v838
        %v893 = vmul.f32 %v731, %v839
        %v894 = vmul.f32 %v732, %v840
        %v895 = vmul.f32 %v733, %v841
        %v896 = vmul.f32 %v734, %v842
        %v897 = vmul.f32 %v735, %v843
        %v898 = vmul.f32 %v736, %v844
        %v899 = vmul.f32 %v737, %v845
        %v900 = vmul.f32 %v738, %v846
        %v901 = vmul.f32 %v739, %v847
        %v902 = vmul.f32 %v740, %v848
        %v903 = vmul.f32 %v741, %v849
        %v904 = vmul.f32 %v742, %v850
        %v905 = vmul.f32 %v743, %v851
        %v906 = vmul.f32 %v744, %v852
        %v907 = vmul.f32 %v745, %v853
        %v908 = vmul.f32 %v746, %v854
        %v909 = vmul.f32 %v747, %v855
        %v910 = vmul.f32 %v748, %v856
        %v911 = vmul.f32 %v749, %v857
        %v912 = vmul.f32 %v750, %v858
        %v913 = vmul.f32 %v751, %v859
        %v914 = vmul.f32 %v752, %v860
        %v915 = vmul.f32 %v753, %v861
        %v916 = vmul.f32 %v754, %v862
        %v917 = vmul.f32 %v755, %v863
        %v918 = vmul.f32 %v756, %v864
        %v919 = vmul.f32 %v757, %v865
        %v920 = vmul.f32 %v758, %v866
        %v921 = vmul.f32 %v759, %v867
        %v922 = vmul.f32 %v760, %v868
        %v923 = vmul.f32 %v761, %v869
        %v924 = vmul.f32 %v762, %v870
        %v925 = vmul.f32 %v763, %v871
        %v926 = vmul.f32 %v764, %v872
        %v927 = vmul.f32 %v765, %v873
        %v928 = vmul.f32 %v766, %v874
        %v929 = vmul.f32 %v767, %v875
        %v930 = vmul.f32 %v768, %v876
        %v931 = vmul.f32 %v769, %v877
        %v932 = vmul.f32 %v770, %v878
        %v933 = vmul.f32 %v771, %v879
        %v934 = vmul.f32 %v772, %v880
        %vm935 = vcmp.gt.f32.partialorder %v395, 20.0
        %vm936 = vcmp.gt.f32.partialorder %v396, 20.0
        %vm937 = vcmp.gt.f32.partialorder %v397, 20.0
        %vm938 = vcmp.gt.f32.partialorder %v398, 20.0
        %vm939 = vcmp.gt.f32.partialorder %v399, 20.0
        %vm940 = vcmp.gt.f32.partialorder %v400, 20.0
        %vm941 = vcmp.gt.f32.partialorder %v401, 20.0
        %vm942 = vcmp.gt.f32.partialorder %v402, 20.0
        %vm943 = vcmp.gt.f32.partialorder %v403, 20.0
        %vm944 = vcmp.gt.f32.partialorder %v404, 20.0
        %vm945 = vcmp.gt.f32.partialorder %v405, 20.0
        %vm946 = vcmp.gt.f32.partialorder %v406, 20.0
        %vm947 = vcmp.gt.f32.partialorder %v407, 20.0
        %vm948 = vcmp.gt.f32.partialorder %v408, 20.0
        %vm949 = vcmp.gt.f32.partialorder %v409, 20.0
        %vm950 = vcmp.gt.f32.partialorder %v410, 20.0
        %vm951 = vcmp.gt.f32.partialorder %v411, 20.0
        %vm952 = vcmp.gt.f32.partialorder %v412, 20.0
        %vm953 = vcmp.gt.f32.partialorder %v413, 20.0
        %vm954 = vcmp.gt.f32.partialorder %v414, 20.0
        %vm955 = vcmp.gt.f32.partialorder %v415, 20.0
        %vm956 = vcmp.gt.f32.partialorder %v416, 20.0
        %vm957 = vcmp.gt.f32.partialorder %v417, 20.0
        %vm958 = vcmp.gt.f32.partialorder %v418, 20.0
        %vm959 = vcmp.gt.f32.partialorder %v419, 20.0
        %vm960 = vcmp.gt.f32.partialorder %v420, 20.0
        %vm961 = vcmp.gt.f32.partialorder %v421, 20.0
        %vm962 = vcmp.gt.f32.partialorder %v422, 20.0
        %vm963 = vcmp.gt.f32.partialorder %v423, 20.0
        %vm964 = vcmp.gt.f32.partialorder %v424, 20.0
        %vm965 = vcmp.gt.f32.partialorder %v425, 20.0
        %vm966 = vcmp.gt.f32.partialorder %v426, 20.0
        %vm967 = vcmp.gt.f32.partialorder %v427, 20.0
        %vm968 = vcmp.gt.f32.partialorder %v428, 20.0
        %vm969 = vcmp.gt.f32.partialorder %v429, 20.0
        %vm970 = vcmp.gt.f32.partialorder %v430, 20.0
        %vm971 = vcmp.gt.f32.partialorder %v431, 20.0
        %vm972 = vcmp.gt.f32.partialorder %v432, 20.0
        %vm973 = vcmp.gt.f32.partialorder %v433, 20.0
        %vm974 = vcmp.gt.f32.partialorder %v434, 20.0
        %vm975 = vcmp.gt.f32.partialorder %v435, 20.0
        %vm976 = vcmp.gt.f32.partialorder %v436, 20.0
        %vm977 = vcmp.gt.f32.partialorder %v437, 20.0
        %vm978 = vcmp.gt.f32.partialorder %v438, 20.0
        %vm979 = vcmp.gt.f32.partialorder %v439, 20.0
        %vm980 = vcmp.gt.f32.partialorder %v440, 20.0
        %vm981 = vcmp.gt.f32.partialorder %v441, 20.0
        %vm982 = vcmp.gt.f32.partialorder %v442, 20.0
        %vm983 = vcmp.gt.f32.partialorder %v443, 20.0
        %vm984 = vcmp.gt.f32.partialorder %v444, 20.0
        %vm985 = vcmp.gt.f32.partialorder %v445, 20.0
        %vm986 = vcmp.gt.f32.partialorder %v446, 20.0
        %vm987 = vcmp.gt.f32.partialorder %v447, 20.0
        %vm988 = vcmp.gt.f32.partialorder %v448, 20.0
        %v989 = vsel %vm935, %v395, %v881
        %v990 = vsel %vm936, %v396, %v882
        %v991 = vsel %vm937, %v397, %v883
        %v992 = vsel %vm938, %v398, %v884
        %v993 = vsel %vm939, %v399, %v885
        %v994 = vsel %vm940, %v400, %v886
        %v995 = vsel %vm941, %v401, %v887
        %v996 = vsel %vm942, %v402, %v888
        %v997 = vsel %vm943, %v403, %v889
        %v998 = vsel %vm944, %v404, %v890
        %v999 = vsel %vm945, %v405, %v891
        %v1000 = vsel %vm946, %v406, %v892
        %v1001 = vsel %vm947, %v407, %v893
        %v1002 = vsel %vm948, %v408, %v894
        %v1003 = vsel %vm949, %v409, %v895
        %v1004 = vsel %vm950, %v410, %v896
        %v1005 = vsel %vm951, %v411, %v897
        %v1006 = vsel %vm952, %v412, %v898
        %v1007 = vsel %vm953, %v413, %v899
        %v1008 = vsel %vm954, %v414, %v900
        %v1009 = vsel %vm955, %v415, %v901
        %v1010 = vsel %vm956, %v416, %v902
        %v1011 = vsel %vm957, %v417, %v903
        %v1012 = vsel %vm958, %v418, %v904
        %v1013 = vsel %vm959, %v419, %v905
        %v1014 = vsel %vm960, %v420, %v906
        %v1015 = vsel %vm961, %v421, %v907
        %v1016 = vsel %vm962, %v422, %v908
        %v1017 = vsel %vm963, %v423, %v909
        %v1018 = vsel %vm964, %v424, %v910
        %v1019 = vsel %vm965, %v425, %v911
        %v1020 = vsel %vm966, %v426, %v912
        %v1021 = vsel %vm967, %v427, %v913
        %v1022 = vsel %vm968, %v428, %v914
        %v1023 = vsel %vm969, %v429, %v915
        %v1024 = vsel %vm970, %v430, %v916
        %v1025 = vsel %vm971, %v431, %v917
        %v1026 = vsel %vm972, %v432, %v918
        %v1027 = vsel %vm973, %v433, %v919
        %v1028 = vsel %vm974, %v434, %v920
        %v1029 = vsel %vm975, %v435, %v921
        %v1030 = vsel %vm976, %v436, %v922
        %v1031 = vsel %vm977, %v437, %v923
        %v1032 = vsel %vm978, %v438, %v924
        %v1033 = vsel %vm979, %v439, %v925
        %v1034 = vsel %vm980, %v440, %v926
        %v1035 = vsel %vm981, %v441, %v927
        %v1036 = vsel %vm982, %v442, %v928
        %v1037 = vsel %vm983, %v443, %v929
        %v1038 = vsel %vm984, %v444, %v930
        %v1039 = vsel %vm985, %v445, %v931
        %v1040 = vsel %vm986, %v446, %v932
        %v1041 = vsel %vm987, %v447, %v933
        %v1042 = vsel %vm988, %v448, %v934
        %v1043 = vpack.c.bf16 %v990, %v989
        %v1044 = vpack.c.bf16 %v993, %v992
        %v1045 = vpack.c.bf16 %v996, %v995
        %v1046 = vpack.c.bf16 %v999, %v998
        %v1047 = vpack.c.bf16 %v1002, %v1001
        %v1048 = vpack.c.bf16 %v1005, %v1004
        %v1049 = vpack.c.bf16 %v1008, %v1007
        %v1050 = vpack.c.bf16 %v1011, %v1010
        %v1051 = vpack.c.bf16 %v1014, %v1013
        %v1052 = vpack.c.bf16 %v1017, %v1016
        %v1053 = vpack.c.bf16 %v1020, %v1019
        %v1054 = vpack.c.bf16 %v1023, %v1022
        %v1055 = vpack.c.bf16 %v1026, %v1025
        %v1056 = vpack.c.bf16 %v1029, %v1028
        %v1057 = vpack.c.bf16 %v1032, %v1031
        %v1058 = vpack.c.bf16 %v1035, %v1034
        %1059 = vst [vmem:[#allocation2] sm:$0xff] %v1043
        %1060 = vst [vmem:[#allocation2 + $0x48] sm:$0xff] %v1044
        %1061 = vst [vmem:[#allocation2 + $0x90] sm:$0xff] %v1045
        %1062 = vst [vmem:[#allocation2 + $0xd8] sm:$0xff] %v1046
        %1063 = vst [vmem:[#allocation2 + $0x120] sm:$0xff] %v1047
        %1064 = vst [vmem:[#allocation2 + $0x168] sm:$0xff] %v1048
        %1065 = vst [vmem:[#allocation2 + $0x1b0] sm:$0xff] %v1049
        %1066 = vst [vmem:[#allocation2 + $0x1f8] sm:$0xff] %v1050
        %1067 = vst [vmem:[#allocation2 + $0x240] sm:$0xff] %v1051
        %1068 = vst [vmem:[#allocation2 + $0x288] sm:$0xff] %v1052
        %1069 = vst [vmem:[#allocation2 + $0x2d0] sm:$0xff] %v1053
        %1070 = vst [vmem:[#allocation2 + $0x318] sm:$0xff] %v1054
        %1071 = vst [vmem:[#allocation2 + $0x360] sm:$0xff] %v1055
        %1072 = vst [vmem:[#allocation2 + $0x3a8] sm:$0xff] %v1056
        %1073 = vst [vmem:[#allocation2 + $0x3f0] sm:$0xff] %v1057
        %1074 = vst [vmem:[#allocation2 + $0x438] sm:$0xff] %v1058
        %vm1123 = vcmask 1046528
        %v1124 = vrot.slane %v989, 1
        %v1125 = vrot.slane %v990, 1
        %v1126 = vsel %vm1123, %v1124, %v1125
        %v1127 = vrot.slane %v991, 1
        %v1128 = vsel %vm1123, %v1125, %v1127
        %v1129 = vrot.slane %v992, 1
        %v1130 = vrot.slane %v993, 1
        %v1131 = vsel %vm1123, %v1129, %v1130
        %v1132 = vrot.slane %v994, 1
        %v1133 = vsel %vm1123, %v1130, %v1132
        %v1134 = vrot.slane %v995, 1
        %v1135 = vrot.slane %v996, 1
        %v1136 = vsel %vm1123, %v1134, %v1135
        %v1137 = vrot.slane %v997, 1
        %v1138 = vsel %vm1123, %v1135, %v1137
        %v1139 = vrot.slane %v998, 1
        %v1140 = vrot.slane %v999, 1
        %v1141 = vsel %vm1123, %v1139, %v1140
        %v1142 = vrot.slane %v1000, 1
        %v1143 = vsel %vm1123, %v1140, %v1142
        %v1144 = vrot.slane %v1001, 1
        %v1145 = vrot.slane %v1002, 1
        %v1146 = vsel %vm1123, %v1144, %v1145
        %v1147 = vrot.slane %v1003, 1
        %v1148 = vsel %vm1123, %v1145, %v1147
        %v1149 = vrot.slane %v1004, 1
        %v1150 = vrot.slane %v1005, 1
        %v1151 = vsel %vm1123, %v1149, %v1150
        %v1152 = vrot.slane %v1006, 1
        %v1153 = vsel %vm1123, %v1150, %v1152
        %v1154 = vrot.slane %v1007, 1
        %v1155 = vrot.slane %v1008, 1
        %v1156 = vsel %vm1123, %v1154, %v1155
        %v1157 = vrot.slane %v1009, 1
        %v1158 = vsel %vm1123, %v1155, %v1157
        %v1159 = vrot.slane %v1010, 1
        %v1160 = vrot.slane %v1011, 1
        %v1161 = vsel %vm1123, %v1159, %v1160
        %v1162 = vrot.slane %v1012, 1
        %v1163 = vsel %vm1123, %v1160, %v1162
        %v1164 = vrot.slane %v1013, 1
        %v1165 = vrot.slane %v1014, 1
        %v1166 = vsel %vm1123, %v1164, %v1165
        %v1167 = vrot.slane %v1015, 1
        %v1168 = vsel %vm1123, %v1165, %v1167
        %v1169 = vrot.slane %v1016, 1
        %v1170 = vrot.slane %v1017, 1
        %v1171 = vsel %vm1123, %v1169, %v1170
        %v1172 = vrot.slane %v1018, 1
        %v1173 = vsel %vm1123, %v1170, %v1172
        %v1174 = vrot.slane %v1019, 1
        %v1175 = vrot.slane %v1020, 1
        %v1176 = vsel %vm1123, %v1174, %v1175
        %v1177 = vrot.slane %v1021, 1
        %v1178 = vsel %vm1123, %v1175, %v1177
        %v1179 = vrot.slane %v1022, 1
        %v1180 = vrot.slane %v1023, 1
        %v1181 = vsel %vm1123, %v1179, %v1180
        %v1182 = vrot.slane %v1024, 1
        %v1183 = vsel %vm1123, %v1180, %v1182
        %v1184 = vrot.slane %v1025, 1
        %v1185 = vrot.slane %v1026, 1
        %v1186 = vsel %vm1123, %v1184, %v1185
        %v1187 = vrot.slane %v1027, 1
        %v1188 = vsel %vm1123, %v1185, %v1187
        %v1189 = vrot.slane %v1028, 1
        %v1190 = vrot.slane %v1029, 1
        %v1191 = vsel %vm1123, %v1189, %v1190
        %v1192 = vrot.slane %v1030, 1
        %v1193 = vsel %vm1123, %v1190, %v1192
        %v1194 = vrot.slane %v1031, 1
        %v1195 = vrot.slane %v1032, 1
        %v1196 = vsel %vm1123, %v1194, %v1195
        %v1197 = vrot.slane %v1033, 1
        %v1198 = vsel %vm1123, %v1195, %v1197
        %v1199 = vrot.slane %v1034, 1
        %v1200 = vrot.slane %v1035, 1
        %v1201 = vsel %vm1123, %v1199, %v1200
        %v1202 = vrot.slane %v1036, 1
        %v1203 = vsel %vm1123, %v1200, %v1202
        %v1236 = vpack.c.bf16 %v1128, %v1126
        %v1237 = vpack.c.bf16 %v1133, %v1131
        %v1238 = vpack.c.bf16 %v1138, %v1136
        %v1239 = vpack.c.bf16 %v1143, %v1141
        %v1240 = vpack.c.bf16 %v1148, %v1146
        %v1241 = vpack.c.bf16 %v1153, %v1151
        %v1242 = vpack.c.bf16 %v1158, %v1156
        %v1243 = vpack.c.bf16 %v1163, %v1161
        %v1244 = vpack.c.bf16 %v1168, %v1166
        %v1245 = vpack.c.bf16 %v1173, %v1171
        %v1246 = vpack.c.bf16 %v1178, %v1176
        %v1247 = vpack.c.bf16 %v1183, %v1181
        %v1248 = vpack.c.bf16 %v1188, %v1186
        %v1249 = vpack.c.bf16 %v1193, %v1191
        %v1250 = vpack.c.bf16 %v1198, %v1196
        %v1251 = vpack.c.bf16 %v1203, %v1201
        %1252 = vst [vmem:[#allocation2 + $0x8] sm:$0xff] %v1236
        %1253 = vst [vmem:[#allocation2 + $0x50] sm:$0xff] %v1237
        %1254 = vst [vmem:[#allocation2 + $0x98] sm:$0xff] %v1238
        %1255 = vst [vmem:[#allocation2 + $0xe0] sm:$0xff] %v1239
        %1256 = vst [vmem:[#allocation2 + $0x128] sm:$0xff] %v1240
        %1257 = vst [vmem:[#allocation2 + $0x170] sm:$0xff] %v1241
        %1258 = vst [vmem:[#allocation2 + $0x1b8] sm:$0xff] %v1242
        %1259 = vst [vmem:[#allocation2 + $0x200] sm:$0xff] %v1243
        %1260 = vst [vmem:[#allocation2 + $0x248] sm:$0xff] %v1244
        %1261 = vst [vmem:[#allocation2 + $0x290] sm:$0xff] %v1245
        %1262 = vst [vmem:[#allocation2 + $0x2d8] sm:$0xff] %v1246
        %1263 = vst [vmem:[#allocation2 + $0x320] sm:$0xff] %v1247
        %1264 = vst [vmem:[#allocation2 + $0x368] sm:$0xff] %v1248
        %1265 = vst [vmem:[#allocation2 + $0x3b0] sm:$0xff] %v1249
        %1266 = vst [vmem:[#allocation2 + $0x3f8] sm:$0xff] %v1250
        %1267 = vst [vmem:[#allocation2 + $0x440] sm:$0xff] %v1251
        %vm1268 = vcmask 1045504
        %v1269 = vrot.slane %v989, 2
        %v1270 = vrot.slane %v990, 2
        %v1271 = vsel %vm1268, %v1269, %v1270
        %v1272 = vrot.slane %v991, 2
        %v1273 = vsel %vm1268, %v1270, %v1272
        %v1274 = vrot.slane %v992, 2
        %v1275 = vrot.slane %v993, 2
        %v1276 = vsel %vm1268, %v1274, %v1275
        %v1277 = vrot.slane %v994, 2
        %v1278 = vsel %vm1268, %v1275, %v1277
        %v1279 = vrot.slane %v995, 2
        %v1280 = vrot.slane %v996, 2
        %v1281 = vsel %vm1268, %v1279, %v1280
        %v1282 = vrot.slane %v997, 2
        %v1283 = vsel %vm1268, %v1280, %v1282
        %v1284 = vrot.slane %v998, 2
        %v1285 = vrot.slane %v999, 2
        %v1286 = vsel %vm1268, %v1284, %v1285
        %v1287 = vrot.slane %v1000, 2
        %v1288 = vsel %vm1268, %v1285, %v1287
        %v1289 = vrot.slane %v1001, 2
        %v1290 = vrot.slane %v1002, 2
        %v1291 = vsel %vm1268, %v1289, %v1290
        %v1292 = vrot.slane %v1003, 2
        %v1293 = vsel %vm1268, %v1290, %v1292
        %v1294 = vrot.slane %v1004, 2
        %v1295 = vrot.slane %v1005, 2
        %v1296 = vsel %vm1268, %v1294, %v1295
        %v1297 = vrot.slane %v1006, 2
        %v1298 = vsel %vm1268, %v1295, %v1297
        %v1299 = vrot.slane %v1007, 2
        %v1300 = vrot.slane %v1008, 2
        %v1301 = vsel %vm1268, %v1299, %v1300
        %v1302 = vrot.slane %v1009, 2
        %v1303 = vsel %vm1268, %v1300, %v1302
        %v1304 = vrot.slane %v1010, 2
        %v1305 = vrot.slane %v1011, 2
        %v1306 = vsel %vm1268, %v1304, %v1305
        %v1307 = vrot.slane %v1012, 2
        %v1308 = vsel %vm1268, %v1305, %v1307
        %v1309 = vrot.slane %v1013, 2
        %v1310 = vrot.slane %v1014, 2
        %v1311 = vsel %vm1268, %v1309, %v1310
        %v1312 = vrot.slane %v1015, 2
        %v1313 = vsel %vm1268, %v1310, %v1312
        %v1314 = vrot.slane %v1016, 2
        %v1315 = vrot.slane %v1017, 2
        %v1316 = vsel %vm1268, %v1314, %v1315
        %v1317 = vrot.slane %v1018, 2
        %v1318 = vsel %vm1268, %v1315, %v1317
        %v1319 = vrot.slane %v1019, 2
        %v1320 = vrot.slane %v1020, 2
        %v1321 = vsel %vm1268, %v1319, %v1320
        %v1322 = vrot.slane %v1021, 2
        %v1323 = vsel %vm1268, %v1320, %v1322
        %v1324 = vrot.slane %v1022, 2
        %v1325 = vrot.slane %v1023, 2
        %v1326 = vsel %vm1268, %v1324, %v1325
        %v1327 = vrot.slane %v1024, 2
        %v1328 = vsel %vm1268, %v1325, %v1327
        %v1329 = vrot.slane %v1025, 2
        %v1330 = vrot.slane %v1026, 2
        %v1331 = vsel %vm1268, %v1329, %v1330
        %v1332 = vrot.slane %v1027, 2
        %v1333 = vsel %vm1268, %v1330, %v1332
        %v1334 = vrot.slane %v1028, 2
        %v1335 = vrot.slane %v1029, 2
        %v1336 = vsel %vm1268, %v1334, %v1335
        %v1337 = vrot.slane %v1030, 2
        %v1338 = vsel %vm1268, %v1335, %v1337
        %v1339 = vrot.slane %v1031, 2
        %v1340 = vrot.slane %v1032, 2
        %v1341 = vsel %vm1268, %v1339, %v1340
        %v1342 = vrot.slane %v1033, 2
        %v1343 = vsel %vm1268, %v1340, %v1342
        %v1344 = vrot.slane %v1034, 2
        %v1345 = vrot.slane %v1035, 2
        %v1346 = vsel %vm1268, %v1344, %v1345
        %v1347 = vrot.slane %v1036, 2
        %v1348 = vsel %vm1268, %v1345, %v1347
        %v1381 = vpack.c.bf16 %v1273, %v1271
        %v1382 = vpack.c.bf16 %v1278, %v1276
        %v1383 = vpack.c.bf16 %v1283, %v1281
        %v1384 = vpack.c.bf16 %v1288, %v1286
        %v1385 = vpack.c.bf16 %v1293, %v1291
        %v1386 = vpack.c.bf16 %v1298, %v1296
        %v1387 = vpack.c.bf16 %v1303, %v1301
        %v1388 = vpack.c.bf16 %v1308, %v1306
        %v1389 = vpack.c.bf16 %v1313, %v1311
        %v1390 = vpack.c.bf16 %v1318, %v1316
        %v1391 = vpack.c.bf16 %v1323, %v1321
        %v1392 = vpack.c.bf16 %v1328, %v1326
        %v1393 = vpack.c.bf16 %v1333, %v1331
        %v1394 = vpack.c.bf16 %v1338, %v1336
        %v1395 = vpack.c.bf16 %v1343, %v1341
        %v1396 = vpack.c.bf16 %v1348, %v1346
        %1397 = vst [vmem:[#allocation2 + $0x10] sm:$0xff] %v1381
        %1398 = vst [vmem:[#allocation2 + $0x58] sm:$0xff] %v1382
        %1399 = vst [vmem:[#allocation2 + $0xa0] sm:$0xff] %v1383
        %1400 = vst [vmem:[#allocation2 + $0xe8] sm:$0xff] %v1384
        %1401 = vst [vmem:[#allocation2 + $0x130] sm:$0xff] %v1385
        %1402 = vst [vmem:[#allocation2 + $0x178] sm:$0xff] %v1386
        %1403 = vst [vmem:[#allocation2 + $0x1c0] sm:$0xff] %v1387
        %1404 = vst [vmem:[#allocation2 + $0x208] sm:$0xff] %v1388
        %1405 = vst [vmem:[#allocation2 + $0x250] sm:$0xff] %v1389
        %1406 = vst [vmem:[#allocation2 + $0x298] sm:$0xff] %v1390
        %1407 = vst [vmem:[#allocation2 + $0x2e0] sm:$0xff] %v1391
        %1408 = vst [vmem:[#allocation2 + $0x328] sm:$0xff] %v1392
        %1409 = vst [vmem:[#allocation2 + $0x370] sm:$0xff] %v1393
        %1410 = vst [vmem:[#allocation2 + $0x3b8] sm:$0xff] %v1394
        %1411 = vst [vmem:[#allocation2 + $0x400] sm:$0xff] %v1395
        %1412 = vst [vmem:[#allocation2 + $0x448] sm:$0xff] %v1396
        %v1413 = vpack.c.bf16 %v1038, %v1037
        %1414 = vst [vmem:[#allocation2 + $0x18] sm:$0xff] %v1044
        %1415 = vst [vmem:[#allocation2 + $0x60] sm:$0xff] %v1045
        %1416 = vst [vmem:[#allocation2 + $0xa8] sm:$0xff] %v1046
        %1417 = vst [vmem:[#allocation2 + $0xf0] sm:$0xff] %v1047
        %1418 = vst [vmem:[#allocation2 + $0x138] sm:$0xff] %v1048
        %1419 = vst [vmem:[#allocation2 + $0x180] sm:$0xff] %v1049
        %1420 = vst [vmem:[#allocation2 + $0x1c8] sm:$0xff] %v1050
        %1421 = vst [vmem:[#allocation2 + $0x210] sm:$0xff] %v1051
        %1422 = vst [vmem:[#allocation2 + $0x258] sm:$0xff] %v1052
        %1423 = vst [vmem:[#allocation2 + $0x2a0] sm:$0xff] %v1053
        %1424 = vst [vmem:[#allocation2 + $0x2e8] sm:$0xff] %v1054
        %1425 = vst [vmem:[#allocation2 + $0x330] sm:$0xff] %v1055
        %1426 = vst [vmem:[#allocation2 + $0x378] sm:$0xff] %v1056
        %1427 = vst [vmem:[#allocation2 + $0x3c0] sm:$0xff] %v1057
        %1428 = vst [vmem:[#allocation2 + $0x408] sm:$0xff] %v1058
        %1429 = vst [vmem:[#allocation2 + $0x450] sm:$0xff] %v1413
        %v1433 = vrot.slane %v1037, 1
        %v1434 = vrot.slane %v1038, 1
        %v1435 = vsel %vm1123, %v1433, %v1434
        %v1436 = vrot.slane %v1039, 1
        %v1437 = vsel %vm1123, %v1434, %v1436
        %v1440 = vpack.c.bf16 %v1437, %v1435
        %1441 = vst [vmem:[#allocation2 + $0x20] sm:$0xff] %v1237
        %1442 = vst [vmem:[#allocation2 + $0x68] sm:$0xff] %v1238
        %1443 = vst [vmem:[#allocation2 + $0xb0] sm:$0xff] %v1239
        %1444 = vst [vmem:[#allocation2 + $0xf8] sm:$0xff] %v1240
        %1445 = vst [vmem:[#allocation2 + $0x140] sm:$0xff] %v1241
        %1446 = vst [vmem:[#allocation2 + $0x188] sm:$0xff] %v1242
        %1447 = vst [vmem:[#allocation2 + $0x1d0] sm:$0xff] %v1243
        %1448 = vst [vmem:[#allocation2 + $0x218] sm:$0xff] %v1244
        %1449 = vst [vmem:[#allocation2 + $0x260] sm:$0xff] %v1245
        %1450 = vst [vmem:[#allocation2 + $0x2a8] sm:$0xff] %v1246
        %1451 = vst [vmem:[#allocation2 + $0x2f0] sm:$0xff] %v1247
        %1452 = vst [vmem:[#allocation2 + $0x338] sm:$0xff] %v1248
        %1453 = vst [vmem:[#allocation2 + $0x380] sm:$0xff] %v1249
        %1454 = vst [vmem:[#allocation2 + $0x3c8] sm:$0xff] %v1250
        %1455 = vst [vmem:[#allocation2 + $0x410] sm:$0xff] %v1251
        %1456 = vst [vmem:[#allocation2 + $0x458] sm:$0xff] %v1440
        %v1457 = vrot.slane %v1037, 2
        %v1458 = vrot.slane %v1038, 2
        %v1459 = vsel %vm1268, %v1457, %v1458
        %v1460 = vrot.slane %v1039, 2
        %v1461 = vsel %vm1268, %v1458, %v1460
        %v1464 = vpack.c.bf16 %v1461, %v1459
        %1465 = vst [vmem:[#allocation2 + $0x28] sm:$0xff] %v1382
        %1466 = vst [vmem:[#allocation2 + $0x70] sm:$0xff] %v1383
        %1467 = vst [vmem:[#allocation2 + $0xb8] sm:$0xff] %v1384
        %1468 = vst [vmem:[#allocation2 + $0x100] sm:$0xff] %v1385
        %1469 = vst [vmem:[#allocation2 + $0x148] sm:$0xff] %v1386
        %1470 = vst [vmem:[#allocation2 + $0x190] sm:$0xff] %v1387
        %1471 = vst [vmem:[#allocation2 + $0x1d8] sm:$0xff] %v1388
        %1472 = vst [vmem:[#allocation2 + $0x220] sm:$0xff] %v1389
        %1473 = vst [vmem:[#allocation2 + $0x268] sm:$0xff] %v1390
        %1474 = vst [vmem:[#allocation2 + $0x2b0] sm:$0xff] %v1391
        %1475 = vst [vmem:[#allocation2 + $0x2f8] sm:$0xff] %v1392
        %1476 = vst [vmem:[#allocation2 + $0x340] sm:$0xff] %v1393
        %1477 = vst [vmem:[#allocation2 + $0x388] sm:$0xff] %v1394
        %1478 = vst [vmem:[#allocation2 + $0x3d0] sm:$0xff] %v1395
        %1479 = vst [vmem:[#allocation2 + $0x418] sm:$0xff] %v1396
        %1480 = vst [vmem:[#allocation2 + $0x460] sm:$0xff] %v1464
        %v1481 = vpack.c.bf16 %v1041, %v1040
        %1482 = vst [vmem:[#allocation2 + $0x30] sm:$0xff] %v1045
        %1483 = vst [vmem:[#allocation2 + $0x78] sm:$0xff] %v1046
        %1484 = vst [vmem:[#allocation2 + $0xc0] sm:$0xff] %v1047
        %1485 = vst [vmem:[#allocation2 + $0x108] sm:$0xff] %v1048
        %1486 = vst [vmem:[#allocation2 + $0x150] sm:$0xff] %v1049
        %1487 = vst [vmem:[#allocation2 + $0x198] sm:$0xff] %v1050
        %1488 = vst [vmem:[#allocation2 + $0x1e0] sm:$0xff] %v1051
        %1489 = vst [vmem:[#allocation2 + $0x228] sm:$0xff] %v1052
        %1490 = vst [vmem:[#allocation2 + $0x270] sm:$0xff] %v1053
        %1491 = vst [vmem:[#allocation2 + $0x2b8] sm:$0xff] %v1054
        %1492 = vst [vmem:[#allocation2 + $0x300] sm:$0xff] %v1055
        %1493 = vst [vmem:[#allocation2 + $0x348] sm:$0xff] %v1056
        %1494 = vst [vmem:[#allocation2 + $0x390] sm:$0xff] %v1057
        %1495 = vst [vmem:[#allocation2 + $0x3d8] sm:$0xff] %v1058
        %1496 = vst [vmem:[#allocation2 + $0x420] sm:$0xff] %v1413
        %1497 = vst [vmem:[#allocation2 + $0x468] sm:$0xff] %v1481
        %v1501 = vrot.slane %v1040, 1
        %v1502 = vrot.slane %v1041, 1
        %v1503 = vsel %vm1123, %v1501, %v1502
        %v1504 = vrot.slane %v1042, 1
        %v1505 = vsel %vm1123, %v1502, %v1504
        %v1508 = vpack.c.bf16 %v1505, %v1503
        %1509 = vst [vmem:[#allocation2 + $0x38] sm:$0xff] %v1238
        %1510 = vst [vmem:[#allocation2 + $0x80] sm:$0xff] %v1239
        %1511 = vst [vmem:[#allocation2 + $0xc8] sm:$0xff] %v1240
        %1512 = vst [vmem:[#allocation2 + $0x110] sm:$0xff] %v1241
        %1513 = vst [vmem:[#allocation2 + $0x158] sm:$0xff] %v1242
        %1514 = vst [vmem:[#allocation2 + $0x1a0] sm:$0xff] %v1243
        %1515 = vst [vmem:[#allocation2 + $0x1e8] sm:$0xff] %v1244
        %1516 = vst [vmem:[#allocation2 + $0x230] sm:$0xff] %v1245
        %1517 = vst [vmem:[#allocation2 + $0x278] sm:$0xff] %v1246
        %1518 = vst [vmem:[#allocation2 + $0x2c0] sm:$0xff] %v1247
        %1519 = vst [vmem:[#allocation2 + $0x308] sm:$0xff] %v1248
        %1520 = vst [vmem:[#allocation2 + $0x350] sm:$0xff] %v1249
        %1521 = vst [vmem:[#allocation2 + $0x398] sm:$0xff] %v1250
        %1522 = vst [vmem:[#allocation2 + $0x3e0] sm:$0xff] %v1251
        %1523 = vst [vmem:[#allocation2 + $0x428] sm:$0xff] %v1440
        %1524 = vst [vmem:[#allocation2 + $0x470] sm:$0xff] %v1508
        %v1525 = vrot.slane %v1040, 2
        %v1526 = vrot.slane %v1041, 2
        %v1527 = vsel %vm1268, %v1525, %v1526
        %v1528 = vrot.slane %v1042, 2
        %v1529 = vsel %vm1268, %v1526, %v1528
        %v1532 = vpack.c.bf16 %v1529, %v1527
        %1533 = vst [vmem:[#allocation2 + $0x40] sm:$0xff] %v1383
        %1534 = vst [vmem:[#allocation2 + $0x88] sm:$0xff] %v1384
        %1535 = vst [vmem:[#allocation2 + $0xd0] sm:$0xff] %v1385
        %1536 = vst [vmem:[#allocation2 + $0x118] sm:$0xff] %v1386
        %1537 = vst [vmem:[#allocation2 + $0x160] sm:$0xff] %v1387
        %1538 = vst [vmem:[#allocation2 + $0x1a8] sm:$0xff] %v1388
        %1539 = vst [vmem:[#allocation2 + $0x1f0] sm:$0xff] %v1389
        %1540 = vst [vmem:[#allocation2 + $0x238] sm:$0xff] %v1390
        %1541 = vst [vmem:[#allocation2 + $0x280] sm:$0xff] %v1391
        %1542 = vst [vmem:[#allocation2 + $0x2c8] sm:$0xff] %v1392
        %1543 = vst [vmem:[#allocation2 + $0x310] sm:$0xff] %v1393
        %1544 = vst [vmem:[#allocation2 + $0x358] sm:$0xff] %v1394
        %1545 = vst [vmem:[#allocation2 + $0x3a0] sm:$0xff] %v1395
        %1546 = vst [vmem:[#allocation2 + $0x3e8] sm:$0xff] %v1396
        %1547 = vst [vmem:[#allocation2 + $0x430] sm:$0xff] %v1464
        %1548 = vst [vmem:[#allocation2 + $0x478] sm:$0xff] %v1532
        %v1549 = vld [vmem:[#allocation2] sm:$0xff]
        %v1550 = vld [vmem:[#allocation2 + $0x8] sm:$0xff]
        %v1551 = vld [vmem:[#allocation2 + $0x10] sm:$0xff]
        %v1552 = vld [vmem:[#allocation2 + $0x18] sm:$0xff]
        %v1553 = vld [vmem:[#allocation2 + $0x20] sm:$0xff]
        %v1554 = vld [vmem:[#allocation2 + $0x28] sm:$0xff]
        %v1555 = vld [vmem:[#allocation2 + $0x30] sm:$0xff]
        %v1556 = vld [vmem:[#allocation2 + $0x38] sm:$0xff]
        %v1557 = vld [vmem:[#allocation2 + $0x40] sm:$0xff]
        %v1558 = vld [vmem:[#allocation2 + $0x48] sm:$0xff]
        %v1559 = vld [vmem:[#allocation2 + $0x50] sm:$0xff]
        %v1560 = vld [vmem:[#allocation2 + $0x58] sm:$0xff]
        %v1561 = vld [vmem:[#allocation2 + $0x60] sm:$0xff]
        %v1562 = vld [vmem:[#allocation2 + $0x68] sm:$0xff]
        %v1563 = vld [vmem:[#allocation2 + $0x70] sm:$0xff]
        %v1564 = vld [vmem:[#allocation2 + $0x78] sm:$0xff]
        %v1565 = vld [vmem:[#allocation2 + $0x80] sm:$0xff]
        %v1566 = vld [vmem:[#allocation2 + $0x88] sm:$0xff]
        %v1567 = vld [vmem:[#allocation2 + $0x90] sm:$0xff]
        %v1568 = vld [vmem:[#allocation2 + $0x98] sm:$0xff]
        %v1569 = vld [vmem:[#allocation2 + $0xa0] sm:$0xff]
        %v1570 = vld [vmem:[#allocation2 + $0xa8] sm:$0xff]
        %v1571 = vld [vmem:[#allocation2 + $0xb0] sm:$0xff]
        %v1572 = vld [vmem:[#allocation2 + $0xb8] sm:$0xff]
        %v1573 = vld [vmem:[#allocation2 + $0xc0] sm:$0xff]
        %v1574 = vld [vmem:[#allocation2 + $0xc8] sm:$0xff]
        %v1575 = vld [vmem:[#allocation2 + $0xd0] sm:$0xff]
        %v1576 = vld [vmem:[#allocation2 + $0xd8] sm:$0xff]
        %v1577 = vld [vmem:[#allocation2 + $0xe0] sm:$0xff]
        %v1578 = vld [vmem:[#allocation2 + $0xe8] sm:$0xff]
        %v1579 = vld [vmem:[#allocation2 + $0xf0] sm:$0xff]
        %v1580 = vld [vmem:[#allocation2 + $0xf8] sm:$0xff]
        %v1581 = vld [vmem:[#allocation2 + $0x100] sm:$0xff]
        %v1582 = vld [vmem:[#allocation2 + $0x108] sm:$0xff]
        %v1583 = vld [vmem:[#allocation2 + $0x110] sm:$0xff]
        %v1584 = vld [vmem:[#allocation2 + $0x118] sm:$0xff]
        %v1585 = vld [vmem:[#allocation2 + $0x120] sm:$0xff]
        %v1586 = vld [vmem:[#allocation2 + $0x128] sm:$0xff]
        %v1587 = vld [vmem:[#allocation2 + $0x130] sm:$0xff]
        %v1588 = vld [vmem:[#allocation2 + $0x138] sm:$0xff]
        %v1589 = vld [vmem:[#allocation2 + $0x140] sm:$0xff]
        %v1590 = vld [vmem:[#allocation2 + $0x148] sm:$0xff]
        %v1591 = vld [vmem:[#allocation2 + $0x150] sm:$0xff]
        %v1592 = vld [vmem:[#allocation2 + $0x158] sm:$0xff]
        %v1593 = vld [vmem:[#allocation2 + $0x160] sm:$0xff]
        %v1594 = vld [vmem:[#allocation2 + $0x168] sm:$0xff]
        %v1595 = vld [vmem:[#allocation2 + $0x170] sm:$0xff]
        %v1596 = vld [vmem:[#allocation2 + $0x178] sm:$0xff]
        %v1597 = vld [vmem:[#allocation2 + $0x180] sm:$0xff]
        %v1598 = vld [vmem:[#allocation2 + $0x188] sm:$0xff]
        %v1599 = vld [vmem:[#allocation2 + $0x190] sm:$0xff]
        %v1600 = vld [vmem:[#allocation2 + $0x198] sm:$0xff]
        %v1601 = vld [vmem:[#allocation2 + $0x1a0] sm:$0xff]
        %v1602 = vld [vmem:[#allocation2 + $0x1a8] sm:$0xff]
        %v1603 = vld [vmem:[#allocation2 + $0x1b0] sm:$0xff]
        %v1604 = vld [vmem:[#allocation2 + $0x1b8] sm:$0xff]
        %v1605 = vld [vmem:[#allocation2 + $0x1c0] sm:$0xff]
        %v1606 = vld [vmem:[#allocation2 + $0x1c8] sm:$0xff]
        %v1607 = vld [vmem:[#allocation2 + $0x1d0] sm:$0xff]
        %v1608 = vld [vmem:[#allocation2 + $0x1d8] sm:$0xff]
        %v1609 = vld [vmem:[#allocation2 + $0x1e0] sm:$0xff]
        %v1610 = vld [vmem:[#allocation2 + $0x1e8] sm:$0xff]
        %v1611 = vld [vmem:[#allocation2 + $0x1f0] sm:$0xff]
        %v1612 = vld [vmem:[#allocation2 + $0x1f8] sm:$0xff]
        %v1613 = vld [vmem:[#allocation2 + $0x200] sm:$0xff]
        %v1614 = vld [vmem:[#allocation2 + $0x208] sm:$0xff]
        %v1615 = vld [vmem:[#allocation2 + $0x210] sm:$0xff]
        %v1616 = vld [vmem:[#allocation2 + $0x218] sm:$0xff]
        %v1617 = vld [vmem:[#allocation2 + $0x220] sm:$0xff]
        %v1618 = vld [vmem:[#allocation2 + $0x228] sm:$0xff]
        %v1619 = vld [vmem:[#allocation2 + $0x230] sm:$0xff]
        %v1620 = vld [vmem:[#allocation2 + $0x238] sm:$0xff]
        %v1621 = vld [vmem:[#allocation2 + $0x240] sm:$0xff]
        %v1622 = vld [vmem:[#allocation2 + $0x248] sm:$0xff]
        %v1623 = vld [vmem:[#allocation2 + $0x250] sm:$0xff]
        %v1624 = vld [vmem:[#allocation2 + $0x258] sm:$0xff]
        %v1625 = vld [vmem:[#allocation2 + $0x260] sm:$0xff]
        %v1626 = vld [vmem:[#allocation2 + $0x268] sm:$0xff]
        %v1627 = vld [vmem:[#allocation2 + $0x270] sm:$0xff]
        %v1628 = vld [vmem:[#allocation2 + $0x278] sm:$0xff]
        %v1629 = vld [vmem:[#allocation2 + $0x280] sm:$0xff]
        %v1630 = vld [vmem:[#allocation2 + $0x288] sm:$0xff]
        %v1631 = vld [vmem:[#allocation2 + $0x290] sm:$0xff]
        %v1632 = vld [vmem:[#allocation2 + $0x298] sm:$0xff]
        %v1633 = vld [vmem:[#allocation2 + $0x2a0] sm:$0xff]
        %v1634 = vld [vmem:[#allocation2 + $0x2a8] sm:$0xff]
        %v1635 = vld [vmem:[#allocation2 + $0x2b0] sm:$0xff]
        %v1636 = vld [vmem:[#allocation2 + $0x2b8] sm:$0xff]
        %v1637 = vld [vmem:[#allocation2 + $0x2c0] sm:$0xff]
        %v1638 = vld [vmem:[#allocation2 + $0x2c8] sm:$0xff]
        %v1639 = vld [vmem:[#allocation2 + $0x2d0] sm:$0xff]
        %v1640 = vld [vmem:[#allocation2 + $0x2d8] sm:$0xff]
        %v1641 = vld [vmem:[#allocation2 + $0x2e0] sm:$0xff]
        %v1642 = vld [vmem:[#allocation2 + $0x2e8] sm:$0xff]
        %v1643 = vld [vmem:[#allocation2 + $0x2f0] sm:$0xff]
        %v1644 = vld [vmem:[#allocation2 + $0x2f8] sm:$0xff]
        %v1645 = vld [vmem:[#allocation2 + $0x300] sm:$0xff]
        %v1646 = vld [vmem:[#allocation2 + $0x308] sm:$0xff]
        %v1647 = vld [vmem:[#allocation2 + $0x310] sm:$0xff]
        %v1648 = vld [vmem:[#allocation2 + $0x318] sm:$0xff]
        %v1649 = vld [vmem:[#allocation2 + $0x320] sm:$0xff]
        %v1650 = vld [vmem:[#allocation2 + $0x328] sm:$0xff]
        %v1651 = vld [vmem:[#allocation2 + $0x330] sm:$0xff]
        %v1652 = vld [vmem:[#allocation2 + $0x338] sm:$0xff]
        %v1653 = vld [vmem:[#allocation2 + $0x340] sm:$0xff]
        %v1654 = vld [vmem:[#allocation2 + $0x348] sm:$0xff]
        %v1655 = vld [vmem:[#allocation2 + $0x350] sm:$0xff]
        %v1656 = vld [vmem:[#allocation2 + $0x358] sm:$0xff]
        %v1657 = vld [vmem:[#allocation2 + $0x360] sm:$0xff]
        %v1658 = vld [vmem:[#allocation2 + $0x368] sm:$0xff]
        %v1659 = vld [vmem:[#allocation2 + $0x370] sm:$0xff]
        %v1660 = vld [vmem:[#allocation2 + $0x378] sm:$0xff]
        %v1661 = vld [vmem:[#allocation2 + $0x380] sm:$0xff]
        %v1662 = vld [vmem:[#allocation2 + $0x388] sm:$0xff]
        %v1663 = vld [vmem:[#allocation2 + $0x390] sm:$0xff]
        %v1664 = vld [vmem:[#allocation2 + $0x398] sm:$0xff]
        %v1665 = vld [vmem:[#allocation2 + $0x3a0] sm:$0xff]
        %v1666 = vld [vmem:[#allocation2 + $0x3a8] sm:$0xff]
        %v1667 = vld [vmem:[#allocation2 + $0x3b0] sm:$0xff]
        %v1668 = vld [vmem:[#allocation2 + $0x3b8] sm:$0xff]
        %v1669 = vld [vmem:[#allocation2 + $0x3c0] sm:$0xff]
        %v1670 = vld [vmem:[#allocation2 + $0x3c8] sm:$0xff]
        %v1671 = vld [vmem:[#allocation2 + $0x3d0] sm:$0xff]
        %v1672 = vld [vmem:[#allocation2 + $0x3d8] sm:$0xff]
        %v1673 = vld [vmem:[#allocation2 + $0x3e0] sm:$0xff]
        %v1674 = vld [vmem:[#allocation2 + $0x3e8] sm:$0xff]
        %v1675 = vld [vmem:[#allocation2 + $0x3f0] sm:$0xff]
        %v1676 = vld [vmem:[#allocation2 + $0x3f8] sm:$0xff]
        %v1677 = vld [vmem:[#allocation2 + $0x400] sm:$0xff]
        %v1678 = vld [vmem:[#allocation2 + $0x408] sm:$0xff]
        %v1679 = vld [vmem:[#allocation2 + $0x410] sm:$0xff]
        %v1680 = vld [vmem:[#allocation2 + $0x418] sm:$0xff]
        %v1681 = vld [vmem:[#allocation2 + $0x420] sm:$0xff]
        %v1682 = vld [vmem:[#allocation2 + $0x428] sm:$0xff]
        %v1683 = vld [vmem:[#allocation2 + $0x430] sm:$0xff]
        %v1684 = vld [vmem:[#allocation2 + $0x438] sm:$0xff]
        %v1685 = vld [vmem:[#allocation2 + $0x440] sm:$0xff]
        %v1686 = vld [vmem:[#allocation2 + $0x448] sm:$0xff]
        %v1687 = vld [vmem:[#allocation2 + $0x450] sm:$0xff]
        %v1688 = vld [vmem:[#allocation2 + $0x458] sm:$0xff]
        %v1689 = vld [vmem:[#allocation2 + $0x460] sm:$0xff]
        %v1690 = vld [vmem:[#allocation2 + $0x468] sm:$0xff]
        %v1691 = vld [vmem:[#allocation2 + $0x470] sm:$0xff]
        %v1692 = vld [vmem:[#allocation2 + $0x478] sm:$0xff]
        %v1693 = vld [vmem:[%s3] sm:$0xf]
        %v1694 = vld [vmem:[%s3 + $0x4] sm:$0xf]
        %v1695 = vld [vmem:[%s3 + $0x8] sm:$0xf]
        %v1696 = vld [vmem:[%s3 + $0xc] sm:$0xf]
        %v1697 = vld [vmem:[%s3 + $0x10] sm:$0xf]
        %v1698 = vld [vmem:[%s3 + $0x14] sm:$0xf]
        %v1699 = vld [vmem:[%s3 + $0x18] sm:$0xf]
        %v1700 = vld [vmem:[%s3 + $0x1c] sm:$0xf]
        %v1701 = vld [vmem:[%s3 + $0x20] sm:$0xf]
        %v1702 = vld [vmem:[%s3 + $0x24] sm:$0xf]
        %v1703 = vld [vmem:[%s3 + $0x28] sm:$0xf]
        %v1704 = vld [vmem:[%s3 + $0x2c] sm:$0xf]
        %v1705 = vld [vmem:[%s3 + $0x30] sm:$0xf]
        %v1706 = vld [vmem:[%s3 + $0x34] sm:$0xf]
        %v1707 = vld [vmem:[%s3 + $0x38] sm:$0xf]
        %v1708 = vld [vmem:[%s3 + $0x3c] sm:$0xf]
        %v1709 = vld [vmem:[%s3 + $0x40] sm:$0xf]
        %v1710 = vld [vmem:[%s3 + $0x44] sm:$0xf]
        %v1711 = vld [vmem:[%s3 + $0x48] sm:$0xf]
        %v1712 = vld [vmem:[%s3 + $0x4c] sm:$0xf]
        %v1713 = vld [vmem:[%s3 + $0x50] sm:$0xf]
        %v1714 = vld [vmem:[%s3 + $0x54] sm:$0xf]
        %v1715 = vld [vmem:[%s3 + $0x58] sm:$0xf]
        %v1716 = vld [vmem:[%s3 + $0x5c] sm:$0xf]
        %v1717 = vld [vmem:[%s3 + $0x60] sm:$0xf]
        %v1718 = vld [vmem:[%s3 + $0x64] sm:$0xf]
        %v1719 = vld [vmem:[%s3 + $0x68] sm:$0xf]
        %v1720 = vld [vmem:[%s3 + $0x6c] sm:$0xf]
        %v1721 = vld [vmem:[%s3 + $0x70] sm:$0xf]
        %v1722 = vld [vmem:[%s3 + $0x74] sm:$0xf]
        %v1723 = vld [vmem:[%s3 + $0x78] sm:$0xf]
        %v1724 = vld [vmem:[%s3 + $0x7c] sm:$0xf]
        %v1725 = vld [vmem:[%s3 + $0x80] sm:$0xf]
        %v1726 = vld [vmem:[%s3 + $0x84] sm:$0xf]
        %v1727 = vld [vmem:[%s3 + $0x88] sm:$0xf]
        %v1728 = vld [vmem:[%s3 + $0x8c] sm:$0xf]
        %v1729 = vld [vmem:[%s3 + $0x90] sm:$0xf]
        %v1730 = vld [vmem:[%s3 + $0x94] sm:$0xf]
        %v1731 = vld [vmem:[%s3 + $0x98] sm:$0xf]
        %v1732 = vld [vmem:[%s3 + $0x9c] sm:$0xf]
        %v1733 = vld [vmem:[%s3 + $0xa0] sm:$0xf]
        %v1734 = vld [vmem:[%s3 + $0xa4] sm:$0xf]
        %v1735 = vld [vmem:[%s3 + $0xa8] sm:$0xf]
        %v1736 = vld [vmem:[%s3 + $0xac] sm:$0xf]
        %v1737 = vld [vmem:[%s3 + $0xb0] sm:$0xf]
        %v1738 = vld [vmem:[%s3 + $0xb4] sm:$0xf]
        %v1739 = vld [vmem:[%s3 + $0xb8] sm:$0xf]
        %v1740 = vld [vmem:[%s3 + $0xbc] sm:$0xf]
        %v1741 = vld [vmem:[%s3 + $0xc0] sm:$0xf]
        %v1742 = vld [vmem:[%s3 + $0xc4] sm:$0xf]
        %v1743 = vld [vmem:[%s3 + $0xc8] sm:$0xf]
        %v1744 = vld [vmem:[%s3 + $0xcc] sm:$0xf]
        %v1745 = vld [vmem:[%s3 + $0xd0] sm:$0xf]
        %v1746 = vld [vmem:[%s3 + $0xd4] sm:$0xf]
        %v1747 = vld [vmem:[%s3 + $0xd8] sm:$0xf]
        %v1748 = vld [vmem:[%s3 + $0xdc] sm:$0xf]
        %v1749 = vld [vmem:[%s3 + $0xe0] sm:$0xf]
        %v1750 = vld [vmem:[%s3 + $0xe4] sm:$0xf]
        %v1751 = vld [vmem:[%s3 + $0xe8] sm:$0xf]
        %v1752 = vld [vmem:[%s3 + $0xec] sm:$0xf]
        %v1753 = vld [vmem:[%s3 + $0xf0] sm:$0xf]
        %v1754 = vld [vmem:[%s3 + $0xf4] sm:$0xf]
        %v1755 = vld [vmem:[%s3 + $0xf8] sm:$0xf]
        %v1756 = vld [vmem:[%s3 + $0xfc] sm:$0xf]
        %v1757 = vld [vmem:[%s3 + $0x100] sm:$0xf]
        %v1758 = vld [vmem:[%s3 + $0x104] sm:$0xf]
        %v1759 = vld [vmem:[%s3 + $0x108] sm:$0xf]
        %v1760 = vld [vmem:[%s3 + $0x10c] sm:$0xf]
        %v1761 = vld [vmem:[%s3 + $0x110] sm:$0xf]
        %v1762 = vld [vmem:[%s3 + $0x114] sm:$0xf]
        %v1763 = vld [vmem:[%s3 + $0x118] sm:$0xf]
        %v1764 = vld [vmem:[%s3 + $0x11c] sm:$0xf]
        %v1765 = vld [vmem:[%s3 + $0x120] sm:$0xf]
        %v1766 = vld [vmem:[%s3 + $0x124] sm:$0xf]
        %v1767 = vld [vmem:[%s3 + $0x128] sm:$0xf]
        %v1768 = vld [vmem:[%s3 + $0x12c] sm:$0xf]
        %v1769 = vld [vmem:[%s3 + $0x130] sm:$0xf]
        %v1770 = vld [vmem:[%s3 + $0x134] sm:$0xf]
        %v1771 = vld [vmem:[%s3 + $0x138] sm:$0xf]
        %v1772 = vld [vmem:[%s3 + $0x13c] sm:$0xf]
        %v1773 = vld [vmem:[%s3 + $0x140] sm:$0xf]
        %v1774 = vld [vmem:[%s3 + $0x144] sm:$0xf]
        %v1775 = vld [vmem:[%s3 + $0x148] sm:$0xf]
        %v1776 = vld [vmem:[%s3 + $0x14c] sm:$0xf]
        %v1777 = vld [vmem:[%s3 + $0x150] sm:$0xf]
        %v1778 = vld [vmem:[%s3 + $0x154] sm:$0xf]
        %v1779 = vld [vmem:[%s3 + $0x158] sm:$0xf]
        %v1780 = vld [vmem:[%s3 + $0x15c] sm:$0xf]
        %v1781 = vld [vmem:[%s3 + $0x160] sm:$0xf]
        %v1782 = vld [vmem:[%s3 + $0x164] sm:$0xf]
        %v1783 = vld [vmem:[%s3 + $0x168] sm:$0xf]
        %v1784 = vld [vmem:[%s3 + $0x16c] sm:$0xf]
        %v1785 = vld [vmem:[%s3 + $0x170] sm:$0xf]
        %v1786 = vld [vmem:[%s3 + $0x174] sm:$0xf]
        %v1787 = vld [vmem:[%s3 + $0x178] sm:$0xf]
        %v1788 = vld [vmem:[%s3 + $0x17c] sm:$0xf]
        %v1789 = vld [vmem:[%s3 + $0x180] sm:$0xf]
        %v1790 = vld [vmem:[%s3 + $0x184] sm:$0xf]
        %v1791 = vld [vmem:[%s3 + $0x188] sm:$0xf]
        %v1792 = vld [vmem:[%s3 + $0x18c] sm:$0xf]
        %v1793 = vld [vmem:[%s3 + $0x190] sm:$0xf]
        %v1794 = vld [vmem:[%s3 + $0x194] sm:$0xf]
        %v1795 = vld [vmem:[%s3 + $0x198] sm:$0xf]
        %v1796 = vld [vmem:[%s3 + $0x19c] sm:$0xf]
        %v1797 = vld [vmem:[%s3 + $0x1a0] sm:$0xf]
        %v1798 = vld [vmem:[%s3 + $0x1a4] sm:$0xf]
        %v1799 = vld [vmem:[%s3 + $0x1a8] sm:$0xf]
        %v1800 = vld [vmem:[%s3 + $0x1ac] sm:$0xf]
        %v1801 = vld [vmem:[%s3 + $0x1b0] sm:$0xf]
        %v1802 = vld [vmem:[%s3 + $0x1b4] sm:$0xf]
        %v1803 = vld [vmem:[%s3 + $0x1b8] sm:$0xf]
        %v1804 = vld [vmem:[%s3 + $0x1bc] sm:$0xf]
        %v1805 = vld [vmem:[%s3 + $0x1c0] sm:$0xf]
        %v1806 = vld [vmem:[%s3 + $0x1c4] sm:$0xf]
        %v1807 = vld [vmem:[%s3 + $0x1c8] sm:$0xf]
        %v1808 = vld [vmem:[%s3 + $0x1cc] sm:$0xf]
        %v1809 = vld [vmem:[%s3 + $0x1d0] sm:$0xf]
        %v1810 = vld [vmem:[%s3 + $0x1d4] sm:$0xf]
        %v1811 = vld [vmem:[%s3 + $0x1d8] sm:$0xf]
        %v1812 = vld [vmem:[%s3 + $0x1dc] sm:$0xf]
        %v1813 = vld [vmem:[%s3 + $0x1e0] sm:$0xf]
        %v1814 = vld [vmem:[%s3 + $0x1e4] sm:$0xf]
        %v1815 = vld [vmem:[%s3 + $0x1e8] sm:$0xf]
        %v1816 = vld [vmem:[%s3 + $0x1ec] sm:$0xf]
        %v1817 = vld [vmem:[%s3 + $0x1f0] sm:$0xf]
        %v1818 = vld [vmem:[%s3 + $0x1f4] sm:$0xf]
        %v1819 = vld [vmem:[%s3 + $0x1f8] sm:$0xf]
        %v1820 = vld [vmem:[%s3 + $0x1fc] sm:$0xf]
        %v1821 = vld [vmem:[%s3 + $0x200] sm:$0xf]
        %v1822 = vld [vmem:[%s3 + $0x204] sm:$0xf]
        %v1823 = vld [vmem:[%s3 + $0x208] sm:$0xf]
        %v1824 = vld [vmem:[%s3 + $0x20c] sm:$0xf]
        %v1825 = vld [vmem:[%s3 + $0x210] sm:$0xf]
        %v1826 = vld [vmem:[%s3 + $0x214] sm:$0xf]
        %v1827 = vld [vmem:[%s3 + $0x218] sm:$0xf]
        %v1828 = vld [vmem:[%s3 + $0x21c] sm:$0xf]
        %v1829 = vld [vmem:[%s3 + $0x220] sm:$0xf]
        %v1830 = vld [vmem:[%s3 + $0x224] sm:$0xf]
        %v1831 = vld [vmem:[%s3 + $0x228] sm:$0xf]
        %v1832 = vld [vmem:[%s3 + $0x22c] sm:$0xf]
        %v1833 = vld [vmem:[%s3 + $0x230] sm:$0xf]
        %v1834 = vld [vmem:[%s3 + $0x234] sm:$0xf]
        %v1835 = vld [vmem:[%s3 + $0x238] sm:$0xf]
        %v1836 = vld [vmem:[%s3 + $0x23c] sm:$0xf]
        %v1981 = vunpack.c.l.b16 %v1693
        %v1982 = vunpack.c.l.b16 %v1694
        %v1983 = vunpack.c.l.b16 %v1695
        %v1984 = vunpack.c.l.b16 %v1696
        %v1985 = vunpack.c.l.b16 %v1697
        %v1986 = vunpack.c.l.b16 %v1698
        %v1987 = vunpack.c.l.b16 %v1699
        %v1988 = vunpack.c.l.b16 %v1700
        %v1989 = vunpack.c.l.b16 %v1701
        %v1990 = vunpack.c.l.b16 %v1702
        %v1991 = vunpack.c.l.b16 %v1703
        %v1992 = vunpack.c.l.b16 %v1704
        %v1993 = vunpack.c.l.b16 %v1705
        %v1994 = vunpack.c.l.b16 %v1706
        %v1995 = vunpack.c.l.b16 %v1707
        %v1996 = vunpack.c.l.b16 %v1708
        %v1997 = vunpack.c.l.b16 %v1709
        %v1998 = vunpack.c.l.b16 %v1710
        %v1999 = vunpack.c.l.b16 %v1711
        %v2000 = vunpack.c.l.b16 %v1712
        %v2001 = vunpack.c.l.b16 %v1713
        %v2002 = vunpack.c.l.b16 %v1714
        %v2003 = vunpack.c.l.b16 %v1715
        %v2004 = vunpack.c.l.b16 %v1716
        %v2005 = vunpack.c.l.b16 %v1717
        %v2006 = vunpack.c.l.b16 %v1718
        %v2007 = vunpack.c.l.b16 %v1719
        %v2008 = vunpack.c.l.b16 %v1720
        %v2009 = vunpack.c.l.b16 %v1721
        %v2010 = vunpack.c.l.b16 %v1722
        %v2011 = vunpack.c.l.b16 %v1723
        %v2012 = vunpack.c.l.b16 %v1724
        %v2013 = vunpack.c.l.b16 %v1725
        %v2014 = vunpack.c.l.b16 %v1726
        %v2015 = vunpack.c.l.b16 %v1727
        %v2016 = vunpack.c.l.b16 %v1728
        %v2017 = vunpack.c.l.b16 %v1729
        %v2018 = vunpack.c.l.b16 %v1730
        %v2019 = vunpack.c.l.b16 %v1731
        %v2020 = vunpack.c.l.b16 %v1732
        %v2021 = vunpack.c.l.b16 %v1733
        %v2022 = vunpack.c.l.b16 %v1734
        %v2023 = vunpack.c.l.b16 %v1735
        %v2024 = vunpack.c.l.b16 %v1736
        %v2025 = vunpack.c.l.b16 %v1737
        %v2026 = vunpack.c.l.b16 %v1738
        %v2027 = vunpack.c.l.b16 %v1739
        %v2028 = vunpack.c.l.b16 %v1740
        %v2029 = vunpack.c.l.b16 %v1741
        %v2030 = vunpack.c.l.b16 %v1742
        %v2031 = vunpack.c.l.b16 %v1743
        %v2032 = vunpack.c.l.b16 %v1744
        %v2033 = vunpack.c.l.b16 %v1745
        %v2034 = vunpack.c.l.b16 %v1746
        %v2035 = vunpack.c.l.b16 %v1747
        %v2036 = vunpack.c.l.b16 %v1748
        %v2037 = vunpack.c.l.b16 %v1749
        %v2038 = vunpack.c.l.b16 %v1750
        %v2039 = vunpack.c.l.b16 %v1751
        %v2040 = vunpack.c.l.b16 %v1752
        %v2041 = vunpack.c.l.b16 %v1753
        %v2042 = vunpack.c.l.b16 %v1754
        %v2043 = vunpack.c.l.b16 %v1755
        %v2044 = vunpack.c.l.b16 %v1756
        %v2045 = vunpack.c.l.b16 %v1757
        %v2046 = vunpack.c.l.b16 %v1758
        %v2047 = vunpack.c.l.b16 %v1759
        %v2048 = vunpack.c.l.b16 %v1760
        %v2049 = vunpack.c.l.b16 %v1761
        %v2050 = vunpack.c.l.b16 %v1762
        %v2051 = vunpack.c.l.b16 %v1763
        %v2052 = vunpack.c.l.b16 %v1764
        %v2053 = vunpack.c.l.b16 %v1765
        %v2054 = vunpack.c.l.b16 %v1766
        %v2055 = vunpack.c.l.b16 %v1767
        %v2056 = vunpack.c.l.b16 %v1768
        %v2057 = vunpack.c.l.b16 %v1769
        %v2058 = vunpack.c.l.b16 %v1770
        %v2059 = vunpack.c.l.b16 %v1771
        %v2060 = vunpack.c.l.b16 %v1772
        %v2061 = vunpack.c.l.b16 %v1773
        %v2062 = vunpack.c.l.b16 %v1774
        %v2063 = vunpack.c.l.b16 %v1775
        %v2064 = vunpack.c.l.b16 %v1776
        %v2065 = vunpack.c.l.b16 %v1777
        %v2066 = vunpack.c.l.b16 %v1778
        %v2067 = vunpack.c.l.b16 %v1779
        %v2068 = vunpack.c.l.b16 %v1780
        %v2069 = vunpack.c.l.b16 %v1781
        %v2070 = vunpack.c.l.b16 %v1782
        %v2071 = vunpack.c.l.b16 %v1783
        %v2072 = vunpack.c.l.b16 %v1784
        %v2073 = vunpack.c.l.b16 %v1785
        %v2074 = vunpack.c.l.b16 %v1786
        %v2075 = vunpack.c.l.b16 %v1787
        %v2076 = vunpack.c.l.b16 %v1788
        %v2077 = vunpack.c.l.b16 %v1789
        %v2078 = vunpack.c.l.b16 %v1790
        %v2079 = vunpack.c.l.b16 %v1791
        %v2080 = vunpack.c.l.b16 %v1792
        %v2081 = vunpack.c.l.b16 %v1793
        %v2082 = vunpack.c.l.b16 %v1794
        %v2083 = vunpack.c.l.b16 %v1795
        %v2084 = vunpack.c.l.b16 %v1796
        %v2085 = vunpack.c.l.b16 %v1797
        %v2086 = vunpack.c.l.b16 %v1798
        %v2087 = vunpack.c.l.b16 %v1799
        %v2088 = vunpack.c.l.b16 %v1800
        %v2089 = vunpack.c.l.b16 %v1801
        %v2090 = vunpack.c.l.b16 %v1802
        %v2091 = vunpack.c.l.b16 %v1803
        %v2092 = vunpack.c.l.b16 %v1804
        %v2093 = vunpack.c.l.b16 %v1805
        %v2094 = vunpack.c.l.b16 %v1806
        %v2095 = vunpack.c.l.b16 %v1807
        %v2096 = vunpack.c.l.b16 %v1808
        %v2097 = vunpack.c.l.b16 %v1809
        %v2098 = vunpack.c.l.b16 %v1810
        %v2099 = vunpack.c.l.b16 %v1811
        %v2100 = vunpack.c.l.b16 %v1812
        %v2101 = vunpack.c.l.b16 %v1813
        %v2102 = vunpack.c.l.b16 %v1814
        %v2103 = vunpack.c.l.b16 %v1815
        %v2104 = vunpack.c.l.b16 %v1816
        %v2105 = vunpack.c.l.b16 %v1817
        %v2106 = vunpack.c.l.b16 %v1818
        %v2107 = vunpack.c.l.b16 %v1819
        %v2108 = vunpack.c.l.b16 %v1820
        %v2109 = vunpack.c.l.b16 %v1821
        %v2110 = vunpack.c.l.b16 %v1822
        %v2111 = vunpack.c.l.b16 %v1823
        %v2112 = vunpack.c.l.b16 %v1824
        %v2113 = vunpack.c.l.b16 %v1825
        %v2114 = vunpack.c.l.b16 %v1826
        %v2115 = vunpack.c.l.b16 %v1827
        %v2116 = vunpack.c.l.b16 %v1828
        %v2117 = vunpack.c.l.b16 %v1829
        %v2118 = vunpack.c.l.b16 %v1830
        %v2119 = vunpack.c.l.b16 %v1831
        %v2120 = vunpack.c.l.b16 %v1832
        %v2121 = vunpack.c.l.b16 %v1833
        %v2122 = vunpack.c.l.b16 %v1834
        %v2123 = vunpack.c.l.b16 %v1835
        %v2124 = vunpack.c.l.b16 %v1836
        %v2125 = vpack.c.b16 %v1982, %v1981
        %v2126 = vpack.c.b16 %v1984, %v1983
        %v2127 = vpack.c.b16 %v1986, %v1985
        %v2128 = vpack.c.b16 %v1988, %v1987
        %v2129 = vpack.c.b16 %v1990, %v1989
        %v2130 = vpack.c.b16 %v1992, %v1991
        %v2131 = vpack.c.b16 %v1994, %v1993
        %v2132 = vpack.c.b16 %v1996, %v1995
        %v2133 = vpack.c.b16 %v1998, %v1997
        %v2134 = vpack.c.b16 %v2000, %v1999
        %v2135 = vpack.c.b16 %v2002, %v2001
        %v2136 = vpack.c.b16 %v2004, %v2003
        %v2137 = vpack.c.b16 %v2006, %v2005
        %v2138 = vpack.c.b16 %v2008, %v2007
        %v2139 = vpack.c.b16 %v2010, %v2009
        %v2140 = vpack.c.b16 %v2012, %v2011
        %v2141 = vpack.c.b16 %v2014, %v2013
        %v2142 = vpack.c.b16 %v2016, %v2015
        %v2143 = vpack.c.b16 %v2018, %v2017
        %v2144 = vpack.c.b16 %v2020, %v2019
        %v2145 = vpack.c.b16 %v2022, %v2021
        %v2146 = vpack.c.b16 %v2024, %v2023
        %v2147 = vpack.c.b16 %v2026, %v2025
        %v2148 = vpack.c.b16 %v2028, %v2027
        %v2149 = vpack.c.b16 %v2030, %v2029
        %v2150 = vpack.c.b16 %v2032, %v2031
        %v2151 = vpack.c.b16 %v2034, %v2033
        %v2152 = vpack.c.b16 %v2036, %v2035
        %v2153 = vpack.c.b16 %v2038, %v2037
        %v2154 = vpack.c.b16 %v2040, %v2039
        %v2155 = vpack.c.b16 %v2042, %v2041
        %v2156 = vpack.c.b16 %v2044, %v2043
        %v2157 = vpack.c.b16 %v2046, %v2045
        %v2158 = vpack.c.b16 %v2048, %v2047
        %v2159 = vpack.c.b16 %v2050, %v2049
        %v2160 = vpack.c.b16 %v2052, %v2051
        %v2161 = vpack.c.b16 %v2054, %v2053
        %v2162 = vpack.c.b16 %v2056, %v2055
        %v2163 = vpack.c.b16 %v2058, %v2057
        %v2164 = vpack.c.b16 %v2060, %v2059
        %v2165 = vpack.c.b16 %v2062, %v2061
        %v2166 = vpack.c.b16 %v2064, %v2063
        %v2167 = vpack.c.b16 %v2066, %v2065
        %v2168 = vpack.c.b16 %v2068, %v2067
        %v2169 = vpack.c.b16 %v2070, %v2069
        %v2170 = vpack.c.b16 %v2072, %v2071
        %v2171 = vpack.c.b16 %v2074, %v2073
        %v2172 = vpack.c.b16 %v2076, %v2075
        %v2173 = vpack.c.b16 %v2078, %v2077
        %v2174 = vpack.c.b16 %v2080, %v2079
        %v2175 = vpack.c.b16 %v2082, %v2081
        %v2176 = vpack.c.b16 %v2084, %v2083
        %v2177 = vpack.c.b16 %v2086, %v2085
        %v2178 = vpack.c.b16 %v2088, %v2087
        %v2179 = vpack.c.b16 %v2090, %v2089
        %v2180 = vpack.c.b16 %v2092, %v2091
        %v2181 = vpack.c.b16 %v2094, %v2093
        %v2182 = vpack.c.b16 %v2096, %v2095
        %v2183 = vpack.c.b16 %v2098, %v2097
        %v2184 = vpack.c.b16 %v2100, %v2099
        %v2185 = vpack.c.b16 %v2102, %v2101
        %v2186 = vpack.c.b16 %v2104, %v2103
        %v2187 = vpack.c.b16 %v2106, %v2105
        %v2188 = vpack.c.b16 %v2108, %v2107
        %v2189 = vpack.c.b16 %v2110, %v2109
        %v2190 = vpack.c.b16 %v2112, %v2111
        %v2191 = vpack.c.b16 %v2114, %v2113
        %v2192 = vpack.c.b16 %v2116, %v2115
        %v2193 = vpack.c.b16 %v2118, %v2117
        %v2194 = vpack.c.b16 %v2120, %v2119
        %v2195 = vpack.c.b16 %v2122, %v2121
        %v2196 = vpack.c.b16 %v2124, %v2123
        %2269 = vmatprep.subr.bf16.mxu0 0
        %2270 = vmatpush1.bf16.msra.mxu0 %v2125
        %2271 = vmatprep.subr.bf16.mxu0 0
        %2272 = vmatpush1.bf16.msra.mxu0 %v2126
        %2273 = vmatprep.subr.bf16.mxu0 0
        %2274 = vmatpush1.bf16.msra.mxu0 %v2127
        %2275 = vmatprep.subr.bf16.mxu0 0
        %2276 = vmatpush1.bf16.msra.mxu0 %v2128
        %2277 = vmatprep.subr.bf16.mxu0 0
        %2278 = vmatpush1.bf16.msra.mxu0 %v2129
        %2279 = vmatprep.subr.bf16.mxu0 0
        %2280 = vmatpush1.bf16.msra.mxu0 %v2130
        %2281 = vmatprep.subr.bf16.mxu0 0
        %2282 = vmatpush1.bf16.msra.mxu0 %v2131
        %2283 = vmatprep.subr.bf16.mxu0 0
        %2284 = vmatpush1.bf16.msra.mxu0 %v2132
        %2285 = vmatprep.subr.bf16.mxu0 0
        %2286 = vmatpush1.bf16.msra.mxu0 %v2133
        %2287 = vmatprep.subr.bf16.mxu0 0
        %2288 = vmatpush1.bf16.msra.mxu0 %v2134
        %2289 = vmatprep.subr.bf16.mxu0 0
        %2290 = vmatpush1.bf16.msra.mxu0 %v2135
        %2291 = vmatprep.subr.bf16.mxu0 0
        %2292 = vmatpush1.bf16.msra.mxu0 %v2136
        %2293 = vmatprep.subr.bf16.mxu0 0
        %2294 = vmatpush1.bf16.msra.mxu0 %v2137
        %2295 = vmatprep.subr.bf16.mxu0 0
        %2296 = vmatpush1.bf16.msra.mxu0 %v2138
        %2297 = vmatprep.subr.bf16.mxu0 0
        %2298 = vmatpush1.bf16.msra.mxu0 %v2139
        %2299 = vmatprep.subr.bf16.mxu0 0
        %2300 = vmatpush1.bf16.msra.mxu0 %v2140
        %2301 = vmatprep.mubr.bf16.mxu0 %v1550
        %2302 = vmatmul.mubr.bf16.gmra.mrb[0].mxu0 %v1549
        %v2303 = vpop.f32.mrb[0].mxu0
        %v2304 = vadd.f32 0.0, %v2303
        %v2305 = vpop.f32.mrb[0].mxu0
        %v2306 = vpop.f32.mrb[0].mxu0
        %v2307 = vadd.f32 0.0, %v2306
        %v2308 = vpop.f32.mrb[0].mxu0
        %2309 = vmatprep.mubr.bf16.mxu0 %v1559
        %2310 = vmatmul.mubr.bf16.gmra.mrb[0].mxu0 %v1558
        %v2311 = vpop.f32.mrb[0].mxu0
        %v2312 = vadd.f32 0.0, %v2311
        %v2313 = vpop.f32.mrb[0].mxu0
        %v2314 = vpop.f32.mrb[0].mxu0
        %v2315 = vadd.f32 0.0, %v2314
        %v2316 = vpop.f32.mrb[0].mxu0
        %2317 = vmatprep.mubr.bf16.mxu0 %v1568
        %2318 = vmatmul.mubr.bf16.gmra.mrb[0].mxu0 %v1567
        %v2319 = vpop.f32.mrb[0].mxu0
        %v2320 = vadd.f32 0.0, %v2319
        %v2321 = vpop.f32.mrb[0].mxu0
        %v2322 = vpop.f32.mrb[0].mxu0
        %v2323 = vadd.f32 0.0, %v2322
        %v2324 = vpop.f32.mrb[0].mxu0
        %2325 = vmatprep.mubr.bf16.mxu0 %v1577
        %2326 = vmatmul.mubr.bf16.gmra.mrb[0].mxu0 %v1576
        %v2327 = vpop.f32.mrb[0].mxu0
        %v2328 = vadd.f32 0.0, %v2327
        %v2329 = vpop.f32.mrb[0].mxu0
        %v2330 = vpop.f32.mrb[0].mxu0
        %v2331 = vadd.f32 0.0, %v2330
        %v2332 = vpop.f32.mrb[0].mxu0
        %2333 = vmatprep.mubr.bf16.mxu0 %v1586
        %2334 = vmatmul.mubr.bf16.gmra.mrb[0].mxu0 %v1585
        %v2335 = vpop.f32.mrb[0].mxu0
        %v2336 = vadd.f32 0.0, %v2335
        %v2337 = vpop.f32.mrb[0].mxu0
        %v2338 = vpop.f32.mrb[0].mxu0
        %v2339 = vadd.f32 0.0, %v2338
        %v2340 = vpop.f32.mrb[0].mxu0
        %2341 = vmatprep.mubr.bf16.mxu0 %v1595
        %2342 = vmatmul.mubr.bf16.gmra.mrb[0].mxu0 %v1594
        %v2343 = vpop.f32.mrb[0].mxu0
        %v2344 = vadd.f32 0.0, %v2343
        %v2345 = vpop.f32.mrb[0].mxu0
        %v2346 = vpop.f32.mrb[0].mxu0
        %v2347 = vadd.f32 0.0, %v2346
        %v2348 = vpop.f32.mrb[0].mxu0
        %2349 = vmatprep.mubr.bf16.mxu0 %v1604
        %2350 = vmatmul.mubr.bf16.gmra.mrb[0].mxu0 %v1603
        %v2351 = vpop.f32.mrb[0].mxu0
        %v2352 = vadd.f32 0.0, %v2351
        %v2353 = vpop.f32.mrb[0].mxu0
        %v2354 = vpop.f32.mrb[0].mxu0
        %v2355 = vadd.f32 0.0, %v2354
        %v2356 = vpop.f32.mrb[0].mxu0
        %2357 = vmatprep.mubr.bf16.mxu0 %v1613
        %2358 = vmatmul.mubr.bf16.gmra.mrb[0].mxu0 %v1612
        %v2359 = vpop.f32.mrb[0].mxu0
        %v2360 = vadd.f32 0.0, %v2359
        %v2361 = vpop.f32.mrb[0].mxu0
        %v2362 = vpop.f32.mrb[0].mxu0
        %v2363 = vadd.f32 0.0, %v2362
        %v2364 = vpop.f32.mrb[0].mxu0
        %2365 = vmatprep.mubr.bf16.mxu0 %v1622
        %2366 = vmatmul.mubr.bf16.gmra.mrb[0].mxu0 %v1621
        %v2367 = vpop.f32.mrb[0].mxu0
        %v2368 = vadd.f32 0.0, %v2367
        %v2369 = vpop.f32.mrb[0].mxu0
        %v2370 = vpop.f32.mrb[0].mxu0
        %v2371 = vadd.f32 0.0, %v2370
        %v2372 = vpop.f32.mrb[0].mxu0
        %2373 = vmatprep.mubr.bf16.mxu0 %v1631
        %2374 = vmatmul.mubr.bf16.gmra.mrb[0].mxu0 %v1630
        %v2375 = vpop.f32.mrb[0].mxu0
        %v2376 = vadd.f32 0.0, %v2375
        %v2377 = vpop.f32.mrb[0].mxu0
        %v2378 = vpop.f32.mrb[0].mxu0
        %v2379 = vadd.f32 0.0, %v2378
        %v2380 = vpop.f32.mrb[0].mxu0
        %2381 = vmatprep.mubr.bf16.mxu0 %v1640
        %2382 = vmatmul.mubr.bf16.gmra.mrb[0].mxu0 %v1639
        %v2383 = vpop.f32.mrb[0].mxu0
        %v2384 = vadd.f32 0.0, %v2383
        %v2385 = vpop.f32.mrb[0].mxu0
        %v2386 = vpop.f32.mrb[0].mxu0
        %v2387 = vadd.f32 0.0, %v2386
        %v2388 = vpop.f32.mrb[0].mxu0
        %2389 = vmatprep.mubr.bf16.mxu0 %v1649
        %2390 = vmatmul.mubr.bf16.gmra.mrb[0].mxu0 %v1648
        %v2391 = vpop.f32.mrb[0].mxu0
        %v2392 = vadd.f32 0.0, %v2391
        %v2393 = vpop.f32.mrb[0].mxu0
        %v2394 = vpop.f32.mrb[0].mxu0
        %v2395 = vadd.f32 0.0, %v2394
        %v2396 = vpop.f32.mrb[0].mxu0
        %2397 = vmatprep.mubr.bf16.mxu0 %v1658
        %2398 = vmatmul.mubr.bf16.gmra.mrb[0].mxu0 %v1657
        %v2399 = vpop.f32.mrb[0].mxu0
        %v2400 = vadd.f32 0.0, %v2399
        %v2401 = vpop.f32.mrb[0].mxu0
        %v2402 = vpop.f32.mrb[0].mxu0
        %v2403 = vadd.f32 0.0, %v2402
        %v2404 = vpop.f32.mrb[0].mxu0
        %2405 = vmatprep.mubr.bf16.mxu0 %v1667
        %2406 = vmatmul.mubr.bf16.gmra.mrb[0].mxu0 %v1666
        %v2407 = vpop.f32.mrb[0].mxu0
        %v2408 = vadd.f32 0.0, %v2407
        %v2409 = vpop.f32.mrb[0].mxu0
        %v2410 = vpop.f32.mrb[0].mxu0
        %v2411 = vadd.f32 0.0, %v2410
        %v2412 = vpop.f32.mrb[0].mxu0
        %2413 = vmatprep.mubr.bf16.mxu0 %v1676
        %2414 = vmatmul.mubr.bf16.gmra.mrb[0].mxu0 %v1675
        %v2415 = vpop.f32.mrb[0].mxu0
        %v2416 = vadd.f32 0.0, %v2415
        %v2417 = vpop.f32.mrb[0].mxu0
        %v2418 = vpop.f32.mrb[0].mxu0
        %v2419 = vadd.f32 0.0, %v2418
        %v2420 = vpop.f32.mrb[0].mxu0
        %2421 = vmatprep.mubr.bf16.mxu0 %v1685
        %2422 = vmatmul.mubr.bf16.gmra.mrb[0].mxu0 %v1684
        %v2423 = vpop.f32.mrb[0].mxu0
        %v2424 = vadd.f32 0.0, %v2423
        %v2425 = vpop.f32.mrb[0].mxu0
        %v2426 = vpop.f32.mrb[0].mxu0
        %v2427 = vadd.f32 0.0, %v2426
        %v2428 = vpop.f32.mrb[0].mxu0
        %2429 = vdwg.mxu0
        %2430 = vmatprep.subr.bf16.mxu0 0
        %2431 = vmatpush1.bf16.msra.mxu0 %v2141
        %2432 = vmatprep.subr.bf16.mxu0 0
        %2433 = vmatpush1.bf16.msra.mxu0 %v2142
        %2434 = vmatprep.subr.bf16.mxu0 0
        %2435 = vmatpush1.bf16.msra.mxu0 %v2143
        %2436 = vmatprep.subr.bf16.mxu0 0
        %2437 = vmatpush1.bf16.msra.mxu0 %v2144
        %2438 = vmatprep.subr.bf16.mxu0 0
        %2439 = vmatpush1.bf16.msra.mxu0 %v2145
        %2440 = vmatprep.subr.bf16.mxu0 0
        %2441 = vmatpush1.bf16.msra.mxu0 %v2146
        %2442 = vmatprep.subr.bf16.mxu0 0
        %2443 = vmatpush1.bf16.msra.mxu0 %v2147
        %2444 = vmatprep.subr.bf16.mxu0 0
        %2445 = vmatpush1.bf16.msra.mxu0 %v2148
        %2446 = vmatprep.subr.bf16.mxu0 0
        %2447 = vmatpush1.bf16.msra.mxu0 %v2149
        %2448 = vmatprep.subr.bf16.mxu0 0
        %2449 = vmatpush1.bf16.msra.mxu0 %v2150
        %2450 = vmatprep.subr.bf16.mxu0 0
        %2451 = vmatpush1.bf16.msra.mxu0 %v2151
        %2452 = vmatprep.subr.bf16.mxu0 0
        %2453 = vmatpush1.bf16.msra.mxu0 %v2152
        %2454 = vmatprep.subr.bf16.mxu0 0
        %2455 = vmatpush1.bf16.msra.mxu0 %v2153
        %2456 = vmatprep.subr.bf16.mxu0 0
        %2457 = vmatpush1.bf16.msra.mxu0 %v2154
        %2458 = vmatprep.subr.bf16.mxu0 0
        %2459 = vmatpush1.bf16.msra.mxu0 %v2155
        %2460 = vmatprep.subr.bf16.mxu0 0
        %2461 = vmatpush1.bf16.msra.mxu0 %v2156
        %2462 = vmatprep.mubr.bf16.mxu0 %v1552
        %2463 = vmatmul.mubr.bf16.gmra.mrb[0].mxu0 %v1551
        %v2464 = vpop.f32.mrb[0].mxu0
        %v2465 = vadd.f32 %v2304, %v2464
        %v2466 = vpop.f32.mrb[0].mxu0
        %v2467 = vpop.f32.mrb[0].mxu0
        %v2468 = vadd.f32 %v2307, %v2467
        %v2469 = vpop.f32.mrb[0].mxu0
        %2470 = vmatprep.mubr.bf16.mxu0 %v1561
        %2471 = vmatmul.mubr.bf16.gmra.mrb[0].mxu0 %v1560
        %v2472 = vpop.f32.mrb[0].mxu0
        %v2473 = vadd.f32 %v2312, %v2472
        %v2474 = vpop.f32.mrb[0].mxu0
        %v2475 = vpop.f32.mrb[0].mxu0
        %v2476 = vadd.f32 %v2315, %v2475
        %v2477 = vpop.f32.mrb[0].mxu0
        %2478 = vmatprep.mubr.bf16.mxu0 %v1570
        %2479 = vmatmul.mubr.bf16.gmra.mrb[0].mxu0 %v1569
        %v2480 = vpop.f32.mrb[0].mxu0
        %v2481 = vadd.f32 %v2320, %v2480
        %v2482 = vpop.f32.mrb[0].mxu0
        %v2483 = vpop.f32.mrb[0].mxu0
        %v2484 = vadd.f32 %v2323, %v2483
        %v2485 = vpop.f32.mrb[0].mxu0
        %2486 = vmatprep.mubr.bf16.mxu0 %v1579
        %2487 = vmatmul.mubr.bf16.gmra.mrb[0].mxu0 %v1578
        %v2488 = vpop.f32.mrb[0].mxu0
        %v2489 = vadd.f32 %v2328, %v2488
        %v2490 = vpop.f32.mrb[0].mxu0
        %v2491 = vpop.f32.mrb[0].mxu0
        %v2492 = vadd.f32 %v2331, %v2491
        %v2493 = vpop.f32.mrb[0].mxu0
        %2494 = vmatprep.mubr.bf16.mxu0 %v1588
        %2495 = vmatmul.mubr.bf16.gmra.mrb[0].mxu0 %v1587
        %v2496 = vpop.f32.mrb[0].mxu0
        %v2497 = vadd.f32 %v2336, %v2496
        %v2498 = vpop.f32.mrb[0].mxu0
        %v2499 = vpop.f32.mrb[0].mxu0
        %v2500 = vadd.f32 %v2339, %v2499
        %v2501 = vpop.f32.mrb[0].mxu0
        %2502 = vmatprep.mubr.bf16.mxu0 %v1597
        %2503 = vmatmul.mubr.bf16.gmra.mrb[0].mxu0 %v1596
        %v2504 = vpop.f32.mrb[0].mxu0
        %v2505 = vadd.f32 %v2344, %v2504
        %v2506 = vpop.f32.mrb[0].mxu0
        %v2507 = vpop.f32.mrb[0].mxu0
        %v2508 = vadd.f32 %v2347, %v2507
        %v2509 = vpop.f32.mrb[0].mxu0
        %2510 = vmatprep.mubr.bf16.mxu0 %v1606
        %2511 = vmatmul.mubr.bf16.gmra.mrb[0].mxu0 %v1605
        %v2512 = vpop.f32.mrb[0].mxu0
        %v2513 = vadd.f32 %v2352, %v2512
        %v2514 = vpop.f32.mrb[0].mxu0
        %v2515 = vpop.f32.mrb[0].mxu0
        %v2516 = vadd.f32 %v2355, %v2515
        %v2517 = vpop.f32.mrb[0].mxu0
        %2518 = vmatprep.mubr.bf16.mxu0 %v1615
        %2519 = vmatmul.mubr.bf16.gmra.mrb[0].mxu0 %v1614
        %v2520 = vpop.f32.mrb[0].mxu0
        %v2521 = vadd.f32 %v2360, %v2520
        %v2522 = vpop.f32.mrb[0].mxu0
        %v2523 = vpop.f32.mrb[0].mxu0
        %v2524 = vadd.f32 %v2363, %v2523
        %v2525 = vpop.f32.mrb[0].mxu0
        %2526 = vmatprep.mubr.bf16.mxu0 %v1624
        %2527 = vmatmul.mubr.bf16.gmra.mrb[0].mxu0 %v1623
        %v2528 = vpop.f32.mrb[0].mxu0
        %v2529 = vadd.f32 %v2368, %v2528
        %v2530 = vpop.f32.mrb[0].mxu0
        %v2531 = vpop.f32.mrb[0].mxu0
        %v2532 = vadd.f32 %v2371, %v2531
        %v2533 = vpop.f32.mrb[0].mxu0
        %2534 = vmatprep.mubr.bf16.mxu0 %v1633
        %2535 = vmatmul.mubr.bf16.gmra.mrb[0].mxu0 %v1632
        %v2536 = vpop.f32.mrb[0].mxu0
        %v2537 = vadd.f32 %v2376, %v2536
        %v2538 = vpop.f32.mrb[0].mxu0
        %v2539 = vpop.f32.mrb[0].mxu0
        %v2540 = vadd.f32 %v2379, %v2539
        %v2541 = vpop.f32.mrb[0].mxu0
        %2542 = vmatprep.mubr.bf16.mxu0 %v1642
        %2543 = vmatmul.mubr.bf16.gmra.mrb[0].mxu0 %v1641
        %v2544 = vpop.f32.mrb[0].mxu0
        %v2545 = vadd.f32 %v2384, %v2544
        %v2546 = vpop.f32.mrb[0].mxu0
        %v2547 = vpop.f32.mrb[0].mxu0
        %v2548 = vadd.f32 %v2387, %v2547
        %v2549 = vpop.f32.mrb[0].mxu0
        %2550 = vmatprep.mubr.bf16.mxu0 %v1651
        %2551 = vmatmul.mubr.bf16.gmra.mrb[0].mxu0 %v1650
        %v2552 = vpop.f32.mrb[0].mxu0
        %v2553 = vadd.f32 %v2392, %v2552
        %v2554 = vpop.f32.mrb[0].mxu0
        %v2555 = vpop.f32.mrb[0].mxu0
        %v2556 = vadd.f32 %v2395, %v2555
        %v2557 = vpop.f32.mrb[0].mxu0
        %2558 = vmatprep.mubr.bf16.mxu0 %v1660
        %2559 = vmatmul.mubr.bf16.gmra.mrb[0].mxu0 %v1659
        %v2560 = vpop.f32.mrb[0].mxu0
        %v2561 = vadd.f32 %v2400, %v2560
        %v2562 = vpop.f32.mrb[0].mxu0
        %v2563 = vpop.f32.mrb[0].mxu0
        %v2564 = vadd.f32 %v2403, %v2563
        %v2565 = vpop.f32.mrb[0].mxu0
        %2566 = vmatprep.mubr.bf16.mxu0 %v1669
        %2567 = vmatmul.mubr.bf16.gmra.mrb[0].mxu0 %v1668
        %v2568 = vpop.f32.mrb[0].mxu0
        %v2569 = vadd.f32 %v2408, %v2568
        %v2570 = vpop.f32.mrb[0].mxu0
        %v2571 = vpop.f32.mrb[0].mxu0
        %v2572 = vadd.f32 %v2411, %v2571
        %v2573 = vpop.f32.mrb[0].mxu0
        %2574 = vmatprep.mubr.bf16.mxu0 %v1678
        %2575 = vmatmul.mubr.bf16.gmra.mrb[0].mxu0 %v1677
        %v2576 = vpop.f32.mrb[0].mxu0
        %v2577 = vadd.f32 %v2416, %v2576
        %v2578 = vpop.f32.mrb[0].mxu0
        %v2579 = vpop.f32.mrb[0].mxu0
        %v2580 = vadd.f32 %v2419, %v2579
        %v2581 = vpop.f32.mrb[0].mxu0
        %2582 = vmatprep.mubr.bf16.mxu0 %v1687
        %2583 = vmatmul.mubr.bf16.gmra.mrb[0].mxu0 %v1686
        %v2584 = vpop.f32.mrb[0].mxu0
        %v2585 = vadd.f32 %v2424, %v2584
        %v2586 = vpop.f32.mrb[0].mxu0
        %v2587 = vpop.f32.mrb[0].mxu0
        %v2588 = vadd.f32 %v2427, %v2587
        %v2589 = vpop.f32.mrb[0].mxu0
        %2590 = vdwg.mxu0
        %2591 = vmatprep.subr.bf16.mxu0 0
        %2592 = vmatpush1.bf16.msra.mxu0 %v2157
        %2593 = vmatprep.subr.bf16.mxu0 0
        %2594 = vmatpush1.bf16.msra.mxu0 %v2158
        %2595 = vmatprep.subr.bf16.mxu0 0
        %2596 = vmatpush1.bf16.msra.mxu0 %v2159
        %2597 = vmatprep.subr.bf16.mxu0 0
        %2598 = vmatpush1.bf16.msra.mxu0 %v2160
        %2599 = vmatprep.subr.bf16.mxu0 0
        %2600 = vmatpush1.bf16.msra.mxu0 %v2161
        %2601 = vmatprep.subr.bf16.mxu0 0
        %2602 = vmatpush1.bf16.msra.mxu0 %v2162
        %2603 = vmatprep.subr.bf16.mxu0 0
        %2604 = vmatpush1.bf16.msra.mxu0 %v2163
        %2605 = vmatprep.subr.bf16.mxu0 0
        %2606 = vmatpush1.bf16.msra.mxu0 %v2164
        %2607 = vmatprep.subr.bf16.mxu0 0
        %2608 = vmatpush1.bf16.msra.mxu0 %v2165
        %2609 = vmatprep.subr.bf16.mxu0 0
        %2610 = vmatpush1.bf16.msra.mxu0 %v2166
        %2611 = vmatprep.subr.bf16.mxu0 0
        %2612 = vmatpush1.bf16.msra.mxu0 %v2167
        %2613 = vmatprep.subr.bf16.mxu0 0
        %2614 = vmatpush1.bf16.msra.mxu0 %v2168
        %2615 = vmatprep.subr.bf16.mxu0 0
        %2616 = vmatpush1.bf16.msra.mxu0 %v2169
        %2617 = vmatprep.subr.bf16.mxu0 0
        %2618 = vmatpush1.bf16.msra.mxu0 %v2170
        %2619 = vmatprep.subr.bf16.mxu0 0
        %2620 = vmatpush1.bf16.msra.mxu0 %v2171
        %2621 = vmatprep.subr.bf16.mxu0 0
        %2622 = vmatpush1.bf16.msra.mxu0 %v2172
        %2623 = vmatprep.mubr.bf16.mxu0 %v1554
        %2624 = vmatmul.mubr.bf16.gmra.mrb[0].mxu0 %v1553
        %v2625 = vpop.f32.mrb[0].mxu0
        %v2626 = vadd.f32 %v2465, %v2625
        %v2627 = vpop.f32.mrb[0].mxu0
        %v2628 = vpop.f32.mrb[0].mxu0
        %v2629 = vadd.f32 %v2468, %v2628
        %v2630 = vpop.f32.mrb[0].mxu0
        %2631 = vmatprep.mubr.bf16.mxu0 %v1563
        %2632 = vmatmul.mubr.bf16.gmra.mrb[0].mxu0 %v1562
        %v2633 = vpop.f32.mrb[0].mxu0
        %v2634 = vadd.f32 %v2473, %v2633
        %v2635 = vpop.f32.mrb[0].mxu0
        %v2636 = vpop.f32.mrb[0].mxu0
        %v2637 = vadd.f32 %v2476, %v2636
        %v2638 = vpop.f32.mrb[0].mxu0
        %2639 = vmatprep.mubr.bf16.mxu0 %v1572
        %2640 = vmatmul.mubr.bf16.gmra.mrb[0].mxu0 %v1571
        %v2641 = vpop.f32.mrb[0].mxu0
        %v2642 = vadd.f32 %v2481, %v2641
        %v2643 = vpop.f32.mrb[0].mxu0
        %v2644 = vpop.f32.mrb[0].mxu0
        %v2645 = vadd.f32 %v2484, %v2644
        %v2646 = vpop.f32.mrb[0].mxu0
        %2647 = vmatprep.mubr.bf16.mxu0 %v1581
        %2648 = vmatmul.mubr.bf16.gmra.mrb[0].mxu0 %v1580
        %v2649 = vpop.f32.mrb[0].mxu0
        %v2650 = vadd.f32 %v2489, %v2649
        %v2651 = vpop.f32.mrb[0].mxu0
        %v2652 = vpop.f32.mrb[0].mxu0
        %v2653 = vadd.f32 %v2492, %v2652
        %v2654 = vpop.f32.mrb[0].mxu0
        %2655 = vmatprep.mubr.bf16.mxu0 %v1590
        %2656 = vmatmul.mubr.bf16.gmra.mrb[0].mxu0 %v1589
        %v2657 = vpop.f32.mrb[0].mxu0
        %v2658 = vadd.f32 %v2497, %v2657
        %v2659 = vpop.f32.mrb[0].mxu0
        %v2660 = vpop.f32.mrb[0].mxu0
        %v2661 = vadd.f32 %v2500, %v2660
        %v2662 = vpop.f32.mrb[0].mxu0
        %2663 = vmatprep.mubr.bf16.mxu0 %v1599
        %2664 = vmatmul.mubr.bf16.gmra.mrb[0].mxu0 %v1598
        %v2665 = vpop.f32.mrb[0].mxu0
        %v2666 = vadd.f32 %v2505, %v2665
        %v2667 = vpop.f32.mrb[0].mxu0
        %v2668 = vpop.f32.mrb[0].mxu0
        %v2669 = vadd.f32 %v2508, %v2668
        %v2670 = vpop.f32.mrb[0].mxu0
        %2671 = vmatprep.mubr.bf16.mxu0 %v1608
        %2672 = vmatmul.mubr.bf16.gmra.mrb[0].mxu0 %v1607
        %v2673 = vpop.f32.mrb[0].mxu0
        %v2674 = vadd.f32 %v2513, %v2673
        %v2675 = vpop.f32.mrb[0].mxu0
        %v2676 = vpop.f32.mrb[0].mxu0
        %v2677 = vadd.f32 %v2516, %v2676
        %v2678 = vpop.f32.mrb[0].mxu0
        %2679 = vmatprep.mubr.bf16.mxu0 %v1617
        %2680 = vmatmul.mubr.bf16.gmra.mrb[0].mxu0 %v1616
        %v2681 = vpop.f32.mrb[0].mxu0
        %v2682 = vadd.f32 %v2521, %v2681
        %v2683 = vpop.f32.mrb[0].mxu0
        %v2684 = vpop.f32.mrb[0].mxu0
        %v2685 = vadd.f32 %v2524, %v2684
        %v2686 = vpop.f32.mrb[0].mxu0
        %2687 = vmatprep.mubr.bf16.mxu0 %v1626
        %2688 = vmatmul.mubr.bf16.gmra.mrb[0].mxu0 %v1625
        %v2689 = vpop.f32.mrb[0].mxu0
        %v2690 = vadd.f32 %v2529, %v2689
        %v2691 = vpop.f32.mrb[0].mxu0
        %v2692 = vpop.f32.mrb[0].mxu0
        %v2693 = vadd.f32 %v2532, %v2692
        %v2694 = vpop.f32.mrb[0].mxu0
        %2695 = vmatprep.mubr.bf16.mxu0 %v1635
        %2696 = vmatmul.mubr.bf16.gmra.mrb[0].mxu0 %v1634
        %v2697 = vpop.f32.mrb[0].mxu0
        %v2698 = vadd.f32 %v2537, %v2697
        %v2699 = vpop.f32.mrb[0].mxu0
        %v2700 = vpop.f32.mrb[0].mxu0
        %v2701 = vadd.f32 %v2540, %v2700
        %v2702 = vpop.f32.mrb[0].mxu0
        %2703 = vmatprep.mubr.bf16.mxu0 %v1644
        %2704 = vmatmul.mubr.bf16.gmra.mrb[0].mxu0 %v1643
        %v2705 = vpop.f32.mrb[0].mxu0
        %v2706 = vadd.f32 %v2545, %v2705
        %v2707 = vpop.f32.mrb[0].mxu0
        %v2708 = vpop.f32.mrb[0].mxu0
        %v2709 = vadd.f32 %v2548, %v2708
        %v2710 = vpop.f32.mrb[0].mxu0
        %2711 = vmatprep.mubr.bf16.mxu0 %v1653
        %2712 = vmatmul.mubr.bf16.gmra.mrb[0].mxu0 %v1652
        %v2713 = vpop.f32.mrb[0].mxu0
        %v2714 = vadd.f32 %v2553, %v2713
        %v2715 = vpop.f32.mrb[0].mxu0
        %v2716 = vpop.f32.mrb[0].mxu0
        %v2717 = vadd.f32 %v2556, %v2716
        %v2718 = vpop.f32.mrb[0].mxu0
        %2719 = vmatprep.mubr.bf16.mxu0 %v1662
        %2720 = vmatmul.mubr.bf16.gmra.mrb[0].mxu0 %v1661
        %v2721 = vpop.f32.mrb[0].mxu0
        %v2722 = vadd.f32 %v2561, %v2721
        %v2723 = vpop.f32.mrb[0].mxu0
        %v2724 = vpop.f32.mrb[0].mxu0
        %v2725 = vadd.f32 %v2564, %v2724
        %v2726 = vpop.f32.mrb[0].mxu0
        %2727 = vmatprep.mubr.bf16.mxu0 %v1671
        %2728 = vmatmul.mubr.bf16.gmra.mrb[0].mxu0 %v1670
        %v2729 = vpop.f32.mrb[0].mxu0
        %v2730 = vadd.f32 %v2569, %v2729
        %v2731 = vpop.f32.mrb[0].mxu0
        %v2732 = vpop.f32.mrb[0].mxu0
        %v2733 = vadd.f32 %v2572, %v2732
        %v2734 = vpop.f32.mrb[0].mxu0
        %2735 = vmatprep.mubr.bf16.mxu0 %v1680
        %2736 = vmatmul.mubr.bf16.gmra.mrb[0].mxu0 %v1679
        %v2737 = vpop.f32.mrb[0].mxu0
        %v2738 = vadd.f32 %v2577, %v2737
        %v2739 = vpop.f32.mrb[0].mxu0
        %v2740 = vpop.f32.mrb[0].mxu0
        %v2741 = vadd.f32 %v2580, %v2740
        %v2742 = vpop.f32.mrb[0].mxu0
        %2743 = vmatprep.mubr.bf16.mxu0 %v1689
        %2744 = vmatmul.mubr.bf16.gmra.mrb[0].mxu0 %v1688
        %v2745 = vpop.f32.mrb[0].mxu0
        %v2746 = vadd.f32 %v2585, %v2745
        %v2747 = vpop.f32.mrb[0].mxu0
        %v2748 = vpop.f32.mrb[0].mxu0
        %v2749 = vadd.f32 %v2588, %v2748
        %v2750 = vpop.f32.mrb[0].mxu0
        %2751 = vdwg.mxu0
        %2752 = vmatprep.subr.bf16.mxu0 0
        %2753 = vmatpush1.bf16.msra.mxu0 %v2173
        %2754 = vmatprep.subr.bf16.mxu0 0
        %2755 = vmatpush1.bf16.msra.mxu0 %v2174
        %2756 = vmatprep.subr.bf16.mxu0 0
        %2757 = vmatpush1.bf16.msra.mxu0 %v2175
        %2758 = vmatprep.subr.bf16.mxu0 0
        %2759 = vmatpush1.bf16.msra.mxu0 %v2176
        %2760 = vmatprep.subr.bf16.mxu0 0
        %2761 = vmatpush1.bf16.msra.mxu0 %v2177
        %2762 = vmatprep.subr.bf16.mxu0 0
        %2763 = vmatpush1.bf16.msra.mxu0 %v2178
        %2764 = vmatprep.subr.bf16.mxu0 0
        %2765 = vmatpush1.bf16.msra.mxu0 %v2179
        %2766 = vmatprep.subr.bf16.mxu0 0
        %2767 = vmatpush1.bf16.msra.mxu0 %v2180
        %2768 = vmatprep.subr.bf16.mxu0 0
        %2769 = vmatpush1.bf16.msra.mxu0 %v2181
        %2770 = vmatprep.subr.bf16.mxu0 0
        %2771 = vmatpush1.bf16.msra.mxu0 %v2182
        %2772 = vmatprep.subr.bf16.mxu0 0
        %2773 = vmatpush1.bf16.msra.mxu0 %v2183
        %2774 = vmatprep.subr.bf16.mxu0 0
        %2775 = vmatpush1.bf16.msra.mxu0 %v2184
        %2776 = vmatprep.subr.bf16.mxu0 0
        %2777 = vmatpush1.bf16.msra.mxu0 %v2185
        %2778 = vmatprep.subr.bf16.mxu0 0
        %2779 = vmatpush1.bf16.msra.mxu0 %v2186
        %2780 = vmatprep.subr.bf16.mxu0 0
        %2781 = vmatpush1.bf16.msra.mxu0 %v2187
        %2782 = vmatprep.subr.bf16.mxu0 0
        %2783 = vmatpush1.bf16.msra.mxu0 %v2188
        %2784 = vmatprep.mubr.bf16.mxu0 %v1556
        %2785 = vmatmul.mubr.bf16.gmra.mrb[0].mxu0 %v1555
        %v2786 = vpop.f32.mrb[0].mxu0
        %v2787 = vadd.f32 %v2626, %v2786
        %v2788 = vpop.f32.mrb[0].mxu0
        %v2789 = vpop.f32.mrb[0].mxu0
        %v2790 = vadd.f32 %v2629, %v2789
        %v2791 = vpop.f32.mrb[0].mxu0
        %2792 = vmatprep.mubr.bf16.mxu0 %v1565
        %2793 = vmatmul.mubr.bf16.gmra.mrb[0].mxu0 %v1564
        %v2794 = vpop.f32.mrb[0].mxu0
        %v2795 = vadd.f32 %v2634, %v2794
        %v2796 = vpop.f32.mrb[0].mxu0
        %v2797 = vpop.f32.mrb[0].mxu0
        %v2798 = vadd.f32 %v2637, %v2797
        %v2799 = vpop.f32.mrb[0].mxu0
        %2800 = vmatprep.mubr.bf16.mxu0 %v1574
        %2801 = vmatmul.mubr.bf16.gmra.mrb[0].mxu0 %v1573
        %v2802 = vpop.f32.mrb[0].mxu0
        %v2803 = vadd.f32 %v2642, %v2802
        %v2804 = vpop.f32.mrb[0].mxu0
        %v2805 = vpop.f32.mrb[0].mxu0
        %v2806 = vadd.f32 %v2645, %v2805
        %v2807 = vpop.f32.mrb[0].mxu0
        %2808 = vmatprep.mubr.bf16.mxu0 %v1583
        %2809 = vmatmul.mubr.bf16.gmra.mrb[0].mxu0 %v1582
        %v2810 = vpop.f32.mrb[0].mxu0
        %v2811 = vadd.f32 %v2650, %v2810
        %v2812 = vpop.f32.mrb[0].mxu0
        %v2813 = vpop.f32.mrb[0].mxu0
        %v2814 = vadd.f32 %v2653, %v2813
        %v2815 = vpop.f32.mrb[0].mxu0
        %2816 = vmatprep.mubr.bf16.mxu0 %v1592
        %2817 = vmatmul.mubr.bf16.gmra.mrb[0].mxu0 %v1591
        %v2818 = vpop.f32.mrb[0].mxu0
        %v2819 = vadd.f32 %v2658, %v2818
        %v2820 = vpop.f32.mrb[0].mxu0
        %v2821 = vpop.f32.mrb[0].mxu0
        %v2822 = vadd.f32 %v2661, %v2821
        %v2823 = vpop.f32.mrb[0].mxu0
        %2824 = vmatprep.mubr.bf16.mxu0 %v1601
        %2825 = vmatmul.mubr.bf16.gmra.mrb[0].mxu0 %v1600
        %v2826 = vpop.f32.mrb[0].mxu0
        %v2827 = vadd.f32 %v2666, %v2826
        %v2828 = vpop.f32.mrb[0].mxu0
        %v2829 = vpop.f32.mrb[0].mxu0
        %v2830 = vadd.f32 %v2669, %v2829
        %v2831 = vpop.f32.mrb[0].mxu0
        %2832 = vmatprep.mubr.bf16.mxu0 %v1610
        %2833 = vmatmul.mubr.bf16.gmra.mrb[0].mxu0 %v1609
        %v2834 = vpop.f32.mrb[0].mxu0
        %v2835 = vadd.f32 %v2674, %v2834
        %v2836 = vpop.f32.mrb[0].mxu0
        %v2837 = vpop.f32.mrb[0].mxu0
        %v2838 = vadd.f32 %v2677, %v2837
        %v2839 = vpop.f32.mrb[0].mxu0
        %2840 = vmatprep.mubr.bf16.mxu0 %v1619
        %2841 = vmatmul.mubr.bf16.gmra.mrb[0].mxu0 %v1618
        %v2842 = vpop.f32.mrb[0].mxu0
        %v2843 = vadd.f32 %v2682, %v2842
        %v2844 = vpop.f32.mrb[0].mxu0
        %v2845 = vpop.f32.mrb[0].mxu0
        %v2846 = vadd.f32 %v2685, %v2845
        %v2847 = vpop.f32.mrb[0].mxu0
        %2848 = vmatprep.mubr.bf16.mxu0 %v1628
        %2849 = vmatmul.mubr.bf16.gmra.mrb[0].mxu0 %v1627
        %v2850 = vpop.f32.mrb[0].mxu0
        %v2851 = vadd.f32 %v2690, %v2850
        %v2852 = vpop.f32.mrb[0].mxu0
        %v2853 = vpop.f32.mrb[0].mxu0
        %v2854 = vadd.f32 %v2693, %v2853
        %v2855 = vpop.f32.mrb[0].mxu0
        %2856 = vmatprep.mubr.bf16.mxu0 %v1637
        %2857 = vmatmul.mubr.bf16.gmra.mrb[0].mxu0 %v1636
        %v2858 = vpop.f32.mrb[0].mxu0
        %v2859 = vadd.f32 %v2698, %v2858
        %v2860 = vpop.f32.mrb[0].mxu0
        %v2861 = vpop.f32.mrb[0].mxu0
        %v2862 = vadd.f32 %v2701, %v2861
        %v2863 = vpop.f32.mrb[0].mxu0
        %2864 = vmatprep.mubr.bf16.mxu0 %v1646
        %2865 = vmatmul.mubr.bf16.gmra.mrb[0].mxu0 %v1645
        %v2866 = vpop.f32.mrb[0].mxu0
        %v2867 = vadd.f32 %v2706, %v2866
        %v2868 = vpop.f32.mrb[0].mxu0
        %v2869 = vpop.f32.mrb[0].mxu0
        %v2870 = vadd.f32 %v2709, %v2869
        %v2871 = vpop.f32.mrb[0].mxu0
        %2872 = vmatprep.mubr.bf16.mxu0 %v1655
        %2873 = vmatmul.mubr.bf16.gmra.mrb[0].mxu0 %v1654
        %v2874 = vpop.f32.mrb[0].mxu0
        %v2875 = vadd.f32 %v2714, %v2874
        %v2876 = vpop.f32.mrb[0].mxu0
        %v2877 = vpop.f32.mrb[0].mxu0
        %v2878 = vadd.f32 %v2717, %v2877
        %v2879 = vpop.f32.mrb[0].mxu0
        %2880 = vmatprep.mubr.bf16.mxu0 %v1664
        %2881 = vmatmul.mubr.bf16.gmra.mrb[0].mxu0 %v1663
        %v2882 = vpop.f32.mrb[0].mxu0
        %v2883 = vadd.f32 %v2722, %v2882
        %v2884 = vpop.f32.mrb[0].mxu0
        %v2885 = vpop.f32.mrb[0].mxu0
        %v2886 = vadd.f32 %v2725, %v2885
        %v2887 = vpop.f32.mrb[0].mxu0
        %2888 = vmatprep.mubr.bf16.mxu0 %v1673
        %2889 = vmatmul.mubr.bf16.gmra.mrb[0].mxu0 %v1672
        %v2890 = vpop.f32.mrb[0].mxu0
        %v2891 = vadd.f32 %v2730, %v2890
        %v2892 = vpop.f32.mrb[0].mxu0
        %v2893 = vpop.f32.mrb[0].mxu0
        %v2894 = vadd.f32 %v2733, %v2893
        %v2895 = vpop.f32.mrb[0].mxu0
        %2896 = vmatprep.mubr.bf16.mxu0 %v1682
        %2897 = vmatmul.mubr.bf16.gmra.mrb[0].mxu0 %v1681
        %v2898 = vpop.f32.mrb[0].mxu0
        %v2899 = vadd.f32 %v2738, %v2898
        %v2900 = vpop.f32.mrb[0].mxu0
        %v2901 = vpop.f32.mrb[0].mxu0
        %v2902 = vadd.f32 %v2741, %v2901
        %v2903 = vpop.f32.mrb[0].mxu0
        %2904 = vmatprep.mubr.bf16.mxu0 %v1691
        %2905 = vmatmul.mubr.bf16.gmra.mrb[0].mxu0 %v1690
        %v2906 = vpop.f32.mrb[0].mxu0
        %v2907 = vadd.f32 %v2746, %v2906
        %v2908 = vpop.f32.mrb[0].mxu0
        %v2909 = vpop.f32.mrb[0].mxu0
        %v2910 = vadd.f32 %v2749, %v2909
        %v2911 = vpop.f32.mrb[0].mxu0
        %2912 = vdwg.mxu0
        %2913 = vmatprep.subr.bf16.mxu0 0
        %2914 = vmatpush1.bf16.msra.mxu0 %v2189
        %2915 = vmatprep.subr.bf16.mxu0 0
        %2916 = vmatpush1.bf16.msra.mxu0 %v2190
        %2917 = vmatprep.subr.bf16.mxu0 0
        %2918 = vmatpush1.bf16.msra.mxu0 %v2191
        %2919 = vmatprep.subr.bf16.mxu0 0
        %2920 = vmatpush1.bf16.msra.mxu0 %v2192
        %2921 = vmatprep.subr.bf16.mxu0 0
        %2922 = vmatpush1.bf16.msra.mxu0 %v2193
        %2923 = vmatprep.subr.bf16.mxu0 0
        %2924 = vmatpush1.bf16.msra.mxu0 %v2194
        %2925 = vmatprep.subr.bf16.mxu0 0
        %2926 = vmatpush1.bf16.msra.mxu0 %v2195
        %2927 = vmatprep.subr.bf16.mxu0 0
        %2928 = vmatpush1.bf16.msra.mxu0 %v2196
        %2929 = vmatprep.subr.bf16.mxu0 0
        %2930 = vmatpush1.bf16.msra.mxu0 0
        %2931 = vmatprep.subr.bf16.mxu0 0
        %2932 = vmatpush1.bf16.msra.mxu0 0
        %2933 = vmatprep.subr.bf16.mxu0 0
        %2934 = vmatpush1.bf16.msra.mxu0 0
        %2935 = vmatprep.subr.bf16.mxu0 0
        %2936 = vmatpush1.bf16.msra.mxu0 0
        %2937 = vmatprep.subr.bf16.mxu0 0
        %2938 = vmatpush1.bf16.msra.mxu0 0
        %2939 = vmatprep.subr.bf16.mxu0 0
        %2940 = vmatpush1.bf16.msra.mxu0 0
        %2941 = vmatprep.subr.bf16.mxu0 0
        %2942 = vmatpush1.bf16.msra.mxu0 0
        %2943 = vmatprep.subr.bf16.mxu0 0
        %2944 = vmatpush1.bf16.msra.mxu0 0
        %2945 = vmatprep.mubr.bf16.mxu0 0
        %2946 = vmatmul.mubr.bf16.gmra.mrb[0].mxu0 %v1557
        %v2947 = vpop.f32.mrb[0].mxu0
        %v2948 = vadd.f32 %v2787, %v2947
        %v2949 = vpop.f32.mrb[0].mxu0
        %v2950 = vpop.f32.mrb[0].mxu0
        %v2951 = vadd.f32 %v2790, %v2950
        %v2952 = vpop.f32.mrb[0].mxu0
        %2953 = vmatprep.mubr.bf16.mxu0 0
        %2954 = vmatmul.mubr.bf16.gmra.mrb[0].mxu0 %v1566
        %v2955 = vpop.f32.mrb[0].mxu0
        %v2956 = vadd.f32 %v2795, %v2955
        %v2957 = vpop.f32.mrb[0].mxu0
        %v2958 = vpop.f32.mrb[0].mxu0
        %v2959 = vadd.f32 %v2798, %v2958
        %v2960 = vpop.f32.mrb[0].mxu0
        %2961 = vmatprep.mubr.bf16.mxu0 0
        %2962 = vmatmul.mubr.bf16.gmra.mrb[0].mxu0 %v1575
        %v2963 = vpop.f32.mrb[0].mxu0
        %v2964 = vadd.f32 %v2803, %v2963
        %v2965 = vpop.f32.mrb[0].mxu0
        %v2966 = vpop.f32.mrb[0].mxu0
        %v2967 = vadd.f32 %v2806, %v2966
        %v2968 = vpop.f32.mrb[0].mxu0
        %2969 = vmatprep.mubr.bf16.mxu0 0
        %2970 = vmatmul.mubr.bf16.gmra.mrb[0].mxu0 %v1584
        %v2971 = vpop.f32.mrb[0].mxu0
        %v2972 = vadd.f32 %v2811, %v2971
        %v2973 = vpop.f32.mrb[0].mxu0
        %v2974 = vpop.f32.mrb[0].mxu0
        %v2975 = vadd.f32 %v2814, %v2974
        %v2976 = vpop.f32.mrb[0].mxu0
        %2977 = vmatprep.mubr.bf16.mxu0 0
        %2978 = vmatmul.mubr.bf16.gmra.mrb[0].mxu0 %v1593
        %v2979 = vpop.f32.mrb[0].mxu0
        %v2980 = vadd.f32 %v2819, %v2979
        %v2981 = vpop.f32.mrb[0].mxu0
        %v2982 = vpop.f32.mrb[0].mxu0
        %v2983 = vadd.f32 %v2822, %v2982
        %v2984 = vpop.f32.mrb[0].mxu0
        %2985 = vmatprep.mubr.bf16.mxu0 0
        %2986 = vmatmul.mubr.bf16.gmra.mrb[0].mxu0 %v1602
        %v2987 = vpop.f32.mrb[0].mxu0
        %v2988 = vadd.f32 %v2827, %v2987
        %v2989 = vpop.f32.mrb[0].mxu0
        %v2990 = vpop.f32.mrb[0].mxu0
        %v2991 = vadd.f32 %v2830, %v2990
        %v2992 = vpop.f32.mrb[0].mxu0
        %2993 = vmatprep.mubr.bf16.mxu0 0
        %2994 = vmatmul.mubr.bf16.gmra.mrb[0].mxu0 %v1611
        %v2995 = vpop.f32.mrb[0].mxu0
        %v2996 = vadd.f32 %v2835, %v2995
        %v2997 = vpop.f32.mrb[0].mxu0
        %v2998 = vpop.f32.mrb[0].mxu0
        %v2999 = vadd.f32 %v2838, %v2998
        %v3000 = vpop.f32.mrb[0].mxu0
        %3001 = vmatprep.mubr.bf16.mxu0 0
        %3002 = vmatmul.mubr.bf16.gmra.mrb[0].mxu0 %v1620
        %v3003 = vpop.f32.mrb[0].mxu0
        %v3004 = vadd.f32 %v2843, %v3003
        %v3005 = vpop.f32.mrb[0].mxu0
        %v3006 = vpop.f32.mrb[0].mxu0
        %v3007 = vadd.f32 %v2846, %v3006
        %v3008 = vpop.f32.mrb[0].mxu0
        %3009 = vmatprep.mubr.bf16.mxu0 0
        %3010 = vmatmul.mubr.bf16.gmra.mrb[0].mxu0 %v1629
        %v3011 = vpop.f32.mrb[0].mxu0
        %v3012 = vadd.f32 %v2851, %v3011
        %v3013 = vpop.f32.mrb[0].mxu0
        %v3014 = vpop.f32.mrb[0].mxu0
        %v3015 = vadd.f32 %v2854, %v3014
        %v3016 = vpop.f32.mrb[0].mxu0
        %3017 = vmatprep.mubr.bf16.mxu0 0
        %3018 = vmatmul.mubr.bf16.gmra.mrb[0].mxu0 %v1638
        %v3019 = vpop.f32.mrb[0].mxu0
        %v3020 = vadd.f32 %v2859, %v3019
        %v3021 = vpop.f32.mrb[0].mxu0
        %v3022 = vpop.f32.mrb[0].mxu0
        %v3023 = vadd.f32 %v2862, %v3022
        %v3024 = vpop.f32.mrb[0].mxu0
        %3025 = vmatprep.mubr.bf16.mxu0 0
        %3026 = vmatmul.mubr.bf16.gmra.mrb[0].mxu0 %v1647
        %v3027 = vpop.f32.mrb[0].mxu0
        %v3028 = vadd.f32 %v2867, %v3027
        %v3029 = vpop.f32.mrb[0].mxu0
        %v3030 = vpop.f32.mrb[0].mxu0
        %v3031 = vadd.f32 %v2870, %v3030
        %v3032 = vpop.f32.mrb[0].mxu0
        %3033 = vmatprep.mubr.bf16.mxu0 0
        %3034 = vmatmul.mubr.bf16.gmra.mrb[0].mxu0 %v1656
        %v3035 = vpop.f32.mrb[0].mxu0
        %v3036 = vadd.f32 %v2875, %v3035
        %v3037 = vpop.f32.mrb[0].mxu0
        %v3038 = vpop.f32.mrb[0].mxu0
        %v3039 = vadd.f32 %v2878, %v3038
        %v3040 = vpop.f32.mrb[0].mxu0
        %3041 = vmatprep.mubr.bf16.mxu0 0
        %3042 = vmatmul.mubr.bf16.gmra.mrb[0].mxu0 %v1665
        %v3043 = vpop.f32.mrb[0].mxu0
        %v3044 = vadd.f32 %v2883, %v3043
        %v3045 = vpop.f32.mrb[0].mxu0
        %v3046 = vpop.f32.mrb[0].mxu0
        %v3047 = vadd.f32 %v2886, %v3046
        %v3048 = vpop.f32.mrb[0].mxu0
        %3049 = vmatprep.mubr.bf16.mxu0 0
        %3050 = vmatmul.mubr.bf16.gmra.mrb[0].mxu0 %v1674
        %v3051 = vpop.f32.mrb[0].mxu0
        %v3052 = vadd.f32 %v2891, %v3051
        %v3053 = vpop.f32.mrb[0].mxu0
        %v3054 = vpop.f32.mrb[0].mxu0
        %v3055 = vadd.f32 %v2894, %v3054
        %v3056 = vpop.f32.mrb[0].mxu0
        %3057 = vmatprep.mubr.bf16.mxu0 0
        %3058 = vmatmul.mubr.bf16.gmra.mrb[0].mxu0 %v1683
        %v3059 = vpop.f32.mrb[0].mxu0
        %v3060 = vadd.f32 %v2899, %v3059
        %v3061 = vpop.f32.mrb[0].mxu0
        %v3062 = vpop.f32.mrb[0].mxu0
        %v3063 = vadd.f32 %v2902, %v3062
        %v3064 = vpop.f32.mrb[0].mxu0
        %3065 = vmatprep.mubr.bf16.mxu0 0
        %3066 = vmatmul.mubr.bf16.gmra.mrb[0].mxu0 %v1692
        %v3067 = vpop.f32.mrb[0].mxu0
        %v3068 = vadd.f32 %v2907, %v3067
        %v3069 = vpop.f32.mrb[0].mxu0
        %v3070 = vpop.f32.mrb[0].mxu0
        %v3071 = vadd.f32 %v2910, %v3070
        %v3072 = vpop.f32.mrb[0].mxu0
        %3073 = vdwg.mxu0
        %3074 = vst [vmem:[%s190] sm:$0xff] %v2948
        %3075 = vst [vmem:[%s190 + $0x8] sm:$0xff] %v2951
        %3076 = vst [vmem:[%s190 + $0x10] sm:$0xff] %v2956
        %3077 = vst [vmem:[%s190 + $0x18] sm:$0xff] %v2959
        %3078 = vst [vmem:[%s190 + $0x20] sm:$0xff] %v2964
        %3079 = vst [vmem:[%s190 + $0x28] sm:$0xff] %v2967
        %3080 = vst [vmem:[%s190 + $0x30] sm:$0xff] %v2972
        %3081 = vst [vmem:[%s190 + $0x38] sm:$0xff] %v2975
        %3082 = vst [vmem:[%s190 + $0x40] sm:$0xff] %v2980
        %3083 = vst [vmem:[%s190 + $0x48] sm:$0xff] %v2983
        %3084 = vst [vmem:[%s190 + $0x50] sm:$0xff] %v2988
        %3085 = vst [vmem:[%s190 + $0x58] sm:$0xff] %v2991
        %3086 = vst [vmem:[%s190 + $0x60] sm:$0xff] %v2996
        %3087 = vst [vmem:[%s190 + $0x68] sm:$0xff] %v2999
        %3088 = vst [vmem:[%s190 + $0x70] sm:$0xff] %v3004
        %3089 = vst [vmem:[%s190 + $0x78] sm:$0xff] %v3007
        %3090 = vst [vmem:[%s190 + $0x80] sm:$0xff] %v3012
        %3091 = vst [vmem:[%s190 + $0x88] sm:$0xff] %v3015
        %3092 = vst [vmem:[%s190 + $0x90] sm:$0xff] %v3020
        %3093 = vst [vmem:[%s190 + $0x98] sm:$0xff] %v3023
        %3094 = vst [vmem:[%s190 + $0xa0] sm:$0xff] %v3028
        %3095 = vst [vmem:[%s190 + $0xa8] sm:$0xff] %v3031
        %3096 = vst [vmem:[%s190 + $0xb0] sm:$0xff] %v3036
        %3097 = vst [vmem:[%s190 + $0xb8] sm:$0xff] %v3039
        %3098 = vst [vmem:[%s190 + $0xc0] sm:$0xff] %v3044
        %3099 = vst [vmem:[%s190 + $0xc8] sm:$0xff] %v3047
        %3100 = vst [vmem:[%s190 + $0xd0] sm:$0xff] %v3052
        %3101 = vst [vmem:[%s190 + $0xd8] sm:$0xff] %v3055
        %3102 = vst [vmem:[%s190 + $0xe0] sm:$0xff] %v3060
        %3103 = vst [vmem:[%s190 + $0xe8] sm:$0xff] %v3063
        %3104 = vst [vmem:[%s190 + $0xf0] sm:$0xff] %v3068
        %3105 = vst [vmem:[%s190 + $0xf8] sm:$0xff] %v3071
        %s3106 = sand.u32 %s115, 1
        %s3107 = scalar_lea.sflag [#allocation4], %s3106
        %s3108 = sand.u32 %s115, 1
        %s3109 = smul.addr %s3108, 256
        %s3110 = scalar_lea.vmem [#allocation3], %s3109
        // Predicated region
        $region37: #{tpu_custom_call.1} parent=35 // pred_check
          %p3111 = pneg %p125
        $region38: #{tpu_custom_call.1} parent=35 // pred_check_branch
          %3113 = sbr.rel (%p3111) target = $region40
        $region39: #{tpu_custom_call.1} parent=35 // pred_region
          %s3115 = ssub.s32 4096, 4096
          %3116 = vsyncadd %s3107, %s3115
          %s3117 = smul.addr %s18, 32
          %s3118 = smul.addr %s3117, 128
          %s3119 = scalar_lea.hbm %s4, %s3118
          %s3120 = sshll.u32 %s3110, 4
          %s3121 = int_to_ptr.vmem [resolvable:$true] %s3120
          %3126 = dma.vmem_to_hbm [thread:$0]  %s3121, 4096, %s3119, %s3107, 128, 128, 8
        $region40: #{tpu_custom_call.1} parent=35 // pred_fallthru
          _
      $region36: #{tpu_custom_call.1} parent=5 // pred_fallthru
        _
      %p3127 = scmp.le.s32.totalorder 2, %s13
      // Predicated region
      $region41: #{tpu_custom_call.1} parent=5 // pred_check
        %p3128 = pneg %p3127
      $region42: #{tpu_custom_call.1} parent=5 // pred_check_branch
        %3130 = sbr.rel (%p3128) target = $region44
      $region43: #{tpu_custom_call.1} parent=5 // pred_region
        %s3131 = ssub.s32 %s13, 2
        // Predicated region
        $region45: #{tpu_custom_call.1} parent=43 // pred_check
          %p3132 = pneg %p131
        $region46: #{tpu_custom_call.1} parent=43 // pred_check_branch
          %3134 = sbr.rel (%p3132) target = $region48
        $region47: #{tpu_custom_call.1} parent=43 // pred_region
          %s3135 = sand.u32 %s116, 1
          %s3136 = scalar_lea.sflag [#allocation4], %s3135
          %s3137 = sand.u32 %s116, 1
          %s3138 = smul.addr %s3137, 256
          %s3139 = scalar_lea.vmem [#allocation3], %s3138
          %3140 = dma.done %s3136, 4096
        $region48: #{tpu_custom_call.1} parent=43 // pred_fallthru
          _
      $region44: #{tpu_custom_call.1} parent=5 // pred_fallthru
        _
    $region6: #{tpu_custom_call.1} parent=1 // loop_footer
      %s17 = sadd.s32 1, %s13
    $region7: #{tpu_custom_call.1} parent=1 // loop_footer_branch
      %12 = sbr.rel target = $region3
    $region8: #{tpu_custom_call.1} parent=1 // loop_exit
      _
    %3141 = vsyncpa [#allocation4], 1
    %s3142 = scalar_lea.sflag [#allocation4], 1
    %3143 = vsyncpa %s3142, 1

</llo_original>
